<compile_context>
chip_gen: v7x
topology: tpu7x:2x2x1
jax: 0.10.0
libtpu: 0.0.40
codegen_flags: <defaults>
</compile_context>

<pallas_src>
import functools

import jax
import jax.numpy as jnp
from jax import lax
from jax.experimental import pallas as pl
from jax.experimental.pallas import tpu as pltpu


def autopad(k, p=None, d=1):
    """Same autopad as the PyTorch reference."""
    if d > 1:
        k = d * (k - 1) + 1 if isinstance(k, int) else [d * (x - 1) + 1 for x in k]
    if p is None:
        p = k // 2 if isinstance(k, int) else [x // 2 for x in k]
    return p


def _pick_tile_rows(oh, ow, c1, kh, stride, wp):
    """Output rows per tile: target M = TH*OW ~ 512 rows, bounded halo'd slab size."""
    th = max(1, min(oh, max(1, 512 // max(ow, 1))))
    # keep the bf16 input slab (with halo) under ~2 MiB per buffer
    while th > 1 and ((th - 1) * stride + kh) * wp * c1 * 2 > (2 << 20):
        th -= 1
    # prefer a nearby divisor of OH (avoids padded garbage output rows)
    for cand in range(th, max(th // 2, 1) - 1, -1):
        if oh % cand == 0:
            return cand
    return th


def _conv_bn_silu_kernel(x_ref, w_ref, scale_ref, bias_ref, o_ref, *,
                         kh, kw, th, ow, stride):
    """One (batch, output-row-tile, C2-tile) block per grid step.

    x_ref:     (1, 1, SLAB_H, Wp, C1)  bf16 halo'd input row slab
    w_ref:     (KH*KW, C1, TC2)        bf16 conv weight, one (C1, TC2) matrix per tap
    scale_ref: (1, TC2)  f32           folded BN scale = gamma / sqrt(var + eps)
    bias_ref:  (1, TC2)  f32           folded BN bias  = beta - mean * scale
    o_ref:     (1, TH, OW, TC2) f32    output tile
    """
    c1 = x_ref.shape[-1]
    tc2 = o_ref.shape[-1]
    slab = x_ref[0, 0]                                              # (SLAB_H, Wp, C1)

    # Conv = sum of KH*KW shifted matmuls; bf16 operands, f32 accumulation on the MXU.
    # The W-offset slice is hoisted out of the KH loop (one sublane shift per j).
    # TODO(synk): stride > 1 uses in-kernel strided value slices (lax.slice with
    # strides); a space-to-depth pre-layout in the wrapper would avoid the sublane
    # shuffles if that path ever becomes hot.
    acc = None
    for j in range(kw):
        cols = slab[:, j:j + (ow - 1) * stride + 1:stride, :]       # (SLAB_H, OW, C1)
        for i in range(kh):
            rowsl = cols[i:i + (th - 1) * stride + 1:stride]        # (TH, OW, C1)
            patch = rowsl.reshape(th * ow, c1)
            d = jnp.dot(patch, w_ref[i * kw + j],
                        preferred_element_type=jnp.float32)         # (TH*OW, TC2) f32
            acc = d if acc is None else acc + d

    # Folded BatchNorm + SiLU epilogue (f32); reciprocal goes to the EUP slot.
    y = acc * scale_ref[...] + bias_ref[...]
    y = y * pl.reciprocal(1.0 + jnp.exp(-y), approx=True)           # SiLU = y*sigmoid(y)
    o_ref[0] = y.reshape(th, ow, tc2)


def conv_bn_silu(x_nchw, weight, bn_gamma, bn_beta, bn_mean, bn_var, *,
                 stride=1, padding=None, dilation=1, eps=1e-5):
    """Forward of Conv: act(bn(conv(x))), conv has no bias.

    x_nchw: (N, C1, H, W)   weight: (C2, C1, KH, KW) (groups=1)
    """
    N, C1, H, W = x_nchw.shape
    C2, C1w, KH, KW = weight.shape
    assert C1w == C1, "groups > 1 not supported"     # TODO(synk): grouped/depthwise conv
    assert dilation == 1                             # TODO(synk): dilation > 1 (module default d=1)

    pad = autopad(KH, padding, dilation)
    OH = (H + 2 * pad - KH) // stride + 1
    OW = (W + 2 * pad - KW) // stride + 1
    Hp, Wp = H + 2 * pad, W + 2 * pad

    cdt = jnp.bfloat16  # MXU-native operand dtype; accumulation stays f32

    # NCHW -> NHWC (bf16) + spatial zero-pad.
    # TODO(synk): fold pad + halo gather into the kernel (manual DMA with in-kernel zero
    # fill of border halos) to avoid the extra HBM copy of the input.
    x = jnp.transpose(x_nchw, (0, 2, 3, 1)).astype(cdt)
    xp = jnp.pad(x, ((0, 0), (pad, pad), (pad, pad), (0, 0)))

    # --- tiling ---------------------------------------------------------------
    TH = _pick_tile_rows(OH, OW, C1, KH, stride, Wp)
    nH = -(-OH // TH)
    SLAB_H = (TH - 1) * stride + KH            # input rows needed per TH output rows

    C2p = -(-C2 // 128) * 128                  # lane-dense output stores
    TC2 = 256 if (C2p % 256 == 0 and KH * KW * C1 * 256 * 2 <= (4 << 20)) else 128
    nC = C2p // TC2

    # Halo'd input row slabs: (N, nH, SLAB_H, Wp, C1). Row indices clamped for the last
    # (possibly partial) tile; the resulting extra output rows are sliced off below.
    row0 = jnp.arange(nH) * (TH * stride)
    rows = jnp.minimum(row0[:, None] + jnp.arange(SLAB_H)[None, :], Hp - 1)
    x_slabs = xp[:, rows]                      # (N, nH, SLAB_H, Wp, C1)

    # Weights: (C2, C1, KH, KW) -> (KH*KW, C1, C2p), bf16, C2 zero-padded to C2p.
    w = jnp.transpose(weight, (2, 3, 1, 0)).reshape(KH * KW, C1, C2).astype(cdt)
    if C2p != C2:
        w = jnp.pad(w, ((0, 0), (0, 0), (0, C2p - C2)))

    # Folded BatchNorm (inference form).
    inv_std = 1.0 / jnp.sqrt(bn_var.astype(jnp.float32) + eps)
    scale = bn_gamma.astype(jnp.float32) * inv_std
    bias = bn_beta.astype(jnp.float32) - bn_mean.astype(jnp.float32) * scale
    if C2p != C2:
        scale = jnp.pad(scale, (0, C2p - C2))
        bias = jnp.pad(bias, (0, C2p - C2))
    scale = scale.reshape(1, C2p)
    bias = bias.reshape(1, C2p)

    kernel = functools.partial(_conv_bn_silu_kernel, kh=KH, kw=KW, th=TH, ow=OW,
                               stride=stride)

    # Explicit VMEM budget: double-buffered blocks + accumulator, clamped to fit v7x.
    slab_b = SLAB_H * Wp * C1 * 2
    wblk_b = KH * KW * C1 * TC2 * 2
    oblk_b = TH * OW * TC2 * 4
    est = 2 * (slab_b + wblk_b + oblk_b + 2 * TC2 * 4) + oblk_b
    vmem_limit = int(min(max(3 * est, 32 << 20), 64 << 20))

    cost = pl.CostEstimate(
        flops=2 * N * OH * OW * C2 * KH * KW * C1,
        transcendentals=N * OH * OW * C2,
        bytes_accessed=(N * nH * SLAB_H * Wp * C1 * 2 + KH * KW * C1 * C2p * 2
                        + 2 * C2p * 4 + N * nH * TH * OW * C2p * 4),
    )

    out = pl.pallas_call(
        kernel,
        out_shape=jax.ShapeDtypeStruct((N, nH * TH, OW, C2p), jnp.float32),
        grid_spec=pltpu.PrefetchScalarGridSpec(
            num_scalar_prefetch=0,
            grid=(N, nH, nC),   # C2 fastest: the big input slab block is reused across it
            in_specs=[
                pl.BlockSpec((1, 1, SLAB_H, Wp, C1), lambda n, h, c: (n, h, 0, 0, 0)),
                pl.BlockSpec((KH * KW, C1, TC2), lambda n, h, c: (0, 0, c)),
                pl.BlockSpec((1, TC2), lambda n, h, c: (0, c)),
                pl.BlockSpec((1, TC2), lambda n, h, c: (0, c)),
            ],
            out_specs=pl.BlockSpec((1, TH, OW, TC2), lambda n, h, c: (n, h, 0, c)),
        ),
        compiler_params=pltpu.CompilerParams(
            dimension_semantics=("parallel", "parallel", "parallel"),
            vmem_limit_bytes=vmem_limit,
        ),
        cost_estimate=cost,
    )(x_slabs, w, scale, bias)

    out = out[:, :OH, :, :C2]                  # drop padded output rows / channels
    return jnp.transpose(out, (0, 3, 1, 2))    # NHWC -> NCHW, f32


def _reference(x_nchw, weight, bn_gamma, bn_beta, bn_mean, bn_var, *,
               stride=1, pad=1, eps=1e-5):
    """Pure-JAX reference (lax conv) for correctness check."""
    y = lax.conv_general_dilated(
        x_nchw.astype(jnp.float32), weight.astype(jnp.float32),
        window_strides=(stride, stride),
        padding=[(pad, pad), (pad, pad)],
        dimension_numbers=("NCHW", "OIHW", "NCHW"))
    inv_std = 1.0 / jnp.sqrt(bn_var + eps)
    scale = (bn_gamma * inv_std)[None, :, None, None]
    bias = (bn_beta - bn_mean * bn_gamma * inv_std)[None, :, None, None]
    y = y * scale + bias
    return y * jax.nn.sigmoid(y)


if __name__ == "__main__":
    # Conv(c1=4, c2=8, k=3, s=1) and Conv(c1=4, c2=8, k=1, s=1)
    N, C1, H, W = 2, 4, 16, 16
    C2, S = 8, 1

    key = jax.random.PRNGKey(0)
    kx, kw3, kw1, kg, kb, km, kv = jax.random.split(key, 7)

    # Pre-round x / weights to bf16 so the bf16 kernel and the f32 reference see the same
    # values (remaining diffs: accumulation order + EUP approx reciprocal in SiLU).
    x = jax.random.normal(kx, (N, C1, H, W), dtype=jnp.float32)
    x = x.astype(jnp.bfloat16).astype(jnp.float32)

    bn_gamma = jax.random.uniform(kg, (C2,), minval=0.5, maxval=1.5)
    bn_beta = jax.random.normal(kb, (C2,)) * 0.1
    bn_mean = jax.random.normal(km, (C2,)) * 0.1
    bn_var = jax.random.uniform(kv, (C2,), minval=0.5, maxval=1.5)

    for k, kkey in ((3, kw3), (1, kw1)):
        weight = jax.random.normal(kkey, (C2, C1, k, k), dtype=jnp.float32) * 0.1
        weight = weight.astype(jnp.bfloat16).astype(jnp.float32)

        out = conv_bn_silu(x, weight, bn_gamma, bn_beta, bn_mean, bn_var,
                           stride=S, padding=None, dilation=1)
        out = jax.block_until_ready(out)

        ref = _reference(x, weight, bn_gamma, bn_beta, bn_mean, bn_var,
                         stride=S, pad=autopad(k))
        assert out.shape == ref.shape == (N, C2, H, W)
        err = jnp.max(jnp.abs(out - ref))
        assert jnp.allclose(out, ref, atol=3e-2, rtol=3e-2), \
            f"k={k}: max abs err = {err}"

    print("KERNEL_OK")
</pallas_src>

<mosaic_0001>
module attributes {stable_mosaic.version = 11 : i64} {
  func.func @_conv_bn_silu_kernel(%arg0: i32, %arg1: i32, %arg2: i32, %arg3: memref<1x1x18x18x4xbf16, #tpu.memory_space<vmem>>, %arg4: memref<9x4x128xbf16, #tpu.memory_space<vmem>>, %arg5: memref<1x128xf32, #tpu.memory_space<vmem>>, %arg6: memref<1x128xf32, #tpu.memory_space<vmem>>, %arg7: memref<1x16x16x128xf32, #tpu.memory_space<vmem>>) attributes {dimension_semantics = [#tpu.dimension_semantics<parallel>, #tpu.dimension_semantics<parallel>, #tpu.dimension_semantics<parallel>], iteration_bounds = array<i64: 2, 1, 1>, scalar_prefetch = 0 : i64, scratch_operands = 0 : i64, tpu.core_type = #tpu.core_type<tc>, window_params = [{transform_indices = @transform_0, window_bounds = array<i64: 1, 1, 18, 18, 4>}, {transform_indices = @transform_1, window_bounds = array<i64: 9, 4, 128>}, {transform_indices = @transform_2, window_bounds = array<i64: 1, 128>}, {transform_indices = @transform_3, window_bounds = array<i64: 1, 128>}, {transform_indices = @transform_4, window_bounds = array<i64: 1, 16, 16, 128>}]} {
    %c0 = arith.constant 0 : index
    %c0_0 = arith.constant 0 : index
    %c0_1 = arith.constant 0 : index
    %c0_2 = arith.constant 0 : index
    %c0_3 = arith.constant 0 : index
    %0 = vector.load %arg3[%c0, %c0_0, %c0_1, %c0_2, %c0_3] : memref<1x1x18x18x4xbf16, #tpu.memory_space<vmem>>, vector<1x1x18x18x4xbf16>
    %1 = vector.shape_cast %0 : vector<1x1x18x18x4xbf16> to vector<18x18x4xbf16>
    %2 = vector.extract_strided_slice %1 {offsets = [0, 0, 0], sizes = [18, 16, 4], strides = [1, 1, 1]} : vector<18x18x4xbf16> to vector<18x16x4xbf16>
    %3 = vector.extract_strided_slice %2 {offsets = [0, 0, 0], sizes = [16, 16, 4], strides = [1, 1, 1]} : vector<18x16x4xbf16> to vector<16x16x4xbf16>
    %4 = vector.shape_cast %3 : vector<16x16x4xbf16> to vector<256x4xbf16>
    %c0_4 = arith.constant 0 : index
    %c0_5 = arith.constant 0 : index
    %c0_6 = arith.constant 0 : index
    %5 = vector.load %arg4[%c0_4, %c0_5, %c0_6] : memref<9x4x128xbf16, #tpu.memory_space<vmem>>, vector<1x4x128xbf16>
    %6 = vector.shape_cast %5 : vector<1x4x128xbf16> to vector<4x128xbf16>
    %cst = arith.constant dense<0.000000e+00> : vector<256x128xf32>
    %7 = tpu.matmul %4, %6, %cst {dimension_numbers = #tpu.dot_dimension_numbers<[1], [0], [0], [1], [0, 0, 1, 1], [], []>} : vector<256x4xbf16>, vector<4x128xbf16>, vector<256x128xf32> -> vector<256x128xf32>
    %8 = vector.extract_strided_slice %2 {offsets = [1, 0, 0], sizes = [16, 16, 4], strides = [1, 1, 1]} : vector<18x16x4xbf16> to vector<16x16x4xbf16>
    %9 = vector.shape_cast %8 : vector<16x16x4xbf16> to vector<256x4xbf16>
    %c3 = arith.constant 3 : index
    %c0_7 = arith.constant 0 : index
    %c0_8 = arith.constant 0 : index
    %10 = vector.load %arg4[%c3, %c0_7, %c0_8] : memref<9x4x128xbf16, #tpu.memory_space<vmem>>, vector<1x4x128xbf16>
    %11 = vector.shape_cast %10 : vector<1x4x128xbf16> to vector<4x128xbf16>
    %cst_9 = arith.constant dense<0.000000e+00> : vector<256x128xf32>
    %12 = tpu.matmul %9, %11, %cst_9 {dimension_numbers = #tpu.dot_dimension_numbers<[1], [0], [0], [1], [0, 0, 1, 1], [], []>} : vector<256x4xbf16>, vector<4x128xbf16>, vector<256x128xf32> -> vector<256x128xf32>
    %13 = arith.addf %7, %12 : vector<256x128xf32>
    %14 = vector.extract_strided_slice %2 {offsets = [2, 0, 0], sizes = [16, 16, 4], strides = [1, 1, 1]} : vector<18x16x4xbf16> to vector<16x16x4xbf16>
    %15 = vector.shape_cast %14 : vector<16x16x4xbf16> to vector<256x4xbf16>
    %c6 = arith.constant 6 : index
    %c0_10 = arith.constant 0 : index
    %c0_11 = arith.constant 0 : index
    %16 = vector.load %arg4[%c6, %c0_10, %c0_11] : memref<9x4x128xbf16, #tpu.memory_space<vmem>>, vector<1x4x128xbf16>
    %17 = vector.shape_cast %16 : vector<1x4x128xbf16> to vector<4x128xbf16>
    %cst_12 = arith.constant dense<0.000000e+00> : vector<256x128xf32>
    %18 = tpu.matmul %15, %17, %cst_12 {dimension_numbers = #tpu.dot_dimension_numbers<[1], [0], [0], [1], [0, 0, 1, 1], [], []>} : vector<256x4xbf16>, vector<4x128xbf16>, vector<256x128xf32> -> vector<256x128xf32>
    %19 = arith.addf %13, %18 : vector<256x128xf32>
    %20 = vector.extract_strided_slice %1 {offsets = [0, 1, 0], sizes = [18, 16, 4], strides = [1, 1, 1]} : vector<18x18x4xbf16> to vector<18x16x4xbf16>
    %21 = vector.extract_strided_slice %20 {offsets = [0, 0, 0], sizes = [16, 16, 4], strides = [1, 1, 1]} : vector<18x16x4xbf16> to vector<16x16x4xbf16>
    %22 = vector.shape_cast %21 : vector<16x16x4xbf16> to vector<256x4xbf16>
    %c1 = arith.constant 1 : index
    %c0_13 = arith.constant 0 : index
    %c0_14 = arith.constant 0 : index
    %23 = vector.load %arg4[%c1, %c0_13, %c0_14] : memref<9x4x128xbf16, #tpu.memory_space<vmem>>, vector<1x4x128xbf16>
    %24 = vector.shape_cast %23 : vector<1x4x128xbf16> to vector<4x128xbf16>
    %cst_15 = arith.constant dense<0.000000e+00> : vector<256x128xf32>
    %25 = tpu.matmul %22, %24, %cst_15 {dimension_numbers = #tpu.dot_dimension_numbers<[1], [0], [0], [1], [0, 0, 1, 1], [], []>} : vector<256x4xbf16>, vector<4x128xbf16>, vector<256x128xf32> -> vector<256x128xf32>
    %26 = arith.addf %19, %25 : vector<256x128xf32>
    %27 = vector.extract_strided_slice %20 {offsets = [1, 0, 0], sizes = [16, 16, 4], strides = [1, 1, 1]} : vector<18x16x4xbf16> to vector<16x16x4xbf16>
    %28 = vector.shape_cast %27 : vector<16x16x4xbf16> to vector<256x4xbf16>
    %c4 = arith.constant 4 : index
    %c0_16 = arith.constant 0 : index
    %c0_17 = arith.constant 0 : index
    %29 = vector.load %arg4[%c4, %c0_16, %c0_17] : memref<9x4x128xbf16, #tpu.memory_space<vmem>>, vector<1x4x128xbf16>
    %30 = vector.shape_cast %29 : vector<1x4x128xbf16> to vector<4x128xbf16>
    %cst_18 = arith.constant dense<0.000000e+00> : vector<256x128xf32>
    %31 = tpu.matmul %28, %30, %cst_18 {dimension_numbers = #tpu.dot_dimension_numbers<[1], [0], [0], [1], [0, 0, 1, 1], [], []>} : vector<256x4xbf16>, vector<4x128xbf16>, vector<256x128xf32> -> vector<256x128xf32>
    %32 = arith.addf %26, %31 : vector<256x128xf32>
    %33 = vector.extract_strided_slice %20 {offsets = [2, 0, 0], sizes = [16, 16, 4], strides = [1, 1, 1]} : vector<18x16x4xbf16> to vector<16x16x4xbf16>
    %34 = vector.shape_cast %33 : vector<16x16x4xbf16> to vector<256x4xbf16>
    %c7 = arith.constant 7 : index
    %c0_19 = arith.constant 0 : index
    %c0_20 = arith.constant 0 : index
    %35 = vector.load %arg4[%c7, %c0_19, %c0_20] : memref<9x4x128xbf16, #tpu.memory_space<vmem>>, vector<1x4x128xbf16>
    %36 = vector.shape_cast %35 : vector<1x4x128xbf16> to vector<4x128xbf16>
    %cst_21 = arith.constant dense<0.000000e+00> : vector<256x128xf32>
    %37 = tpu.matmul %34, %36, %cst_21 {dimension_numbers = #tpu.dot_dimension_numbers<[1], [0], [0], [1], [0, 0, 1, 1], [], []>} : vector<256x4xbf16>, vector<4x128xbf16>, vector<256x128xf32> -> vector<256x128xf32>
    %38 = arith.addf %32, %37 : vector<256x128xf32>
    %39 = vector.extract_strided_slice %1 {offsets = [0, 2, 0], sizes = [18, 16, 4], strides = [1, 1, 1]} : vector<18x18x4xbf16> to vector<18x16x4xbf16>
    %40 = vector.extract_strided_slice %39 {offsets = [0, 0, 0], sizes = [16, 16, 4], strides = [1, 1, 1]} : vector<18x16x4xbf16> to vector<16x16x4xbf16>
    %41 = vector.shape_cast %40 : vector<16x16x4xbf16> to vector<256x4xbf16>
    %c2 = arith.constant 2 : index
    %c0_22 = arith.constant 0 : index
    %c0_23 = arith.constant 0 : index
    %42 = vector.load %arg4[%c2, %c0_22, %c0_23] : memref<9x4x128xbf16, #tpu.memory_space<vmem>>, vector<1x4x128xbf16>
    %43 = vector.shape_cast %42 : vector<1x4x128xbf16> to vector<4x128xbf16>
    %cst_24 = arith.constant dense<0.000000e+00> : vector<256x128xf32>
    %44 = tpu.matmul %41, %43, %cst_24 {dimension_numbers = #tpu.dot_dimension_numbers<[1], [0], [0], [1], [0, 0, 1, 1], [], []>} : vector<256x4xbf16>, vector<4x128xbf16>, vector<256x128xf32> -> vector<256x128xf32>
    %45 = arith.addf %38, %44 : vector<256x128xf32>
    %46 = vector.extract_strided_slice %39 {offsets = [1, 0, 0], sizes = [16, 16, 4], strides = [1, 1, 1]} : vector<18x16x4xbf16> to vector<16x16x4xbf16>
    %47 = vector.shape_cast %46 : vector<16x16x4xbf16> to vector<256x4xbf16>
    %c5 = arith.constant 5 : index
    %c0_25 = arith.constant 0 : index
    %c0_26 = arith.constant 0 : index
    %48 = vector.load %arg4[%c5, %c0_25, %c0_26] : memref<9x4x128xbf16, #tpu.memory_space<vmem>>, vector<1x4x128xbf16>
    %49 = vector.shape_cast %48 : vector<1x4x128xbf16> to vector<4x128xbf16>
    %cst_27 = arith.constant dense<0.000000e+00> : vector<256x128xf32>
    %50 = tpu.matmul %47, %49, %cst_27 {dimension_numbers = #tpu.dot_dimension_numbers<[1], [0], [0], [1], [0, 0, 1, 1], [], []>} : vector<256x4xbf16>, vector<4x128xbf16>, vector<256x128xf32> -> vector<256x128xf32>
    %51 = arith.addf %45, %50 : vector<256x128xf32>
    %52 = vector.extract_strided_slice %39 {offsets = [2, 0, 0], sizes = [16, 16, 4], strides = [1, 1, 1]} : vector<18x16x4xbf16> to vector<16x16x4xbf16>
    %53 = vector.shape_cast %52 : vector<16x16x4xbf16> to vector<256x4xbf16>
    %c8 = arith.constant 8 : index
    %c0_28 = arith.constant 0 : index
    %c0_29 = arith.constant 0 : index
    %54 = vector.load %arg4[%c8, %c0_28, %c0_29] : memref<9x4x128xbf16, #tpu.memory_space<vmem>>, vector<1x4x128xbf16>
    %55 = vector.shape_cast %54 : vector<1x4x128xbf16> to vector<4x128xbf16>
    %cst_30 = arith.constant dense<0.000000e+00> : vector<256x128xf32>
    %56 = tpu.matmul %53, %55, %cst_30 {dimension_numbers = #tpu.dot_dimension_numbers<[1], [0], [0], [1], [0, 0, 1, 1], [], []>} : vector<256x4xbf16>, vector<4x128xbf16>, vector<256x128xf32> -> vector<256x128xf32>
    %57 = arith.addf %51, %56 : vector<256x128xf32>
    %c0_31 = arith.constant 0 : index
    %c0_32 = arith.constant 0 : index
    %58 = vector.load %arg5[%c0_31, %c0_32] : memref<1x128xf32, #tpu.memory_space<vmem>>, vector<1x128xf32>
    %59 = vector.broadcast %58 : vector<1x128xf32> to vector<256x128xf32>
    %60 = arith.mulf %57, %59 : vector<256x128xf32>
    %c0_33 = arith.constant 0 : index
    %c0_34 = arith.constant 0 : index
    %61 = vector.load %arg6[%c0_33, %c0_34] : memref<1x128xf32, #tpu.memory_space<vmem>>, vector<1x128xf32>
    %62 = vector.broadcast %61 : vector<1x128xf32> to vector<256x128xf32>
    %63 = arith.addf %60, %62 : vector<256x128xf32>
    %cst_35 = arith.constant 0.000000e+00 : f32
    %64 = vector.broadcast %cst_35 : f32 to vector<256x128xf32>
    %65 = arith.subf %64, %63 : vector<256x128xf32>
    %66 = math.exp %65 : vector<256x128xf32>
    %cst_36 = arith.constant 1.000000e+00 : f32
    %67 = vector.broadcast %cst_36 : f32 to vector<256x128xf32>
    %68 = arith.addf %67, %66 : vector<256x128xf32>
    %69 = tpu.reciprocal %68 {approx = true} : vector<256x128xf32> -> vector<256x128xf32>
    %70 = arith.mulf %63, %69 : vector<256x128xf32>
    %71 = vector.shape_cast %70 : vector<256x128xf32> to vector<16x16x128xf32>
    %c0_37 = arith.constant 0 : index
    %c0_38 = arith.constant 0 : index
    %c0_39 = arith.constant 0 : index
    %c0_40 = arith.constant 0 : index
    %72 = vector.load %arg7[%c0_37, %c0_38, %c0_39, %c0_40] : memref<1x16x16x128xf32, #tpu.memory_space<vmem>>, vector<1x16x16x128xf32>
    %73 = vector.shape_cast %72 : vector<1x16x16x128xf32> to vector<16x16x128xf32>
    %74 = vector.shape_cast %71 : vector<16x16x128xf32> to vector<1x16x16x128xf32>
    tpu.vector_store %arg7[%c0_37, %c0_38, %c0_39, %c0_40], %74 {strides = array<i32>} : memref<1x16x16x128xf32, #tpu.memory_space<vmem>>, vector<1x16x16x128xf32>,
    return
  }
  func.func @transform_0(%arg0: i32, %arg1: i32, %arg2: i32) -> (i32, i32, i32, i32, i32) {
    %c0_i32 = arith.constant 0 : i32
    %c0_i32_0 = arith.constant 0 : i32
    %c0_i32_1 = arith.constant 0 : i32
    %c0_i32_2 = arith.constant 0 : i32
    return %arg0, %arg1, %c0_i32, %c0_i32_0, %c0_i32_1 : i32, i32, i32, i32, i32
  }
  func.func @transform_1(%arg0: i32, %arg1: i32, %arg2: i32) -> (i32, i32, i32) {
    %c0_i32 = arith.constant 0 : i32
    %c0_i32_0 = arith.constant 0 : i32
    %c0_i32_1 = arith.constant 0 : i32
    return %c0_i32, %c0_i32_0, %arg2 : i32, i32, i32
  }
  func.func @transform_2(%arg0: i32, %arg1: i32, %arg2: i32) -> (i32, i32) {
    %c0_i32 = arith.constant 0 : i32
    %c0_i32_0 = arith.constant 0 : i32
    return %c0_i32, %arg2 : i32, i32
  }
  func.func @transform_3(%arg0: i32, %arg1: i32, %arg2: i32) -> (i32, i32) {
    %c0_i32 = arith.constant 0 : i32
    %c0_i32_0 = arith.constant 0 : i32
    return %c0_i32, %arg2 : i32, i32
  }
  func.func @transform_4(%arg0: i32, %arg1: i32, %arg2: i32) -> (i32, i32, i32, i32) {
    %c0_i32 = arith.constant 0 : i32
    %c0_i32_0 = arith.constant 0 : i32
    return %arg0, %arg1, %c0_i32, %arg2 : i32, i32, i32, i32
  }
}

</mosaic_0001>

<llo_original>
// kernel: tpu_custom_call.1
$region0: #{tpu_custom_call.1}
  #allocation0 [shape = 'u32[]', space=smem, size = 0x4, offset = 0x4, fixed_abs, tag = 'smem constant byte address 0x4 - core index']
  #allocation1 [shape = 'u32[144,128]{1,0:T(1,128)}', space=vmem, size = 0x12000, scoped, tag = 'internal scratch']
  %s0 = inlined_call_operand.vmem [shape: bf16[2,1,18,18,4], index: 0, kind: input, shape index: {}]
  %s1 = inlined_call_operand.vmem [shape: bf16[9,4,128], index: 1, kind: input, shape index: {}]
  %s2 = inlined_call_operand.vmem [shape: f32[1,128], index: 2, kind: input, shape index: {}]
  %s3 = inlined_call_operand.vmem [shape: f32[1,128], index: 3, kind: input, shape index: {}]
  %s4 = inlined_call_operand.hbm [shape: f32[2,16,16,128], index: 4, kind: output, shape index: {}]
  %s5 = sld [smem:[#allocation0]]
  $region49: #{tpu_custom_call.1} parent=0
    _
  %s7 = ssub.s32 1, %s5
  %s8 = scalar_select 0, %s7, %s5
  $region1: #{tpu_custom_call.1} parent=0
    #allocation2 [shape = 'u8[262144]{0}', space=vmem, size = 0x40000, scoped, tag = 'output window, operand 0']
    #allocation3 [shape = 's32[2]{0}', space=sflag, size = 0x8, scoped, tag = 'scoped memory for tpu_custom_call.1']
    %9 = vsyncpa [#allocation3], 0
    %s10 = scalar_lea.sflag [#allocation3], 1
    %11 = vsyncpa %s10, 0
    loop: start=0, step=1, limit=4
    $region2: #{tpu_custom_call.1} parent=1 // loop_pre_header
      _
    $region3: #{tpu_custom_call.1} parent=1 // loop_header
      %s13 = sphi 0, %s17
      %p14 = scmp.ge.s32.totalorder %s13, 4
      %s20 = sphi 0, %s39
      %s21 = sphi 0, %s35
      %s22 = sphi 0, %s31
      %s23 = sphi 0, %s20
      %s24 = sphi 0, %s21
      %s25 = sphi 0, %s22
      %s26 = sphi 0, %s23
      %s27 = sphi 0, %s24
      %s28 = sphi 0, %s25
      %s44 = sphi 0, %s46
      %s47 = sphi 0, %s44
      %s48 = sphi 0, %s47
      %s64 = sphi 0, %s48
      %s70 = sphi 0, %s72
      %s73 = sphi 0, %s70
      %s74 = sphi 0, %s73
      %s90 = sphi 0, %s74
      %s96 = sphi 0, %s98
      %s99 = sphi 0, %s96
      %s100 = sphi 0, %s99
      %s116 = sphi 0, %s100
      %s122 = sphi 0, %s124
      %s125 = sphi 0, %s122
      %s126 = sphi 0, %s125
      %s142 = sphi 0, %s126
      %s152 = sphi 0, %s154
      %s155 = sphi 0, %s152
      %s156 = sphi 0, %s155
      %s172 = sphi 0, %s156
    $region4: #{tpu_custom_call.1} parent=1 // loop_header_branch
      %16 = sbr.rel (%p14) target = $region8
    $region5: #{tpu_custom_call.1} parent=1 // loop_body
      %s18 = ssub.s32 %s13, 1
      %s19 = ssub.s32 %s13, 2
      %s29 = sadd.s32 1, %s22
      %p30 = scmp.ge.s32.totalorder %s29, 1
      %s31 = scalar_select %p30, 0, %s29
      %s32 = sadd.s32 1, %s21
      %s33 = scalar_select %p30, %s32, %s21
      %p34 = scmp.ge.s32.totalorder %s33, 1
      %s35 = scalar_select %p34, 0, %s33
      %s36 = sadd.s32 1, %s20
      %s37 = scalar_select %p34, %s36, %s20
      %p38 = scmp.ge.s32.totalorder %s37, 2
      %s39 = scalar_select %p38, 0, %s37
      %s40 = ssub.s32 %s20, %s39
      %s41 = ssub.s32 %s21, %s35
      %s42 = sor.u32 %s40, %s41
      %p43 = scmp.eq.s32.totalorder %s42, 0
      %s45 = sadd.s32 %s44, 1
      %s46 = scalar_select %p43, %s44, %s45
      %p49 = pneg %p43
      %p50 = scmp.eq.s32.totalorder %s13, 1
      %p51 = por %p49, %p50
      %p52 = scmp.ne.s32.totalorder %s44, %s47
      %p53 = scmp.eq.s32.totalorder %s13, 0
      %p54 = por %p52, %p53
      %p55 = scmp.ne.s32.totalorder %s44, %s47
      %p56 = scmp.eq.s32.totalorder %s18, 1
      %p57 = por %p55, %p56
      %p58 = scmp.ne.s32.totalorder %s47, %s48
      %p59 = scmp.eq.s32.totalorder %s18, 0
      %p60 = por %p58, %p59
      %p61 = scmp.ne.s32.totalorder %s47, %s48
      %p62 = scmp.eq.s32.totalorder %s19, 1
      %p63 = por %p61, %p62
      %p65 = scmp.ne.s32.totalorder %s48, %s64
      %p66 = scmp.eq.s32.totalorder %s19, 0
      %p67 = por %p65, %p66
      %s68 = ssub.s32 %s22, %s31
      %p69 = scmp.eq.s32.totalorder %s68, 0
      %s71 = sadd.s32 %s70, 1
      %s72 = scalar_select %p69, %s70, %s71
      %p75 = pneg %p69
      %p76 = scmp.eq.s32.totalorder %s13, 1
      %p77 = por %p75, %p76
      %p78 = scmp.ne.s32.totalorder %s70, %s73
      %p79 = scmp.eq.s32.totalorder %s13, 0
      %p80 = por %p78, %p79
      %p81 = scmp.ne.s32.totalorder %s70, %s73
      %p82 = scmp.eq.s32.totalorder %s18, 1
      %p83 = por %p81, %p82
      %p84 = scmp.ne.s32.totalorder %s73, %s74
      %p85 = scmp.eq.s32.totalorder %s18, 0
      %p86 = por %p84, %p85
      %p87 = scmp.ne.s32.totalorder %s73, %s74
      %p88 = scmp.eq.s32.totalorder %s19, 1
      %p89 = por %p87, %p88
      %p91 = scmp.ne.s32.totalorder %s74, %s90
      %p92 = scmp.eq.s32.totalorder %s19, 0
      %p93 = por %p91, %p92
      %s94 = ssub.s32 %s22, %s31
      %p95 = scmp.eq.s32.totalorder %s94, 0
      %s97 = sadd.s32 %s96, 1
      %s98 = scalar_select %p95, %s96, %s97
      %p101 = pneg %p95
      %p102 = scmp.eq.s32.totalorder %s13, 1
      %p103 = por %p101, %p102
      %p104 = scmp.ne.s32.totalorder %s96, %s99
      %p105 = scmp.eq.s32.totalorder %s13, 0
      %p106 = por %p104, %p105
      %p107 = scmp.ne.s32.totalorder %s96, %s99
      %p108 = scmp.eq.s32.totalorder %s18, 1
      %p109 = por %p107, %p108
      %p110 = scmp.ne.s32.totalorder %s99, %s100
      %p111 = scmp.eq.s32.totalorder %s18, 0
      %p112 = por %p110, %p111
      %p113 = scmp.ne.s32.totalorder %s99, %s100
      %p114 = scmp.eq.s32.totalorder %s19, 1
      %p115 = por %p113, %p114
      %p117 = scmp.ne.s32.totalorder %s100, %s116
      %p118 = scmp.eq.s32.totalorder %s19, 0
      %p119 = por %p117, %p118
      %s120 = ssub.s32 %s22, %s31
      %p121 = scmp.eq.s32.totalorder %s120, 0
      %s123 = sadd.s32 %s122, 1
      %s124 = scalar_select %p121, %s122, %s123
      %p127 = pneg %p121
      %p128 = scmp.eq.s32.totalorder %s13, 1
      %p129 = por %p127, %p128
      %p130 = scmp.ne.s32.totalorder %s122, %s125
      %p131 = scmp.eq.s32.totalorder %s13, 0
      %p132 = por %p130, %p131
      %p133 = scmp.ne.s32.totalorder %s122, %s125
      %p134 = scmp.eq.s32.totalorder %s18, 1
      %p135 = por %p133, %p134
      %p136 = scmp.ne.s32.totalorder %s125, %s126
      %p137 = scmp.eq.s32.totalorder %s18, 0
      %p138 = por %p136, %p137
      %p139 = scmp.ne.s32.totalorder %s125, %s126
      %p140 = scmp.eq.s32.totalorder %s19, 1
      %p141 = por %p139, %p140
      %p143 = scmp.ne.s32.totalorder %s126, %s142
      %p144 = scmp.eq.s32.totalorder %s19, 0
      %p145 = por %p143, %p144
      %s146 = ssub.s32 %s20, %s39
      %s147 = ssub.s32 %s21, %s35
      %s148 = sor.u32 %s146, %s147
      %s149 = ssub.s32 %s22, %s31
      %s150 = sor.u32 %s148, %s149
      %p151 = scmp.eq.s32.totalorder %s150, 0
      %s153 = sadd.s32 %s152, 1
      %s154 = scalar_select %p151, %s152, %s153
      %p157 = pneg %p151
      %p158 = scmp.eq.s32.totalorder %s13, 1
      %p159 = por %p157, %p158
      %p160 = scmp.ne.s32.totalorder %s152, %s155
      %p161 = scmp.eq.s32.totalorder %s13, 0
      %p162 = por %p160, %p161
      %p163 = scmp.ne.s32.totalorder %s152, %s155
      %p164 = scmp.eq.s32.totalorder %s18, 1
      %p165 = por %p163, %p164
      %p166 = scmp.ne.s32.totalorder %s155, %s156
      %p167 = scmp.eq.s32.totalorder %s18, 0
      %p168 = por %p166, %p167
      %p169 = scmp.ne.s32.totalorder %s155, %s156
      %p170 = scmp.eq.s32.totalorder %s19, 1
      %p171 = por %p169, %p170
      %p173 = scmp.ne.s32.totalorder %s156, %s172
      %p174 = scmp.eq.s32.totalorder %s19, 0
      %p175 = por %p173, %p174
      %p176 = scmp.le.s32.totalorder 1, %s13
      %p177 = scmp.lt.s32.totalorder %s13, 3
      %p178 = pnand %p176, %p177
      %p179 = pneg %p178
      // Predicated region
      $region9: #{tpu_custom_call.1} parent=5 // pred_check
        _
      $region10: #{tpu_custom_call.1} parent=5 // pred_check_branch
        %181 = sbr.rel (%p178) target = $region12
      $region11: #{tpu_custom_call.1} parent=5 // pred_region
        %s182 = ssub.s32 %s13, 1
        // Predicated region
        $region13: #{tpu_custom_call.1} parent=11 // pred_check
          %p183 = pneg %p86
        $region14: #{tpu_custom_call.1} parent=11 // pred_check_branch
          %185 = sbr.rel (%p183) target = $region16
        $region15: #{tpu_custom_call.1} parent=11 // pred_region
          %p186 = scmp.lt.s32.totalorder %s25, 0
          %s187 = scalar_select %p186, %s25, 0
          %s188 = smul.addr %s187, 2
          %s189 = scalar_lea.vmem %s1, %s188
        $region16: #{tpu_custom_call.1} parent=11 // pred_fallthru
          _
        // Predicated region
        $region17: #{tpu_custom_call.1} parent=11 // pred_check
          %p190 = pneg %p112
        $region18: #{tpu_custom_call.1} parent=11 // pred_check_branch
          %192 = sbr.rel (%p190) target = $region20
        $region19: #{tpu_custom_call.1} parent=11 // pred_region
          %p193 = scmp.lt.s32.totalorder %s25, 0
          %s194 = scalar_select %p193, %s25, 0
          %s195 = scalar_lea.vmem %s2, %s194
        $region20: #{tpu_custom_call.1} parent=11 // pred_fallthru
          _
        // Predicated region
        $region21: #{tpu_custom_call.1} parent=11 // pred_check
          %p196 = pneg %p138
        $region22: #{tpu_custom_call.1} parent=11 // pred_check_branch
          %198 = sbr.rel (%p196) target = $region24
        $region23: #{tpu_custom_call.1} parent=11 // pred_region
          %p199 = scmp.lt.s32.totalorder %s25, 0
          %s200 = scalar_select %p199, %s25, 0
          %s201 = scalar_lea.vmem %s3, %s200
        $region24: #{tpu_custom_call.1} parent=11 // pred_fallthru
          _
      $region12: #{tpu_custom_call.1} parent=5 // pred_fallthru
        _
      %p202 = scmp.lt.s32.totalorder %s13, 2
      // Predicated region
      $region25: #{tpu_custom_call.1} parent=5 // pred_check
        %p203 = pneg %p202
      $region26: #{tpu_custom_call.1} parent=5 // pred_check_branch
        %205 = sbr.rel (%p203) target = $region28
      $region27: #{tpu_custom_call.1} parent=5 // pred_region
        // Predicated region
        $region29: #{tpu_custom_call.1} parent=27 // pred_check
          %p206 = pneg %p54
        $region30: #{tpu_custom_call.1} parent=27 // pred_check_branch
          %208 = sbr.rel (%p206) target = $region32
        $region31: #{tpu_custom_call.1} parent=27 // pred_region
          %p209 = scmp.lt.s32.totalorder %s20, 1
          %s210 = scalar_select %p209, %s20, 1
          %p211 = scmp.lt.s32.totalorder %s21, 0
          %s212 = scalar_select %p211, %s21, 0
          %s213 = smul.addr %s212, 54
          %s214 = smul.addr %s210, 54
          %s215 = sadd.s32 %s213, %s214
          %s216 = smul.addr %s215, 4
          %s217 = scalar_lea.vmem %s0, %s216
        $region32: #{tpu_custom_call.1} parent=27 // pred_fallthru
          _
      $region28: #{tpu_custom_call.1} parent=5 // pred_fallthru
        _
      %p218 = scmp.le.s32.totalorder 1, %s13
      %p219 = scmp.lt.s32.totalorder %s13, 3
      %p220 = pnand %p218, %p219
      %p221 = pneg %p220
      // Predicated region
      $region33: #{tpu_custom_call.1} parent=5 // pred_check
        _
      $region34: #{tpu_custom_call.1} parent=5 // pred_check_branch
        %223 = sbr.rel (%p220) target = $region36
      $region35: #{tpu_custom_call.1} parent=5 // pred_region
        %s224 = ssub.s32 %s13, 1
        %p225 = scmp.lt.s32.totalorder %s23, 1
        %s226 = scalar_select %p225, %s23, 1
        %p227 = scmp.lt.s32.totalorder %s24, 0
        %s228 = scalar_select %p227, %s24, 0
        %s229 = smul.addr %s228, 54
        %s230 = smul.addr %s226, 54
        %s231 = sadd.s32 %s229, %s230
        %s232 = smul.addr %s231, 4
        %s233 = scalar_lea.vmem %s0, %s232
        %p234 = pneg %p60
        %p235 = pneg %p57
        %p236 = scmp.lt.s32.totalorder %s25, 0
        %s237 = scalar_select %p236, %s25, 0
        %s238 = smul.addr %s237, 2
        %s239 = scalar_lea.vmem %s1, %s238
        %p240 = pneg %p86
        %p241 = pneg %p83
        %p242 = scmp.lt.s32.totalorder %s25, 0
        %s243 = scalar_select %p242, %s25, 0
        %s244 = scalar_lea.vmem %s2, %s243
        %p245 = pneg %p112
        %p246 = pneg %p109
        %p247 = scmp.lt.s32.totalorder %s25, 0
        %s248 = scalar_select %p247, %s25, 0
        %s249 = scalar_lea.vmem %s3, %s248
        %p250 = pneg %p138
        %p251 = pneg %p135
        %p252 = pneg %p168
        %p253 = pneg %p165
        %s254 = sand.u32 %s155, 1
        %s255 = scalar_lea.sflag [#allocation3], %s254
        %s256 = sand.u32 %s155, 1
        %s257 = smul.addr %s256, 256
        %s258 = scalar_lea.vmem [#allocation2], %s257
        %p259 = scmp.lt.s32.totalorder %s23, 1
        %s260 = scalar_select %p259, %s23, 1
        %p261 = scmp.lt.s32.totalorder %s24, 0
        %s262 = scalar_select %p261, %s24, 0
        %s263 = smul.addr %s262, 54
        %s264 = smul.addr %s260, 54
        %s265 = sadd.s32 %s263, %s264
        %s266 = smul.addr %s265, 4
        %s267 = scalar_lea.vmem %s0, %s266
        %p268 = scmp.lt.s32.totalorder %s25, 0
        %s269 = scalar_select %p268, %s25, 0
        %s270 = smul.addr %s269, 2
        %s271 = scalar_lea.vmem %s1, %s270
        %p272 = scmp.lt.s32.totalorder %s25, 0
        %s273 = scalar_select %p272, %s25, 0
        %s274 = scalar_lea.vmem %s2, %s273
        %p275 = scmp.lt.s32.totalorder %s25, 0
        %s276 = scalar_select %p275, %s25, 0
        %s277 = scalar_lea.vmem %s3, %s276
        %s278 = smul.u32 16, %s24
        %v280 = vld [vmem:[%s267] sm:$0xf]
        %v281 = vld [vmem:[%s267 + $0x4] sm:$0xf]
        %v282 = vld [vmem:[%s267 + $0x8] sm:$0x1]
        %v283 = vld [vmem:[%s267 + $0xc] sm:$0xf]
        %v284 = vld [vmem:[%s267 + $0x10] sm:$0xf]
        %v285 = vld [vmem:[%s267 + $0x14] sm:$0x1]
        %v286 = vld [vmem:[%s267 + $0x18] sm:$0xf]
        %v287 = vld [vmem:[%s267 + $0x1c] sm:$0xf]
        %v288 = vld [vmem:[%s267 + $0x20] sm:$0x1]
        %v289 = vld [vmem:[%s267 + $0x24] sm:$0xf]
        %v290 = vld [vmem:[%s267 + $0x28] sm:$0xf]
        %v291 = vld [vmem:[%s267 + $0x2c] sm:$0x1]
        %v292 = vld [vmem:[%s267 + $0x30] sm:$0xf]
        %v293 = vld [vmem:[%s267 + $0x34] sm:$0xf]
        %v294 = vld [vmem:[%s267 + $0x38] sm:$0x1]
        %v295 = vld [vmem:[%s267 + $0x3c] sm:$0xf]
        %v296 = vld [vmem:[%s267 + $0x40] sm:$0xf]
        %v297 = vld [vmem:[%s267 + $0x44] sm:$0x1]
        %v298 = vld [vmem:[%s267 + $0x48] sm:$0xf]
        %v299 = vld [vmem:[%s267 + $0x4c] sm:$0xf]
        %v300 = vld [vmem:[%s267 + $0x50] sm:$0x1]
        %v301 = vld [vmem:[%s267 + $0x54] sm:$0xf]
        %v302 = vld [vmem:[%s267 + $0x58] sm:$0xf]
        %v303 = vld [vmem:[%s267 + $0x5c] sm:$0x1]
        %v304 = vld [vmem:[%s267 + $0x60] sm:$0xf]
        %v305 = vld [vmem:[%s267 + $0x64] sm:$0xf]
        %v306 = vld [vmem:[%s267 + $0x68] sm:$0x1]
        %v307 = vld [vmem:[%s267 + $0x6c] sm:$0xf]
        %v308 = vld [vmem:[%s267 + $0x70] sm:$0xf]
        %v309 = vld [vmem:[%s267 + $0x74] sm:$0x1]
        %v310 = vld [vmem:[%s267 + $0x78] sm:$0xf]
        %v311 = vld [vmem:[%s267 + $0x7c] sm:$0xf]
        %v312 = vld [vmem:[%s267 + $0x80] sm:$0x1]
        %v313 = vld [vmem:[%s267 + $0x84] sm:$0xf]
        %v314 = vld [vmem:[%s267 + $0x88] sm:$0xf]
        %v315 = vld [vmem:[%s267 + $0x8c] sm:$0x1]
        %v316 = vld [vmem:[%s267 + $0x90] sm:$0xf]
        %v317 = vld [vmem:[%s267 + $0x94] sm:$0xf]
        %v318 = vld [vmem:[%s267 + $0x98] sm:$0x1]
        %v319 = vld [vmem:[%s267 + $0x9c] sm:$0xf]
        %v320 = vld [vmem:[%s267 + $0xa0] sm:$0xf]
        %v321 = vld [vmem:[%s267 + $0xa4] sm:$0x1]
        %v322 = vld [vmem:[%s267 + $0xa8] sm:$0xf]
        %v323 = vld [vmem:[%s267 + $0xac] sm:$0xf]
        %v324 = vld [vmem:[%s267 + $0xb0] sm:$0x1]
        %v325 = vld [vmem:[%s267 + $0xb4] sm:$0xf]
        %v326 = vld [vmem:[%s267 + $0xb8] sm:$0xf]
        %v327 = vld [vmem:[%s267 + $0xbc] sm:$0x1]
        %v328 = vld [vmem:[%s267 + $0xc0] sm:$0xf]
        %v329 = vld [vmem:[%s267 + $0xc4] sm:$0xf]
        %v330 = vld [vmem:[%s267 + $0xc8] sm:$0x1]
        %v331 = vld [vmem:[%s267 + $0xcc] sm:$0xf]
        %v332 = vld [vmem:[%s267 + $0xd0] sm:$0xf]
        %v333 = vld [vmem:[%s267 + $0xd4] sm:$0x1]
        %v334 = vld [vmem:[%s271] sm:$0x3]
        %s335 = scalar_lea.vmem %s271, 6
        %v336 = vld [vmem:[%s335] sm:$0x3]
        %v369 = vunpack.c.l.b16 %v283
        %v370 = vunpack.c.l.b16 %v284
        %v371 = vunpack.c.l.b16 %v286
        %v372 = vunpack.c.l.b16 %v287
        %v373 = vunpack.c.l.b16 %v289
        %v374 = vunpack.c.l.b16 %v290
        %v375 = vunpack.c.l.b16 %v292
        %v376 = vunpack.c.l.b16 %v293
        %v377 = vunpack.c.l.b16 %v295
        %v378 = vunpack.c.l.b16 %v296
        %v379 = vunpack.c.l.b16 %v298
        %v380 = vunpack.c.l.b16 %v299
        %v381 = vunpack.c.l.b16 %v301
        %v382 = vunpack.c.l.b16 %v302
        %v383 = vunpack.c.l.b16 %v304
        %v384 = vunpack.c.l.b16 %v305
        %v385 = vunpack.c.l.b16 %v307
        %v386 = vunpack.c.l.b16 %v308
        %v387 = vunpack.c.l.b16 %v310
        %v388 = vunpack.c.l.b16 %v311
        %v389 = vunpack.c.l.b16 %v313
        %v390 = vunpack.c.l.b16 %v314
        %v391 = vunpack.c.l.b16 %v316
        %v392 = vunpack.c.l.b16 %v317
        %v393 = vunpack.c.l.b16 %v319
        %v394 = vunpack.c.l.b16 %v320
        %v395 = vunpack.c.l.b16 %v322
        %v396 = vunpack.c.l.b16 %v323
        %v397 = vunpack.c.l.b16 %v325
        %v398 = vunpack.c.l.b16 %v326
        %v399 = vunpack.c.l.b16 %v328
        %v400 = vunpack.c.l.b16 %v329
        %v401 = vpack.c.b16 %v370, %v369
        %v402 = vpack.c.b16 %v372, %v371
        %v403 = vpack.c.b16 %v374, %v373
        %v404 = vpack.c.b16 %v376, %v375
        %v405 = vpack.c.b16 %v378, %v377
        %v406 = vpack.c.b16 %v380, %v379
        %v407 = vpack.c.b16 %v382, %v381
        %v408 = vpack.c.b16 %v384, %v383
        %v409 = vpack.c.b16 %v386, %v385
        %v410 = vpack.c.b16 %v388, %v387
        %v411 = vpack.c.b16 %v390, %v389
        %v412 = vpack.c.b16 %v392, %v391
        %v413 = vpack.c.b16 %v394, %v393
        %v414 = vpack.c.b16 %v396, %v395
        %v415 = vpack.c.b16 %v398, %v397
        %v416 = vpack.c.b16 %v400, %v399
        %vm417 = vcmask 31744
        %v419 = vsel %vm417, %v401, 0
        %v422 = vsel %vm417, %v402, 0
        %v425 = vsel %vm417, %v403, 0
        %v428 = vsel %vm417, %v404, 0
        %v431 = vsel %vm417, %v405, 0
        %v434 = vsel %vm417, %v406, 0
        %v437 = vsel %vm417, %v407, 0
        %v440 = vsel %vm417, %v408, 0
        %v443 = vsel %vm417, %v409, 0
        %v446 = vsel %vm417, %v410, 0
        %v449 = vsel %vm417, %v411, 0
        %v452 = vsel %vm417, %v412, 0
        %v455 = vsel %vm417, %v413, 0
        %v458 = vsel %vm417, %v414, 0
        %v461 = vsel %vm417, %v415, 0
        %v464 = vsel %vm417, %v416, 0
        %vm466 = vcmask 1041408
        %v468 = vsel %vm466, %v336, 0
        %470 = vmatprep.subr.bf16.mxu0 0
        %471 = vmatpush1.bf16.msra.mxu0 %v468
        %472 = vmatprep.subr.bf16.mxu0 0
        %473 = vmatpush1.bf16.msra.mxu0 0
        %474 = vmatprep.subr.bf16.mxu0 0
        %475 = vmatpush1.bf16.msra.mxu0 0
        %476 = vmatprep.subr.bf16.mxu0 0
        %477 = vmatpush1.bf16.msra.mxu0 0
        %478 = vmatprep.subr.bf16.mxu0 0
        %479 = vmatpush1.bf16.msra.mxu0 0
        %480 = vmatprep.subr.bf16.mxu0 0
        %481 = vmatpush1.bf16.msra.mxu0 0
        %482 = vmatprep.subr.bf16.mxu0 0
        %483 = vmatpush1.bf16.msra.mxu0 0
        %484 = vmatprep.subr.bf16.mxu0 0
        %485 = vmatpush1.bf16.msra.mxu0 0
        %486 = vmatprep.subr.bf16.mxu0 0
        %487 = vmatpush1.bf16.msra.mxu0 0
        %488 = vmatprep.subr.bf16.mxu0 0
        %489 = vmatpush1.bf16.msra.mxu0 0
        %490 = vmatprep.subr.bf16.mxu0 0
        %491 = vmatpush1.bf16.msra.mxu0 0
        %492 = vmatprep.subr.bf16.mxu0 0
        %493 = vmatpush1.bf16.msra.mxu0 0
        %494 = vmatprep.subr.bf16.mxu0 0
        %495 = vmatpush1.bf16.msra.mxu0 0
        %496 = vmatprep.subr.bf16.mxu0 0
        %497 = vmatpush1.bf16.msra.mxu0 0
        %498 = vmatprep.subr.bf16.mxu0 0
        %499 = vmatpush1.bf16.msra.mxu0 0
        %500 = vmatprep.subr.bf16.mxu0 0
        %501 = vmatpush1.bf16.msra.mxu0 0
        %502 = vmatprep.mubr.bf16.mxu0 0
        %503 = vmatmul.mubr.bf16.gmra.mrb[0].mxu0 %v419
        %v504 = vpop.f32.mrb[0].mxu0
        %v505 = vadd.f32 0.0, %v504
        %v506 = vpop.f32.mrb[0].mxu0
        %v507 = vpop.f32.mrb[0].mxu0
        %v508 = vadd.f32 0.0, %v507
        %v509 = vpop.f32.mrb[0].mxu0
        %510 = vmatprep.mubr.bf16.mxu0 0
        %511 = vmatmul.mubr.bf16.gmra.mrb[0].mxu0 %v422
        %v512 = vpop.f32.mrb[0].mxu0
        %v513 = vadd.f32 0.0, %v512
        %v514 = vpop.f32.mrb[0].mxu0
        %v515 = vpop.f32.mrb[0].mxu0
        %v516 = vadd.f32 0.0, %v515
        %v517 = vpop.f32.mrb[0].mxu0
        %518 = vmatprep.mubr.bf16.mxu0 0
        %519 = vmatmul.mubr.bf16.gmra.mrb[0].mxu0 %v425
        %v520 = vpop.f32.mrb[0].mxu0
        %v521 = vadd.f32 0.0, %v520
        %v522 = vpop.f32.mrb[0].mxu0
        %v523 = vpop.f32.mrb[0].mxu0
        %v524 = vadd.f32 0.0, %v523
        %v525 = vpop.f32.mrb[0].mxu0
        %526 = vmatprep.mubr.bf16.mxu0 0
        %527 = vmatmul.mubr.bf16.gmra.mrb[0].mxu0 %v428
        %v528 = vpop.f32.mrb[0].mxu0
        %v529 = vadd.f32 0.0, %v528
        %v530 = vpop.f32.mrb[0].mxu0
        %v531 = vpop.f32.mrb[0].mxu0
        %v532 = vadd.f32 0.0, %v531
        %v533 = vpop.f32.mrb[0].mxu0
        %534 = vmatprep.mubr.bf16.mxu0 0
        %535 = vmatmul.mubr.bf16.gmra.mrb[0].mxu0 %v431
        %v536 = vpop.f32.mrb[0].mxu0
        %v537 = vadd.f32 0.0, %v536
        %v538 = vpop.f32.mrb[0].mxu0
        %v539 = vpop.f32.mrb[0].mxu0
        %v540 = vadd.f32 0.0, %v539
        %v541 = vpop.f32.mrb[0].mxu0
        %542 = vmatprep.mubr.bf16.mxu0 0
        %543 = vmatmul.mubr.bf16.gmra.mrb[0].mxu0 %v434
        %v544 = vpop.f32.mrb[0].mxu0
        %v545 = vadd.f32 0.0, %v544
        %v546 = vpop.f32.mrb[0].mxu0
        %v547 = vpop.f32.mrb[0].mxu0
        %v548 = vadd.f32 0.0, %v547
        %v549 = vpop.f32.mrb[0].mxu0
        %550 = vmatprep.mubr.bf16.mxu0 0
        %551 = vmatmul.mubr.bf16.gmra.mrb[0].mxu0 %v437
        %v552 = vpop.f32.mrb[0].mxu0
        %v553 = vadd.f32 0.0, %v552
        %v554 = vpop.f32.mrb[0].mxu0
        %v555 = vpop.f32.mrb[0].mxu0
        %v556 = vadd.f32 0.0, %v555
        %v557 = vpop.f32.mrb[0].mxu0
        %558 = vmatprep.mubr.bf16.mxu0 0
        %559 = vmatmul.mubr.bf16.gmra.mrb[0].mxu0 %v440
        %v560 = vpop.f32.mrb[0].mxu0
        %v561 = vadd.f32 0.0, %v560
        %v562 = vpop.f32.mrb[0].mxu0
        %v563 = vpop.f32.mrb[0].mxu0
        %v564 = vadd.f32 0.0, %v563
        %v565 = vpop.f32.mrb[0].mxu0
        %566 = vmatprep.mubr.bf16.mxu0 0
        %567 = vmatmul.mubr.bf16.gmra.mrb[0].mxu0 %v443
        %v568 = vpop.f32.mrb[0].mxu0
        %v569 = vadd.f32 0.0, %v568
        %v570 = vpop.f32.mrb[0].mxu0
        %v571 = vpop.f32.mrb[0].mxu0
        %v572 = vadd.f32 0.0, %v571
        %v573 = vpop.f32.mrb[0].mxu0
        %574 = vmatprep.mubr.bf16.mxu0 0
        %575 = vmatmul.mubr.bf16.gmra.mrb[0].mxu0 %v446
        %v576 = vpop.f32.mrb[0].mxu0
        %v577 = vadd.f32 0.0, %v576
        %v578 = vpop.f32.mrb[0].mxu0
        %v579 = vpop.f32.mrb[0].mxu0
        %v580 = vadd.f32 0.0, %v579
        %v581 = vpop.f32.mrb[0].mxu0
        %582 = vmatprep.mubr.bf16.mxu0 0
        %583 = vmatmul.mubr.bf16.gmra.mrb[0].mxu0 %v449
        %v584 = vpop.f32.mrb[0].mxu0
        %v585 = vadd.f32 0.0, %v584
        %v586 = vpop.f32.mrb[0].mxu0
        %v587 = vpop.f32.mrb[0].mxu0
        %v588 = vadd.f32 0.0, %v587
        %v589 = vpop.f32.mrb[0].mxu0
        %590 = vmatprep.mubr.bf16.mxu0 0
        %591 = vmatmul.mubr.bf16.gmra.mrb[0].mxu0 %v452
        %v592 = vpop.f32.mrb[0].mxu0
        %v593 = vadd.f32 0.0, %v592
        %v594 = vpop.f32.mrb[0].mxu0
        %v595 = vpop.f32.mrb[0].mxu0
        %v596 = vadd.f32 0.0, %v595
        %v597 = vpop.f32.mrb[0].mxu0
        %598 = vmatprep.mubr.bf16.mxu0 0
        %599 = vmatmul.mubr.bf16.gmra.mrb[0].mxu0 %v455
        %v600 = vpop.f32.mrb[0].mxu0
        %v601 = vadd.f32 0.0, %v600
        %v602 = vpop.f32.mrb[0].mxu0
        %v603 = vpop.f32.mrb[0].mxu0
        %v604 = vadd.f32 0.0, %v603
        %v605 = vpop.f32.mrb[0].mxu0
        %606 = vmatprep.mubr.bf16.mxu0 0
        %607 = vmatmul.mubr.bf16.gmra.mrb[0].mxu0 %v458
        %v608 = vpop.f32.mrb[0].mxu0
        %v609 = vadd.f32 0.0, %v608
        %v610 = vpop.f32.mrb[0].mxu0
        %v611 = vpop.f32.mrb[0].mxu0
        %v612 = vadd.f32 0.0, %v611
        %v613 = vpop.f32.mrb[0].mxu0
        %614 = vmatprep.mubr.bf16.mxu0 0
        %615 = vmatmul.mubr.bf16.gmra.mrb[0].mxu0 %v461
        %v616 = vpop.f32.mrb[0].mxu0
        %v617 = vadd.f32 0.0, %v616
        %v618 = vpop.f32.mrb[0].mxu0
        %v619 = vpop.f32.mrb[0].mxu0
        %v620 = vadd.f32 0.0, %v619
        %v621 = vpop.f32.mrb[0].mxu0
        %622 = vmatprep.mubr.bf16.mxu0 0
        %623 = vmatmul.mubr.bf16.gmra.mrb[0].mxu0 %v464
        %v624 = vpop.f32.mrb[0].mxu0
        %v625 = vadd.f32 0.0, %v624
        %v626 = vpop.f32.mrb[0].mxu0
        %v627 = vpop.f32.mrb[0].mxu0
        %v628 = vadd.f32 0.0, %v627
        %v629 = vpop.f32.mrb[0].mxu0
        %630 = vdwg.mxu0
        %v633 = vunpack.c.l.b16 %v280
        %v634 = vunpack.c.l.b16 %v281
        %v635 = vpack.c.b16 %v634, %v633
        %v637 = vsel %vm417, %v635, 0
        %v640 = vsel %vm466, %v334, 0
        %642 = vmatprep.subr.bf16.mxu0 0
        %643 = vmatpush1.bf16.msra.mxu0 %v640
        %644 = vmatprep.subr.bf16.mxu0 0
        %645 = vmatpush1.bf16.msra.mxu0 0
        %646 = vmatprep.subr.bf16.mxu0 0
        %647 = vmatpush1.bf16.msra.mxu0 0
        %648 = vmatprep.subr.bf16.mxu0 0
        %649 = vmatpush1.bf16.msra.mxu0 0
        %650 = vmatprep.subr.bf16.mxu0 0
        %651 = vmatpush1.bf16.msra.mxu0 0
        %652 = vmatprep.subr.bf16.mxu0 0
        %653 = vmatpush1.bf16.msra.mxu0 0
        %654 = vmatprep.subr.bf16.mxu0 0
        %655 = vmatpush1.bf16.msra.mxu0 0
        %656 = vmatprep.subr.bf16.mxu0 0
        %657 = vmatpush1.bf16.msra.mxu0 0
        %658 = vmatprep.subr.bf16.mxu0 0
        %659 = vmatpush1.bf16.msra.mxu0 0
        %660 = vmatprep.subr.bf16.mxu0 0
        %661 = vmatpush1.bf16.msra.mxu0 0
        %662 = vmatprep.subr.bf16.mxu0 0
        %663 = vmatpush1.bf16.msra.mxu0 0
        %664 = vmatprep.subr.bf16.mxu0 0
        %665 = vmatpush1.bf16.msra.mxu0 0
        %666 = vmatprep.subr.bf16.mxu0 0
        %667 = vmatpush1.bf16.msra.mxu0 0
        %668 = vmatprep.subr.bf16.mxu0 0
        %669 = vmatpush1.bf16.msra.mxu0 0
        %670 = vmatprep.subr.bf16.mxu0 0
        %671 = vmatpush1.bf16.msra.mxu0 0
        %672 = vmatprep.subr.bf16.mxu0 0
        %673 = vmatpush1.bf16.msra.mxu0 0
        %674 = vmatprep.mubr.bf16.mxu0 0
        %675 = vmatmul.mubr.bf16.gmra.mrb[0].mxu0 %v637
        %v676 = vpop.f32.mrb[0].mxu0
        %v677 = vadd.f32 %v505, %v676
        %v678 = vpop.f32.mrb[0].mxu0
        %v679 = vpop.f32.mrb[0].mxu0
        %v680 = vadd.f32 %v508, %v679
        %v681 = vpop.f32.mrb[0].mxu0
        %682 = vmatprep.mubr.bf16.mxu0 0
        %683 = vmatmul.mubr.bf16.gmra.mrb[0].mxu0 %v419
        %v684 = vpop.f32.mrb[0].mxu0
        %v685 = vadd.f32 %v513, %v684
        %v686 = vpop.f32.mrb[0].mxu0
        %v687 = vpop.f32.mrb[0].mxu0
        %v688 = vadd.f32 %v516, %v687
        %v689 = vpop.f32.mrb[0].mxu0
        %690 = vmatprep.mubr.bf16.mxu0 0
        %691 = vmatmul.mubr.bf16.gmra.mrb[0].mxu0 %v422
        %v692 = vpop.f32.mrb[0].mxu0
        %v693 = vadd.f32 %v521, %v692
        %v694 = vpop.f32.mrb[0].mxu0
        %v695 = vpop.f32.mrb[0].mxu0
        %v696 = vadd.f32 %v524, %v695
        %v697 = vpop.f32.mrb[0].mxu0
        %698 = vmatprep.mubr.bf16.mxu0 0
        %699 = vmatmul.mubr.bf16.gmra.mrb[0].mxu0 %v425
        %v700 = vpop.f32.mrb[0].mxu0
        %v701 = vadd.f32 %v529, %v700
        %v702 = vpop.f32.mrb[0].mxu0
        %v703 = vpop.f32.mrb[0].mxu0
        %v704 = vadd.f32 %v532, %v703
        %v705 = vpop.f32.mrb[0].mxu0
        %706 = vmatprep.mubr.bf16.mxu0 0
        %707 = vmatmul.mubr.bf16.gmra.mrb[0].mxu0 %v428
        %v708 = vpop.f32.mrb[0].mxu0
        %v709 = vadd.f32 %v537, %v708
        %v710 = vpop.f32.mrb[0].mxu0
        %v711 = vpop.f32.mrb[0].mxu0
        %v712 = vadd.f32 %v540, %v711
        %v713 = vpop.f32.mrb[0].mxu0
        %714 = vmatprep.mubr.bf16.mxu0 0
        %715 = vmatmul.mubr.bf16.gmra.mrb[0].mxu0 %v431
        %v716 = vpop.f32.mrb[0].mxu0
        %v717 = vadd.f32 %v545, %v716
        %v718 = vpop.f32.mrb[0].mxu0
        %v719 = vpop.f32.mrb[0].mxu0
        %v720 = vadd.f32 %v548, %v719
        %v721 = vpop.f32.mrb[0].mxu0
        %722 = vmatprep.mubr.bf16.mxu0 0
        %723 = vmatmul.mubr.bf16.gmra.mrb[0].mxu0 %v434
        %v724 = vpop.f32.mrb[0].mxu0
        %v725 = vadd.f32 %v553, %v724
        %v726 = vpop.f32.mrb[0].mxu0
        %v727 = vpop.f32.mrb[0].mxu0
        %v728 = vadd.f32 %v556, %v727
        %v729 = vpop.f32.mrb[0].mxu0
        %730 = vmatprep.mubr.bf16.mxu0 0
        %731 = vmatmul.mubr.bf16.gmra.mrb[0].mxu0 %v437
        %v732 = vpop.f32.mrb[0].mxu0
        %v733 = vadd.f32 %v561, %v732
        %v734 = vpop.f32.mrb[0].mxu0
        %v735 = vpop.f32.mrb[0].mxu0
        %v736 = vadd.f32 %v564, %v735
        %v737 = vpop.f32.mrb[0].mxu0
        %738 = vmatprep.mubr.bf16.mxu0 0
        %739 = vmatmul.mubr.bf16.gmra.mrb[0].mxu0 %v440
        %v740 = vpop.f32.mrb[0].mxu0
        %v741 = vadd.f32 %v569, %v740
        %v742 = vpop.f32.mrb[0].mxu0
        %v743 = vpop.f32.mrb[0].mxu0
        %v744 = vadd.f32 %v572, %v743
        %v745 = vpop.f32.mrb[0].mxu0
        %746 = vmatprep.mubr.bf16.mxu0 0
        %747 = vmatmul.mubr.bf16.gmra.mrb[0].mxu0 %v443
        %v748 = vpop.f32.mrb[0].mxu0
        %v749 = vadd.f32 %v577, %v748
        %v750 = vpop.f32.mrb[0].mxu0
        %v751 = vpop.f32.mrb[0].mxu0
        %v752 = vadd.f32 %v580, %v751
        %v753 = vpop.f32.mrb[0].mxu0
        %754 = vmatprep.mubr.bf16.mxu0 0
        %755 = vmatmul.mubr.bf16.gmra.mrb[0].mxu0 %v446
        %v756 = vpop.f32.mrb[0].mxu0
        %v757 = vadd.f32 %v585, %v756
        %v758 = vpop.f32.mrb[0].mxu0
        %v759 = vpop.f32.mrb[0].mxu0
        %v760 = vadd.f32 %v588, %v759
        %v761 = vpop.f32.mrb[0].mxu0
        %762 = vmatprep.mubr.bf16.mxu0 0
        %763 = vmatmul.mubr.bf16.gmra.mrb[0].mxu0 %v449
        %v764 = vpop.f32.mrb[0].mxu0
        %v765 = vadd.f32 %v593, %v764
        %v766 = vpop.f32.mrb[0].mxu0
        %v767 = vpop.f32.mrb[0].mxu0
        %v768 = vadd.f32 %v596, %v767
        %v769 = vpop.f32.mrb[0].mxu0
        %770 = vmatprep.mubr.bf16.mxu0 0
        %771 = vmatmul.mubr.bf16.gmra.mrb[0].mxu0 %v452
        %v772 = vpop.f32.mrb[0].mxu0
        %v773 = vadd.f32 %v601, %v772
        %v774 = vpop.f32.mrb[0].mxu0
        %v775 = vpop.f32.mrb[0].mxu0
        %v776 = vadd.f32 %v604, %v775
        %v777 = vpop.f32.mrb[0].mxu0
        %778 = vmatprep.mubr.bf16.mxu0 0
        %779 = vmatmul.mubr.bf16.gmra.mrb[0].mxu0 %v455
        %v780 = vpop.f32.mrb[0].mxu0
        %v781 = vadd.f32 %v609, %v780
        %v782 = vpop.f32.mrb[0].mxu0
        %v783 = vpop.f32.mrb[0].mxu0
        %v784 = vadd.f32 %v612, %v783
        %v785 = vpop.f32.mrb[0].mxu0
        %786 = vmatprep.mubr.bf16.mxu0 0
        %787 = vmatmul.mubr.bf16.gmra.mrb[0].mxu0 %v458
        %v788 = vpop.f32.mrb[0].mxu0
        %v789 = vadd.f32 %v617, %v788
        %v790 = vpop.f32.mrb[0].mxu0
        %v791 = vpop.f32.mrb[0].mxu0
        %v792 = vadd.f32 %v620, %v791
        %v793 = vpop.f32.mrb[0].mxu0
        %794 = vmatprep.mubr.bf16.mxu0 0
        %795 = vmatmul.mubr.bf16.gmra.mrb[0].mxu0 %v461
        %v796 = vpop.f32.mrb[0].mxu0
        %v797 = vadd.f32 %v625, %v796
        %v798 = vpop.f32.mrb[0].mxu0
        %v799 = vpop.f32.mrb[0].mxu0
        %v800 = vadd.f32 %v628, %v799
        %v801 = vpop.f32.mrb[0].mxu0
        %802 = vdwg.mxu0
        %s803 = scalar_lea.vmem %s271, 12
        %v804 = vld [vmem:[%s803] sm:$0x3]
        %v807 = vunpack.c.l.b16 %v331
        %v808 = vunpack.c.l.b16 %v332
        %v809 = vpack.c.b16 %v808, %v807
        %v811 = vsel %vm417, %v809, 0
        %v814 = vsel %vm466, %v804, 0
        %816 = vmatprep.subr.bf16.mxu0 0
        %817 = vmatpush1.bf16.msra.mxu0 %v814
        %818 = vmatprep.subr.bf16.mxu0 0
        %819 = vmatpush1.bf16.msra.mxu0 0
        %820 = vmatprep.subr.bf16.mxu0 0
        %821 = vmatpush1.bf16.msra.mxu0 0
        %822 = vmatprep.subr.bf16.mxu0 0
        %823 = vmatpush1.bf16.msra.mxu0 0
        %824 = vmatprep.subr.bf16.mxu0 0
        %825 = vmatpush1.bf16.msra.mxu0 0
        %826 = vmatprep.subr.bf16.mxu0 0
        %827 = vmatpush1.bf16.msra.mxu0 0
        %828 = vmatprep.subr.bf16.mxu0 0
        %829 = vmatpush1.bf16.msra.mxu0 0
        %830 = vmatprep.subr.bf16.mxu0 0
        %831 = vmatpush1.bf16.msra.mxu0 0
        %832 = vmatprep.subr.bf16.mxu0 0
        %833 = vmatpush1.bf16.msra.mxu0 0
        %834 = vmatprep.subr.bf16.mxu0 0
        %835 = vmatpush1.bf16.msra.mxu0 0
        %836 = vmatprep.subr.bf16.mxu0 0
        %837 = vmatpush1.bf16.msra.mxu0 0
        %838 = vmatprep.subr.bf16.mxu0 0
        %839 = vmatpush1.bf16.msra.mxu0 0
        %840 = vmatprep.subr.bf16.mxu0 0
        %841 = vmatpush1.bf16.msra.mxu0 0
        %842 = vmatprep.subr.bf16.mxu0 0
        %843 = vmatpush1.bf16.msra.mxu0 0
        %844 = vmatprep.subr.bf16.mxu0 0
        %845 = vmatpush1.bf16.msra.mxu0 0
        %846 = vmatprep.subr.bf16.mxu0 0
        %847 = vmatpush1.bf16.msra.mxu0 0
        %848 = vmatprep.mubr.bf16.mxu0 0
        %849 = vmatmul.mubr.bf16.gmra.mrb[0].mxu0 %v422
        %v850 = vpop.f32.mrb[0].mxu0
        %v851 = vadd.f32 0.0, %v850
        %v852 = vpop.f32.mrb[0].mxu0
        %v853 = vpop.f32.mrb[0].mxu0
        %v854 = vadd.f32 0.0, %v853
        %v855 = vpop.f32.mrb[0].mxu0
        %856 = vmatprep.mubr.bf16.mxu0 0
        %857 = vmatmul.mubr.bf16.gmra.mrb[0].mxu0 %v425
        %v858 = vpop.f32.mrb[0].mxu0
        %v859 = vadd.f32 0.0, %v858
        %v860 = vpop.f32.mrb[0].mxu0
        %v861 = vpop.f32.mrb[0].mxu0
        %v862 = vadd.f32 0.0, %v861
        %v863 = vpop.f32.mrb[0].mxu0
        %864 = vmatprep.mubr.bf16.mxu0 0
        %865 = vmatmul.mubr.bf16.gmra.mrb[0].mxu0 %v428
        %v866 = vpop.f32.mrb[0].mxu0
        %v867 = vadd.f32 0.0, %v866
        %v868 = vpop.f32.mrb[0].mxu0
        %v869 = vpop.f32.mrb[0].mxu0
        %v870 = vadd.f32 0.0, %v869
        %v871 = vpop.f32.mrb[0].mxu0
        %872 = vmatprep.mubr.bf16.mxu0 0
        %873 = vmatmul.mubr.bf16.gmra.mrb[0].mxu0 %v431
        %v874 = vpop.f32.mrb[0].mxu0
        %v875 = vadd.f32 0.0, %v874
        %v876 = vpop.f32.mrb[0].mxu0
        %v877 = vpop.f32.mrb[0].mxu0
        %v878 = vadd.f32 0.0, %v877
        %v879 = vpop.f32.mrb[0].mxu0
        %880 = vmatprep.mubr.bf16.mxu0 0
        %881 = vmatmul.mubr.bf16.gmra.mrb[0].mxu0 %v434
        %v882 = vpop.f32.mrb[0].mxu0
        %v883 = vadd.f32 0.0, %v882
        %v884 = vpop.f32.mrb[0].mxu0
        %v885 = vpop.f32.mrb[0].mxu0
        %v886 = vadd.f32 0.0, %v885
        %v887 = vpop.f32.mrb[0].mxu0
        %888 = vmatprep.mubr.bf16.mxu0 0
        %889 = vmatmul.mubr.bf16.gmra.mrb[0].mxu0 %v437
        %v890 = vpop.f32.mrb[0].mxu0
        %v891 = vadd.f32 0.0, %v890
        %v892 = vpop.f32.mrb[0].mxu0
        %v893 = vpop.f32.mrb[0].mxu0
        %v894 = vadd.f32 0.0, %v893
        %v895 = vpop.f32.mrb[0].mxu0
        %896 = vmatprep.mubr.bf16.mxu0 0
        %897 = vmatmul.mubr.bf16.gmra.mrb[0].mxu0 %v440
        %v898 = vpop.f32.mrb[0].mxu0
        %v899 = vadd.f32 0.0, %v898
        %v900 = vpop.f32.mrb[0].mxu0
        %v901 = vpop.f32.mrb[0].mxu0
        %v902 = vadd.f32 0.0, %v901
        %v903 = vpop.f32.mrb[0].mxu0
        %904 = vmatprep.mubr.bf16.mxu0 0
        %905 = vmatmul.mubr.bf16.gmra.mrb[0].mxu0 %v443
        %v906 = vpop.f32.mrb[0].mxu0
        %v907 = vadd.f32 0.0, %v906
        %v908 = vpop.f32.mrb[0].mxu0
        %v909 = vpop.f32.mrb[0].mxu0
        %v910 = vadd.f32 0.0, %v909
        %v911 = vpop.f32.mrb[0].mxu0
        %912 = vmatprep.mubr.bf16.mxu0 0
        %913 = vmatmul.mubr.bf16.gmra.mrb[0].mxu0 %v446
        %v914 = vpop.f32.mrb[0].mxu0
        %v915 = vadd.f32 0.0, %v914
        %v916 = vpop.f32.mrb[0].mxu0
        %v917 = vpop.f32.mrb[0].mxu0
        %v918 = vadd.f32 0.0, %v917
        %v919 = vpop.f32.mrb[0].mxu0
        %920 = vmatprep.mubr.bf16.mxu0 0
        %921 = vmatmul.mubr.bf16.gmra.mrb[0].mxu0 %v449
        %v922 = vpop.f32.mrb[0].mxu0
        %v923 = vadd.f32 0.0, %v922
        %v924 = vpop.f32.mrb[0].mxu0
        %v925 = vpop.f32.mrb[0].mxu0
        %v926 = vadd.f32 0.0, %v925
        %v927 = vpop.f32.mrb[0].mxu0
        %928 = vmatprep.mubr.bf16.mxu0 0
        %929 = vmatmul.mubr.bf16.gmra.mrb[0].mxu0 %v452
        %v930 = vpop.f32.mrb[0].mxu0
        %v931 = vadd.f32 0.0, %v930
        %v932 = vpop.f32.mrb[0].mxu0
        %v933 = vpop.f32.mrb[0].mxu0
        %v934 = vadd.f32 0.0, %v933
        %v935 = vpop.f32.mrb[0].mxu0
        %936 = vmatprep.mubr.bf16.mxu0 0
        %937 = vmatmul.mubr.bf16.gmra.mrb[0].mxu0 %v455
        %v938 = vpop.f32.mrb[0].mxu0
        %v939 = vadd.f32 0.0, %v938
        %v940 = vpop.f32.mrb[0].mxu0
        %v941 = vpop.f32.mrb[0].mxu0
        %v942 = vadd.f32 0.0, %v941
        %v943 = vpop.f32.mrb[0].mxu0
        %944 = vmatprep.mubr.bf16.mxu0 0
        %945 = vmatmul.mubr.bf16.gmra.mrb[0].mxu0 %v458
        %v946 = vpop.f32.mrb[0].mxu0
        %v947 = vadd.f32 0.0, %v946
        %v948 = vpop.f32.mrb[0].mxu0
        %v949 = vpop.f32.mrb[0].mxu0
        %v950 = vadd.f32 0.0, %v949
        %v951 = vpop.f32.mrb[0].mxu0
        %952 = vmatprep.mubr.bf16.mxu0 0
        %953 = vmatmul.mubr.bf16.gmra.mrb[0].mxu0 %v461
        %v954 = vpop.f32.mrb[0].mxu0
        %v955 = vadd.f32 0.0, %v954
        %v956 = vpop.f32.mrb[0].mxu0
        %v957 = vpop.f32.mrb[0].mxu0
        %v958 = vadd.f32 0.0, %v957
        %v959 = vpop.f32.mrb[0].mxu0
        %960 = vmatprep.mubr.bf16.mxu0 0
        %961 = vmatmul.mubr.bf16.gmra.mrb[0].mxu0 %v464
        %v962 = vpop.f32.mrb[0].mxu0
        %v963 = vadd.f32 0.0, %v962
        %v964 = vpop.f32.mrb[0].mxu0
        %v965 = vpop.f32.mrb[0].mxu0
        %v966 = vadd.f32 0.0, %v965
        %v967 = vpop.f32.mrb[0].mxu0
        %968 = vmatprep.mubr.bf16.mxu0 0
        %969 = vmatmul.mubr.bf16.gmra.mrb[0].mxu0 %v811
        %v970 = vpop.f32.mrb[0].mxu0
        %v971 = vadd.f32 0.0, %v970
        %v972 = vpop.f32.mrb[0].mxu0
        %v973 = vpop.f32.mrb[0].mxu0
        %v974 = vadd.f32 0.0, %v973
        %v975 = vpop.f32.mrb[0].mxu0
        %976 = vdwg.mxu0
        %v977 = vadd.f32 %v677, %v851
        %v978 = vadd.f32 %v680, %v854
        %v979 = vadd.f32 %v685, %v859
        %v980 = vadd.f32 %v688, %v862
        %v981 = vadd.f32 %v693, %v867
        %v982 = vadd.f32 %v696, %v870
        %v983 = vadd.f32 %v701, %v875
        %v984 = vadd.f32 %v704, %v878
        %v985 = vadd.f32 %v709, %v883
        %v986 = vadd.f32 %v712, %v886
        %v987 = vadd.f32 %v717, %v891
        %v988 = vadd.f32 %v720, %v894
        %v989 = vadd.f32 %v725, %v899
        %v990 = vadd.f32 %v728, %v902
        %v991 = vadd.f32 %v733, %v907
        %v992 = vadd.f32 %v736, %v910
        %v993 = vadd.f32 %v741, %v915
        %v994 = vadd.f32 %v744, %v918
        %v995 = vadd.f32 %v749, %v923
        %v996 = vadd.f32 %v752, %v926
        %v997 = vadd.f32 %v757, %v931
        %v998 = vadd.f32 %v760, %v934
        %v999 = vadd.f32 %v765, %v939
        %v1000 = vadd.f32 %v768, %v942
        %v1001 = vadd.f32 %v773, %v947
        %v1002 = vadd.f32 %v776, %v950
        %v1003 = vadd.f32 %v781, %v955
        %v1004 = vadd.f32 %v784, %v958
        %v1005 = vadd.f32 %v789, %v963
        %v1006 = vadd.f32 %v792, %v966
        %v1007 = vadd.f32 %v797, %v971
        %v1008 = vadd.f32 %v800, %v974
        %vm1009 = vsmask.f32 3328
        %vm1010 = vsmask.f32 7440
        %vm1011 = vmor %vm1009, %vm1010
        %v1013 = vshrl.u32 %v280, 16
        %v1015 = vrot.slane %v1013, 4
        %v1016 = vshll.u32 %v280, 16
        %v1018 = vrot.slane %v1016, 5
        %v1019 = vor.u32 %v1015, %v1018
        %v1020 = vrot.slane %v1019, 4
        %v1022 = vshll.u32 %v281, 16
        %v1024 = vrot.slane %v1022, 5
        %v1025 = vsel %vm1011, %v1020, %v1024
        %v1026 = vshrl.u32 %v281, 16
        %v1028 = vrot.slane %v1026, 4
        %v1029 = vor.u32 %v1028, %v1024
        %v1030 = vrot.slane %v1029, 4
        %v1032 = vshll.u32 %v282, 16
        %v1034 = vrot.slane %v1032, 5
        %v1035 = vsel %vm1011, %v1030, %v1034
        %v1037 = vshrl.u32 %v283, 16
        %v1039 = vrot.slane %v1037, 4
        %v1040 = vshll.u32 %v283, 16
        %v1042 = vrot.slane %v1040, 5
        %v1043 = vor.u32 %v1039, %v1042
        %v1044 = vrot.slane %v1043, 4
        %v1046 = vshll.u32 %v284, 16
        %v1048 = vrot.slane %v1046, 5
        %v1049 = vsel %vm1011, %v1044, %v1048
        %v1050 = vshrl.u32 %v284, 16
        %v1052 = vrot.slane %v1050, 4
        %v1053 = vor.u32 %v1052, %v1048
        %v1054 = vrot.slane %v1053, 4
        %v1056 = vshll.u32 %v285, 16
        %v1058 = vrot.slane %v1056, 5
        %v1059 = vsel %vm1011, %v1054, %v1058
        %v1061 = vshrl.u32 %v286, 16
        %v1063 = vrot.slane %v1061, 4
        %v1064 = vshll.u32 %v286, 16
        %v1066 = vrot.slane %v1064, 5
        %v1067 = vor.u32 %v1063, %v1066
        %v1068 = vrot.slane %v1067, 4
        %v1070 = vshll.u32 %v287, 16
        %v1072 = vrot.slane %v1070, 5
        %v1073 = vsel %vm1011, %v1068, %v1072
        %v1074 = vshrl.u32 %v287, 16
        %v1076 = vrot.slane %v1074, 4
        %v1077 = vor.u32 %v1076, %v1072
        %v1078 = vrot.slane %v1077, 4
        %v1080 = vshll.u32 %v288, 16
        %v1082 = vrot.slane %v1080, 5
        %v1083 = vsel %vm1011, %v1078, %v1082
        %v1085 = vshrl.u32 %v289, 16
        %v1087 = vrot.slane %v1085, 4
        %v1088 = vshll.u32 %v289, 16
        %v1090 = vrot.slane %v1088, 5
        %v1091 = vor.u32 %v1087, %v1090
        %v1092 = vrot.slane %v1091, 4
        %v1094 = vshll.u32 %v290, 16
        %v1096 = vrot.slane %v1094, 5
        %v1097 = vsel %vm1011, %v1092, %v1096
        %v1098 = vshrl.u32 %v290, 16
        %v1100 = vrot.slane %v1098, 4
        %v1101 = vor.u32 %v1100, %v1096
        %v1102 = vrot.slane %v1101, 4
        %v1104 = vshll.u32 %v291, 16
        %v1106 = vrot.slane %v1104, 5
        %v1107 = vsel %vm1011, %v1102, %v1106
        %v1109 = vshrl.u32 %v292, 16
        %v1111 = vrot.slane %v1109, 4
        %v1112 = vshll.u32 %v292, 16
        %v1114 = vrot.slane %v1112, 5
        %v1115 = vor.u32 %v1111, %v1114
        %v1116 = vrot.slane %v1115, 4
        %v1118 = vshll.u32 %v293, 16
        %v1120 = vrot.slane %v1118, 5
        %v1121 = vsel %vm1011, %v1116, %v1120
        %v1122 = vshrl.u32 %v293, 16
        %v1124 = vrot.slane %v1122, 4
        %v1125 = vor.u32 %v1124, %v1120
        %v1126 = vrot.slane %v1125, 4
        %v1128 = vshll.u32 %v294, 16
        %v1130 = vrot.slane %v1128, 5
        %v1131 = vsel %vm1011, %v1126, %v1130
        %v1133 = vshrl.u32 %v295, 16
        %v1135 = vrot.slane %v1133, 4
        %v1136 = vshll.u32 %v295, 16
        %v1138 = vrot.slane %v1136, 5
        %v1139 = vor.u32 %v1135, %v1138
        %v1140 = vrot.slane %v1139, 4
        %v1142 = vshll.u32 %v296, 16
        %v1144 = vrot.slane %v1142, 5
        %v1145 = vsel %vm1011, %v1140, %v1144
        %v1146 = vshrl.u32 %v296, 16
        %v1148 = vrot.slane %v1146, 4
        %v1149 = vor.u32 %v1148, %v1144
        %v1150 = vrot.slane %v1149, 4
        %v1152 = vshll.u32 %v297, 16
        %v1154 = vrot.slane %v1152, 5
        %v1155 = vsel %vm1011, %v1150, %v1154
        %v1157 = vshrl.u32 %v298, 16
        %v1159 = vrot.slane %v1157, 4
        %v1160 = vshll.u32 %v298, 16
        %v1162 = vrot.slane %v1160, 5
        %v1163 = vor.u32 %v1159, %v1162
        %v1164 = vrot.slane %v1163, 4
        %v1166 = vshll.u32 %v299, 16
        %v1168 = vrot.slane %v1166, 5
        %v1169 = vsel %vm1011, %v1164, %v1168
        %v1170 = vshrl.u32 %v299, 16
        %v1172 = vrot.slane %v1170, 4
        %v1173 = vor.u32 %v1172, %v1168
        %v1174 = vrot.slane %v1173, 4
        %v1176 = vshll.u32 %v300, 16
        %v1178 = vrot.slane %v1176, 5
        %v1179 = vsel %vm1011, %v1174, %v1178
        %v1181 = vshrl.u32 %v301, 16
        %v1183 = vrot.slane %v1181, 4
        %v1184 = vshll.u32 %v301, 16
        %v1186 = vrot.slane %v1184, 5
        %v1187 = vor.u32 %v1183, %v1186
        %v1188 = vrot.slane %v1187, 4
        %v1190 = vshll.u32 %v302, 16
        %v1192 = vrot.slane %v1190, 5
        %v1193 = vsel %vm1011, %v1188, %v1192
        %v1194 = vshrl.u32 %v302, 16
        %v1196 = vrot.slane %v1194, 4
        %v1197 = vor.u32 %v1196, %v1192
        %v1198 = vrot.slane %v1197, 4
        %v1200 = vshll.u32 %v303, 16
        %v1202 = vrot.slane %v1200, 5
        %v1203 = vsel %vm1011, %v1198, %v1202
        %v1205 = vshrl.u32 %v304, 16
        %v1207 = vrot.slane %v1205, 4
        %v1208 = vshll.u32 %v304, 16
        %v1210 = vrot.slane %v1208, 5
        %v1211 = vor.u32 %v1207, %v1210
        %v1212 = vrot.slane %v1211, 4
        %v1214 = vshll.u32 %v305, 16
        %v1216 = vrot.slane %v1214, 5
        %v1217 = vsel %vm1011, %v1212, %v1216
        %v1218 = vshrl.u32 %v305, 16
        %v1220 = vrot.slane %v1218, 4
        %v1221 = vor.u32 %v1220, %v1216
        %v1222 = vrot.slane %v1221, 4
        %v1224 = vshll.u32 %v306, 16
        %v1226 = vrot.slane %v1224, 5
        %v1227 = vsel %vm1011, %v1222, %v1226
        %v1229 = vshrl.u32 %v307, 16
        %v1231 = vrot.slane %v1229, 4
        %v1232 = vshll.u32 %v307, 16
        %v1234 = vrot.slane %v1232, 5
        %v1235 = vor.u32 %v1231, %v1234
        %v1236 = vrot.slane %v1235, 4
        %v1238 = vshll.u32 %v308, 16
        %v1240 = vrot.slane %v1238, 5
        %v1241 = vsel %vm1011, %v1236, %v1240
        %v1242 = vshrl.u32 %v308, 16
        %v1244 = vrot.slane %v1242, 4
        %v1245 = vor.u32 %v1244, %v1240
        %v1246 = vrot.slane %v1245, 4
        %v1248 = vshll.u32 %v309, 16
        %v1250 = vrot.slane %v1248, 5
        %v1251 = vsel %vm1011, %v1246, %v1250
        %v1253 = vshrl.u32 %v310, 16
        %v1255 = vrot.slane %v1253, 4
        %v1256 = vshll.u32 %v310, 16
        %v1258 = vrot.slane %v1256, 5
        %v1259 = vor.u32 %v1255, %v1258
        %v1260 = vrot.slane %v1259, 4
        %v1262 = vshll.u32 %v311, 16
        %v1264 = vrot.slane %v1262, 5
        %v1265 = vsel %vm1011, %v1260, %v1264
        %v1266 = vshrl.u32 %v311, 16
        %v1268 = vrot.slane %v1266, 4
        %v1269 = vor.u32 %v1268, %v1264
        %v1270 = vrot.slane %v1269, 4
        %v1272 = vshll.u32 %v312, 16
        %v1274 = vrot.slane %v1272, 5
        %v1275 = vsel %vm1011, %v1270, %v1274
        %v1277 = vshrl.u32 %v313, 16
        %v1279 = vrot.slane %v1277, 4
        %v1280 = vshll.u32 %v313, 16
        %v1282 = vrot.slane %v1280, 5
        %v1283 = vor.u32 %v1279, %v1282
        %v1284 = vrot.slane %v1283, 4
        %v1286 = vshll.u32 %v314, 16
        %v1288 = vrot.slane %v1286, 5
        %v1289 = vsel %vm1011, %v1284, %v1288
        %v1290 = vshrl.u32 %v314, 16
        %v1292 = vrot.slane %v1290, 4
        %v1293 = vor.u32 %v1292, %v1288
        %v1294 = vrot.slane %v1293, 4
        %v1296 = vshll.u32 %v315, 16
        %v1298 = vrot.slane %v1296, 5
        %v1299 = vsel %vm1011, %v1294, %v1298
        %v1301 = vshrl.u32 %v316, 16
        %v1303 = vrot.slane %v1301, 4
        %v1304 = vshll.u32 %v316, 16
        %v1306 = vrot.slane %v1304, 5
        %v1307 = vor.u32 %v1303, %v1306
        %v1308 = vrot.slane %v1307, 4
        %v1310 = vshll.u32 %v317, 16
        %v1312 = vrot.slane %v1310, 5
        %v1313 = vsel %vm1011, %v1308, %v1312
        %v1314 = vshrl.u32 %v317, 16
        %v1316 = vrot.slane %v1314, 4
        %v1317 = vor.u32 %v1316, %v1312
        %v1318 = vrot.slane %v1317, 4
        %v1320 = vshll.u32 %v318, 16
        %v1322 = vrot.slane %v1320, 5
        %v1323 = vsel %vm1011, %v1318, %v1322
        %v1325 = vshrl.u32 %v319, 16
        %v1327 = vrot.slane %v1325, 4
        %v1328 = vshll.u32 %v319, 16
        %v1330 = vrot.slane %v1328, 5
        %v1331 = vor.u32 %v1327, %v1330
        %v1332 = vrot.slane %v1331, 4
        %v1334 = vshll.u32 %v320, 16
        %v1336 = vrot.slane %v1334, 5
        %v1337 = vsel %vm1011, %v1332, %v1336
        %v1338 = vshrl.u32 %v320, 16
        %v1340 = vrot.slane %v1338, 4
        %v1341 = vor.u32 %v1340, %v1336
        %v1342 = vrot.slane %v1341, 4
        %v1344 = vshll.u32 %v321, 16
        %v1346 = vrot.slane %v1344, 5
        %v1347 = vsel %vm1011, %v1342, %v1346
        %v1349 = vshrl.u32 %v322, 16
        %v1351 = vrot.slane %v1349, 4
        %v1352 = vshll.u32 %v322, 16
        %v1354 = vrot.slane %v1352, 5
        %v1355 = vor.u32 %v1351, %v1354
        %v1356 = vrot.slane %v1355, 4
        %v1358 = vshll.u32 %v323, 16
        %v1360 = vrot.slane %v1358, 5
        %v1361 = vsel %vm1011, %v1356, %v1360
        %v1362 = vshrl.u32 %v323, 16
        %v1364 = vrot.slane %v1362, 4
        %v1365 = vor.u32 %v1364, %v1360
        %v1366 = vrot.slane %v1365, 4
        %v1368 = vshll.u32 %v324, 16
        %v1370 = vrot.slane %v1368, 5
        %v1371 = vsel %vm1011, %v1366, %v1370
        %v1373 = vshrl.u32 %v325, 16
        %v1375 = vrot.slane %v1373, 4
        %v1376 = vshll.u32 %v325, 16
        %v1378 = vrot.slane %v1376, 5
        %v1379 = vor.u32 %v1375, %v1378
        %v1380 = vrot.slane %v1379, 4
        %v1382 = vshll.u32 %v326, 16
        %v1384 = vrot.slane %v1382, 5
        %v1385 = vsel %vm1011, %v1380, %v1384
        %v1386 = vshrl.u32 %v326, 16
        %v1388 = vrot.slane %v1386, 4
        %v1389 = vor.u32 %v1388, %v1384
        %v1390 = vrot.slane %v1389, 4
        %v1392 = vshll.u32 %v327, 16
        %v1394 = vrot.slane %v1392, 5
        %v1395 = vsel %vm1011, %v1390, %v1394
        %s1396 = scalar_lea.vmem %s271, 2
        %v1397 = vld [vmem:[%s1396] sm:$0x3]
        %v1398 = vunpack.c.l.b16 %v1025
        %v1399 = vunpack.c.l.b16 %v1035
        %v1400 = vunpack.c.l.b16 %v1049
        %v1401 = vunpack.c.l.b16 %v1059
        %v1402 = vunpack.c.l.b16 %v1073
        %v1403 = vunpack.c.l.b16 %v1083
        %v1404 = vunpack.c.l.b16 %v1097
        %v1405 = vunpack.c.l.b16 %v1107
        %v1406 = vunpack.c.l.b16 %v1121
        %v1407 = vunpack.c.l.b16 %v1131
        %v1408 = vunpack.c.l.b16 %v1145
        %v1409 = vunpack.c.l.b16 %v1155
        %v1410 = vunpack.c.l.b16 %v1169
        %v1411 = vunpack.c.l.b16 %v1179
        %v1412 = vunpack.c.l.b16 %v1193
        %v1413 = vunpack.c.l.b16 %v1203
        %v1414 = vunpack.c.l.b16 %v1217
        %v1415 = vunpack.c.l.b16 %v1227
        %v1416 = vunpack.c.l.b16 %v1241
        %v1417 = vunpack.c.l.b16 %v1251
        %v1418 = vunpack.c.l.b16 %v1265
        %v1419 = vunpack.c.l.b16 %v1275
        %v1420 = vunpack.c.l.b16 %v1289
        %v1421 = vunpack.c.l.b16 %v1299
        %v1422 = vunpack.c.l.b16 %v1313
        %v1423 = vunpack.c.l.b16 %v1323
        %v1424 = vunpack.c.l.b16 %v1337
        %v1425 = vunpack.c.l.b16 %v1347
        %v1426 = vunpack.c.l.b16 %v1361
        %v1427 = vunpack.c.l.b16 %v1371
        %v1428 = vunpack.c.l.b16 %v1385
        %v1429 = vunpack.c.l.b16 %v1395
        %v1430 = vpack.c.b16 %v1399, %v1398
        %v1431 = vpack.c.b16 %v1401, %v1400
        %v1432 = vpack.c.b16 %v1403, %v1402
        %v1433 = vpack.c.b16 %v1405, %v1404
        %v1434 = vpack.c.b16 %v1407, %v1406
        %v1435 = vpack.c.b16 %v1409, %v1408
        %v1436 = vpack.c.b16 %v1411, %v1410
        %v1437 = vpack.c.b16 %v1413, %v1412
        %v1438 = vpack.c.b16 %v1415, %v1414
        %v1439 = vpack.c.b16 %v1417, %v1416
        %v1440 = vpack.c.b16 %v1419, %v1418
        %v1441 = vpack.c.b16 %v1421, %v1420
        %v1442 = vpack.c.b16 %v1423, %v1422
        %v1443 = vpack.c.b16 %v1425, %v1424
        %v1444 = vpack.c.b16 %v1427, %v1426
        %v1445 = vpack.c.b16 %v1429, %v1428
        %v1447 = vsel %vm417, %v1430, 0
        %v1450 = vsel %vm417, %v1431, 0
        %v1453 = vsel %vm417, %v1432, 0
        %v1456 = vsel %vm417, %v1433, 0
        %v1459 = vsel %vm417, %v1434, 0
        %v1462 = vsel %vm417, %v1435, 0
        %v1465 = vsel %vm417, %v1436, 0
        %v1468 = vsel %vm417, %v1437, 0
        %v1471 = vsel %vm417, %v1438, 0
        %v1474 = vsel %vm417, %v1439, 0
        %v1477 = vsel %vm417, %v1440, 0
        %v1480 = vsel %vm417, %v1441, 0
        %v1483 = vsel %vm417, %v1442, 0
        %v1486 = vsel %vm417, %v1443, 0
        %v1489 = vsel %vm417, %v1444, 0
        %v1492 = vsel %vm417, %v1445, 0
        %v1495 = vsel %vm466, %v1397, 0
        %1497 = vmatprep.subr.bf16.mxu0 0
        %1498 = vmatpush1.bf16.msra.mxu0 %v1495
        %1499 = vmatprep.subr.bf16.mxu0 0
        %1500 = vmatpush1.bf16.msra.mxu0 0
        %1501 = vmatprep.subr.bf16.mxu0 0
        %1502 = vmatpush1.bf16.msra.mxu0 0
        %1503 = vmatprep.subr.bf16.mxu0 0
        %1504 = vmatpush1.bf16.msra.mxu0 0
        %1505 = vmatprep.subr.bf16.mxu0 0
        %1506 = vmatpush1.bf16.msra.mxu0 0
        %1507 = vmatprep.subr.bf16.mxu0 0
        %1508 = vmatpush1.bf16.msra.mxu0 0
        %1509 = vmatprep.subr.bf16.mxu0 0
        %1510 = vmatpush1.bf16.msra.mxu0 0
        %1511 = vmatprep.subr.bf16.mxu0 0
        %1512 = vmatpush1.bf16.msra.mxu0 0
        %1513 = vmatprep.subr.bf16.mxu0 0
        %1514 = vmatpush1.bf16.msra.mxu0 0
        %1515 = vmatprep.subr.bf16.mxu0 0
        %1516 = vmatpush1.bf16.msra.mxu0 0
        %1517 = vmatprep.subr.bf16.mxu0 0
        %1518 = vmatpush1.bf16.msra.mxu0 0
        %1519 = vmatprep.subr.bf16.mxu0 0
        %1520 = vmatpush1.bf16.msra.mxu0 0
        %1521 = vmatprep.subr.bf16.mxu0 0
        %1522 = vmatpush1.bf16.msra.mxu0 0
        %1523 = vmatprep.subr.bf16.mxu0 0
        %1524 = vmatpush1.bf16.msra.mxu0 0
        %1525 = vmatprep.subr.bf16.mxu0 0
        %1526 = vmatpush1.bf16.msra.mxu0 0
        %1527 = vmatprep.subr.bf16.mxu0 0
        %1528 = vmatpush1.bf16.msra.mxu0 0
        %1529 = vmatprep.mubr.bf16.mxu0 0
        %1530 = vmatmul.mubr.bf16.gmra.mrb[0].mxu0 %v1447
        %v1531 = vpop.f32.mrb[0].mxu0
        %v1532 = vadd.f32 0.0, %v1531
        %v1533 = vpop.f32.mrb[0].mxu0
        %v1534 = vpop.f32.mrb[0].mxu0
        %v1535 = vadd.f32 0.0, %v1534
        %v1536 = vpop.f32.mrb[0].mxu0
        %1537 = vmatprep.mubr.bf16.mxu0 0
        %1538 = vmatmul.mubr.bf16.gmra.mrb[0].mxu0 %v1450
        %v1539 = vpop.f32.mrb[0].mxu0
        %v1540 = vadd.f32 0.0, %v1539
        %v1541 = vpop.f32.mrb[0].mxu0
        %v1542 = vpop.f32.mrb[0].mxu0
        %v1543 = vadd.f32 0.0, %v1542
        %v1544 = vpop.f32.mrb[0].mxu0
        %1545 = vmatprep.mubr.bf16.mxu0 0
        %1546 = vmatmul.mubr.bf16.gmra.mrb[0].mxu0 %v1453
        %v1547 = vpop.f32.mrb[0].mxu0
        %v1548 = vadd.f32 0.0, %v1547
        %v1549 = vpop.f32.mrb[0].mxu0
        %v1550 = vpop.f32.mrb[0].mxu0
        %v1551 = vadd.f32 0.0, %v1550
        %v1552 = vpop.f32.mrb[0].mxu0
        %1553 = vmatprep.mubr.bf16.mxu0 0
        %1554 = vmatmul.mubr.bf16.gmra.mrb[0].mxu0 %v1456
        %v1555 = vpop.f32.mrb[0].mxu0
        %v1556 = vadd.f32 0.0, %v1555
        %v1557 = vpop.f32.mrb[0].mxu0
        %v1558 = vpop.f32.mrb[0].mxu0
        %v1559 = vadd.f32 0.0, %v1558
        %v1560 = vpop.f32.mrb[0].mxu0
        %1561 = vmatprep.mubr.bf16.mxu0 0
        %1562 = vmatmul.mubr.bf16.gmra.mrb[0].mxu0 %v1459
        %v1563 = vpop.f32.mrb[0].mxu0
        %v1564 = vadd.f32 0.0, %v1563
        %v1565 = vpop.f32.mrb[0].mxu0
        %v1566 = vpop.f32.mrb[0].mxu0
        %v1567 = vadd.f32 0.0, %v1566
        %v1568 = vpop.f32.mrb[0].mxu0
        %1569 = vmatprep.mubr.bf16.mxu0 0
        %1570 = vmatmul.mubr.bf16.gmra.mrb[0].mxu0 %v1462
        %v1571 = vpop.f32.mrb[0].mxu0
        %v1572 = vadd.f32 0.0, %v1571
        %v1573 = vpop.f32.mrb[0].mxu0
        %v1574 = vpop.f32.mrb[0].mxu0
        %v1575 = vadd.f32 0.0, %v1574
        %v1576 = vpop.f32.mrb[0].mxu0
        %1577 = vmatprep.mubr.bf16.mxu0 0
        %1578 = vmatmul.mubr.bf16.gmra.mrb[0].mxu0 %v1465
        %v1579 = vpop.f32.mrb[0].mxu0
        %v1580 = vadd.f32 0.0, %v1579
        %v1581 = vpop.f32.mrb[0].mxu0
        %v1582 = vpop.f32.mrb[0].mxu0
        %v1583 = vadd.f32 0.0, %v1582
        %v1584 = vpop.f32.mrb[0].mxu0
        %1585 = vmatprep.mubr.bf16.mxu0 0
        %1586 = vmatmul.mubr.bf16.gmra.mrb[0].mxu0 %v1468
        %v1587 = vpop.f32.mrb[0].mxu0
        %v1588 = vadd.f32 0.0, %v1587
        %v1589 = vpop.f32.mrb[0].mxu0
        %v1590 = vpop.f32.mrb[0].mxu0
        %v1591 = vadd.f32 0.0, %v1590
        %v1592 = vpop.f32.mrb[0].mxu0
        %1593 = vmatprep.mubr.bf16.mxu0 0
        %1594 = vmatmul.mubr.bf16.gmra.mrb[0].mxu0 %v1471
        %v1595 = vpop.f32.mrb[0].mxu0
        %v1596 = vadd.f32 0.0, %v1595
        %v1597 = vpop.f32.mrb[0].mxu0
        %v1598 = vpop.f32.mrb[0].mxu0
        %v1599 = vadd.f32 0.0, %v1598
        %v1600 = vpop.f32.mrb[0].mxu0
        %1601 = vmatprep.mubr.bf16.mxu0 0
        %1602 = vmatmul.mubr.bf16.gmra.mrb[0].mxu0 %v1474
        %v1603 = vpop.f32.mrb[0].mxu0
        %v1604 = vadd.f32 0.0, %v1603
        %v1605 = vpop.f32.mrb[0].mxu0
        %v1606 = vpop.f32.mrb[0].mxu0
        %v1607 = vadd.f32 0.0, %v1606
        %v1608 = vpop.f32.mrb[0].mxu0
        %1609 = vmatprep.mubr.bf16.mxu0 0
        %1610 = vmatmul.mubr.bf16.gmra.mrb[0].mxu0 %v1477
        %v1611 = vpop.f32.mrb[0].mxu0
        %v1612 = vadd.f32 0.0, %v1611
        %v1613 = vpop.f32.mrb[0].mxu0
        %v1614 = vpop.f32.mrb[0].mxu0
        %v1615 = vadd.f32 0.0, %v1614
        %v1616 = vpop.f32.mrb[0].mxu0
        %1617 = vmatprep.mubr.bf16.mxu0 0
        %1618 = vmatmul.mubr.bf16.gmra.mrb[0].mxu0 %v1480
        %v1619 = vpop.f32.mrb[0].mxu0
        %v1620 = vadd.f32 0.0, %v1619
        %v1621 = vpop.f32.mrb[0].mxu0
        %v1622 = vpop.f32.mrb[0].mxu0
        %v1623 = vadd.f32 0.0, %v1622
        %v1624 = vpop.f32.mrb[0].mxu0
        %1625 = vmatprep.mubr.bf16.mxu0 0
        %1626 = vmatmul.mubr.bf16.gmra.mrb[0].mxu0 %v1483
        %v1627 = vpop.f32.mrb[0].mxu0
        %v1628 = vadd.f32 0.0, %v1627
        %v1629 = vpop.f32.mrb[0].mxu0
        %v1630 = vpop.f32.mrb[0].mxu0
        %v1631 = vadd.f32 0.0, %v1630
        %v1632 = vpop.f32.mrb[0].mxu0
        %1633 = vmatprep.mubr.bf16.mxu0 0
        %1634 = vmatmul.mubr.bf16.gmra.mrb[0].mxu0 %v1486
        %v1635 = vpop.f32.mrb[0].mxu0
        %v1636 = vadd.f32 0.0, %v1635
        %v1637 = vpop.f32.mrb[0].mxu0
        %v1638 = vpop.f32.mrb[0].mxu0
        %v1639 = vadd.f32 0.0, %v1638
        %v1640 = vpop.f32.mrb[0].mxu0
        %1641 = vmatprep.mubr.bf16.mxu0 0
        %1642 = vmatmul.mubr.bf16.gmra.mrb[0].mxu0 %v1489
        %v1643 = vpop.f32.mrb[0].mxu0
        %v1644 = vadd.f32 0.0, %v1643
        %v1645 = vpop.f32.mrb[0].mxu0
        %v1646 = vpop.f32.mrb[0].mxu0
        %v1647 = vadd.f32 0.0, %v1646
        %v1648 = vpop.f32.mrb[0].mxu0
        %1649 = vmatprep.mubr.bf16.mxu0 0
        %1650 = vmatmul.mubr.bf16.gmra.mrb[0].mxu0 %v1492
        %v1651 = vpop.f32.mrb[0].mxu0
        %v1652 = vadd.f32 0.0, %v1651
        %v1653 = vpop.f32.mrb[0].mxu0
        %v1654 = vpop.f32.mrb[0].mxu0
        %v1655 = vadd.f32 0.0, %v1654
        %v1656 = vpop.f32.mrb[0].mxu0
        %1657 = vdwg.mxu0
        %v1658 = vadd.f32 %v977, %v1532
        %v1659 = vadd.f32 %v978, %v1535
        %v1660 = vadd.f32 %v979, %v1540
        %v1661 = vadd.f32 %v980, %v1543
        %v1662 = vadd.f32 %v981, %v1548
        %v1663 = vadd.f32 %v982, %v1551
        %v1664 = vadd.f32 %v983, %v1556
        %v1665 = vadd.f32 %v984, %v1559
        %v1666 = vadd.f32 %v985, %v1564
        %v1667 = vadd.f32 %v986, %v1567
        %v1668 = vadd.f32 %v987, %v1572
        %v1669 = vadd.f32 %v988, %v1575
        %v1670 = vadd.f32 %v989, %v1580
        %v1671 = vadd.f32 %v990, %v1583
        %v1672 = vadd.f32 %v991, %v1588
        %v1673 = vadd.f32 %v992, %v1591
        %v1674 = vadd.f32 %v993, %v1596
        %v1675 = vadd.f32 %v994, %v1599
        %v1676 = vadd.f32 %v995, %v1604
        %v1677 = vadd.f32 %v996, %v1607
        %v1678 = vadd.f32 %v997, %v1612
        %v1679 = vadd.f32 %v998, %v1615
        %v1680 = vadd.f32 %v999, %v1620
        %v1681 = vadd.f32 %v1000, %v1623
        %v1682 = vadd.f32 %v1001, %v1628
        %v1683 = vadd.f32 %v1002, %v1631
        %v1684 = vadd.f32 %v1003, %v1636
        %v1685 = vadd.f32 %v1004, %v1639
        %v1686 = vadd.f32 %v1005, %v1644
        %v1687 = vadd.f32 %v1006, %v1647
        %v1688 = vadd.f32 %v1007, %v1652
        %v1689 = vadd.f32 %v1008, %v1655
        %v1691 = vshrl.u32 %v328, 16
        %v1693 = vrot.slane %v1691, 4
        %v1694 = vshll.u32 %v328, 16
        %v1696 = vrot.slane %v1694, 5
        %v1697 = vor.u32 %v1693, %v1696
        %v1698 = vrot.slane %v1697, 4
        %v1700 = vshll.u32 %v329, 16
        %v1702 = vrot.slane %v1700, 5
        %v1703 = vsel %vm1011, %v1698, %v1702
        %v1704 = vshrl.u32 %v329, 16
        %v1706 = vrot.slane %v1704, 4
        %v1707 = vor.u32 %v1706, %v1702
        %v1708 = vrot.slane %v1707, 4
        %v1710 = vshll.u32 %v330, 16
        %v1712 = vrot.slane %v1710, 5
        %v1713 = vsel %vm1011, %v1708, %v1712
        %s1714 = scalar_lea.vmem %s271, 8
        %v1715 = vld [vmem:[%s1714] sm:$0x3]
        %v1716 = vunpack.c.l.b16 %v1703
        %v1717 = vunpack.c.l.b16 %v1713
        %v1718 = vpack.c.b16 %v1717, %v1716
        %v1720 = vsel %vm417, %v1718, 0
        %v1723 = vsel %vm466, %v1715, 0
        %1725 = vmatprep.subr.bf16.mxu0 0
        %1726 = vmatpush1.bf16.msra.mxu0 %v1723
        %1727 = vmatprep.subr.bf16.mxu0 0
        %1728 = vmatpush1.bf16.msra.mxu0 0
        %1729 = vmatprep.subr.bf16.mxu0 0
        %1730 = vmatpush1.bf16.msra.mxu0 0
        %1731 = vmatprep.subr.bf16.mxu0 0
        %1732 = vmatpush1.bf16.msra.mxu0 0
        %1733 = vmatprep.subr.bf16.mxu0 0
        %1734 = vmatpush1.bf16.msra.mxu0 0
        %1735 = vmatprep.subr.bf16.mxu0 0
        %1736 = vmatpush1.bf16.msra.mxu0 0
        %1737 = vmatprep.subr.bf16.mxu0 0
        %1738 = vmatpush1.bf16.msra.mxu0 0
        %1739 = vmatprep.subr.bf16.mxu0 0
        %1740 = vmatpush1.bf16.msra.mxu0 0
        %1741 = vmatprep.subr.bf16.mxu0 0
        %1742 = vmatpush1.bf16.msra.mxu0 0
        %1743 = vmatprep.subr.bf16.mxu0 0
        %1744 = vmatpush1.bf16.msra.mxu0 0
        %1745 = vmatprep.subr.bf16.mxu0 0
        %1746 = vmatpush1.bf16.msra.mxu0 0
        %1747 = vmatprep.subr.bf16.mxu0 0
        %1748 = vmatpush1.bf16.msra.mxu0 0
        %1749 = vmatprep.subr.bf16.mxu0 0
        %1750 = vmatpush1.bf16.msra.mxu0 0
        %1751 = vmatprep.subr.bf16.mxu0 0
        %1752 = vmatpush1.bf16.msra.mxu0 0
        %1753 = vmatprep.subr.bf16.mxu0 0
        %1754 = vmatpush1.bf16.msra.mxu0 0
        %1755 = vmatprep.subr.bf16.mxu0 0
        %1756 = vmatpush1.bf16.msra.mxu0 0
        %1757 = vmatprep.mubr.bf16.mxu0 0
        %1758 = vmatmul.mubr.bf16.gmra.mrb[0].mxu0 %v1450
        %v1759 = vpop.f32.mrb[0].mxu0
        %v1760 = vadd.f32 0.0, %v1759
        %v1761 = vpop.f32.mrb[0].mxu0
        %v1762 = vpop.f32.mrb[0].mxu0
        %v1763 = vadd.f32 0.0, %v1762
        %v1764 = vpop.f32.mrb[0].mxu0
        %1765 = vmatprep.mubr.bf16.mxu0 0
        %1766 = vmatmul.mubr.bf16.gmra.mrb[0].mxu0 %v1453
        %v1767 = vpop.f32.mrb[0].mxu0
        %v1768 = vadd.f32 0.0, %v1767
        %v1769 = vpop.f32.mrb[0].mxu0
        %v1770 = vpop.f32.mrb[0].mxu0
        %v1771 = vadd.f32 0.0, %v1770
        %v1772 = vpop.f32.mrb[0].mxu0
        %1773 = vmatprep.mubr.bf16.mxu0 0
        %1774 = vmatmul.mubr.bf16.gmra.mrb[0].mxu0 %v1456
        %v1775 = vpop.f32.mrb[0].mxu0
        %v1776 = vadd.f32 0.0, %v1775
        %v1777 = vpop.f32.mrb[0].mxu0
        %v1778 = vpop.f32.mrb[0].mxu0
        %v1779 = vadd.f32 0.0, %v1778
        %v1780 = vpop.f32.mrb[0].mxu0
        %1781 = vmatprep.mubr.bf16.mxu0 0
        %1782 = vmatmul.mubr.bf16.gmra.mrb[0].mxu0 %v1459
        %v1783 = vpop.f32.mrb[0].mxu0
        %v1784 = vadd.f32 0.0, %v1783
        %v1785 = vpop.f32.mrb[0].mxu0
        %v1786 = vpop.f32.mrb[0].mxu0
        %v1787 = vadd.f32 0.0, %v1786
        %v1788 = vpop.f32.mrb[0].mxu0
        %1789 = vmatprep.mubr.bf16.mxu0 0
        %1790 = vmatmul.mubr.bf16.gmra.mrb[0].mxu0 %v1462
        %v1791 = vpop.f32.mrb[0].mxu0
        %v1792 = vadd.f32 0.0, %v1791
        %v1793 = vpop.f32.mrb[0].mxu0
        %v1794 = vpop.f32.mrb[0].mxu0
        %v1795 = vadd.f32 0.0, %v1794
        %v1796 = vpop.f32.mrb[0].mxu0
        %1797 = vmatprep.mubr.bf16.mxu0 0
        %1798 = vmatmul.mubr.bf16.gmra.mrb[0].mxu0 %v1465
        %v1799 = vpop.f32.mrb[0].mxu0
        %v1800 = vadd.f32 0.0, %v1799
        %v1801 = vpop.f32.mrb[0].mxu0
        %v1802 = vpop.f32.mrb[0].mxu0
        %v1803 = vadd.f32 0.0, %v1802
        %v1804 = vpop.f32.mrb[0].mxu0
        %1805 = vmatprep.mubr.bf16.mxu0 0
        %1806 = vmatmul.mubr.bf16.gmra.mrb[0].mxu0 %v1468
        %v1807 = vpop.f32.mrb[0].mxu0
        %v1808 = vadd.f32 0.0, %v1807
        %v1809 = vpop.f32.mrb[0].mxu0
        %v1810 = vpop.f32.mrb[0].mxu0
        %v1811 = vadd.f32 0.0, %v1810
        %v1812 = vpop.f32.mrb[0].mxu0
        %1813 = vmatprep.mubr.bf16.mxu0 0
        %1814 = vmatmul.mubr.bf16.gmra.mrb[0].mxu0 %v1471
        %v1815 = vpop.f32.mrb[0].mxu0
        %v1816 = vadd.f32 0.0, %v1815
        %v1817 = vpop.f32.mrb[0].mxu0
        %v1818 = vpop.f32.mrb[0].mxu0
        %v1819 = vadd.f32 0.0, %v1818
        %v1820 = vpop.f32.mrb[0].mxu0
        %1821 = vmatprep.mubr.bf16.mxu0 0
        %1822 = vmatmul.mubr.bf16.gmra.mrb[0].mxu0 %v1474
        %v1823 = vpop.f32.mrb[0].mxu0
        %v1824 = vadd.f32 0.0, %v1823
        %v1825 = vpop.f32.mrb[0].mxu0
        %v1826 = vpop.f32.mrb[0].mxu0
        %v1827 = vadd.f32 0.0, %v1826
        %v1828 = vpop.f32.mrb[0].mxu0
        %1829 = vmatprep.mubr.bf16.mxu0 0
        %1830 = vmatmul.mubr.bf16.gmra.mrb[0].mxu0 %v1477
        %v1831 = vpop.f32.mrb[0].mxu0
        %v1832 = vadd.f32 0.0, %v1831
        %v1833 = vpop.f32.mrb[0].mxu0
        %v1834 = vpop.f32.mrb[0].mxu0
        %v1835 = vadd.f32 0.0, %v1834
        %v1836 = vpop.f32.mrb[0].mxu0
        %1837 = vmatprep.mubr.bf16.mxu0 0
        %1838 = vmatmul.mubr.bf16.gmra.mrb[0].mxu0 %v1480
        %v1839 = vpop.f32.mrb[0].mxu0
        %v1840 = vadd.f32 0.0, %v1839
        %v1841 = vpop.f32.mrb[0].mxu0
        %v1842 = vpop.f32.mrb[0].mxu0
        %v1843 = vadd.f32 0.0, %v1842
        %v1844 = vpop.f32.mrb[0].mxu0
        %1845 = vmatprep.mubr.bf16.mxu0 0
        %1846 = vmatmul.mubr.bf16.gmra.mrb[0].mxu0 %v1483
        %v1847 = vpop.f32.mrb[0].mxu0
        %v1848 = vadd.f32 0.0, %v1847
        %v1849 = vpop.f32.mrb[0].mxu0
        %v1850 = vpop.f32.mrb[0].mxu0
        %v1851 = vadd.f32 0.0, %v1850
        %v1852 = vpop.f32.mrb[0].mxu0
        %1853 = vmatprep.mubr.bf16.mxu0 0
        %1854 = vmatmul.mubr.bf16.gmra.mrb[0].mxu0 %v1486
        %v1855 = vpop.f32.mrb[0].mxu0
        %v1856 = vadd.f32 0.0, %v1855
        %v1857 = vpop.f32.mrb[0].mxu0
        %v1858 = vpop.f32.mrb[0].mxu0
        %v1859 = vadd.f32 0.0, %v1858
        %v1860 = vpop.f32.mrb[0].mxu0
        %1861 = vmatprep.mubr.bf16.mxu0 0
        %1862 = vmatmul.mubr.bf16.gmra.mrb[0].mxu0 %v1489
        %v1863 = vpop.f32.mrb[0].mxu0
        %v1864 = vadd.f32 0.0, %v1863
        %v1865 = vpop.f32.mrb[0].mxu0
        %v1866 = vpop.f32.mrb[0].mxu0
        %v1867 = vadd.f32 0.0, %v1866
        %v1868 = vpop.f32.mrb[0].mxu0
        %1869 = vmatprep.mubr.bf16.mxu0 0
        %1870 = vmatmul.mubr.bf16.gmra.mrb[0].mxu0 %v1492
        %v1871 = vpop.f32.mrb[0].mxu0
        %v1872 = vadd.f32 0.0, %v1871
        %v1873 = vpop.f32.mrb[0].mxu0
        %v1874 = vpop.f32.mrb[0].mxu0
        %v1875 = vadd.f32 0.0, %v1874
        %v1876 = vpop.f32.mrb[0].mxu0
        %1877 = vmatprep.mubr.bf16.mxu0 0
        %1878 = vmatmul.mubr.bf16.gmra.mrb[0].mxu0 %v1720
        %v1879 = vpop.f32.mrb[0].mxu0
        %v1880 = vadd.f32 0.0, %v1879
        %v1881 = vpop.f32.mrb[0].mxu0
        %v1882 = vpop.f32.mrb[0].mxu0
        %v1883 = vadd.f32 0.0, %v1882
        %v1884 = vpop.f32.mrb[0].mxu0
        %1885 = vdwg.mxu0
        %v1886 = vadd.f32 %v1658, %v1760
        %v1887 = vadd.f32 %v1659, %v1763
        %v1888 = vadd.f32 %v1660, %v1768
        %v1889 = vadd.f32 %v1661, %v1771
        %v1890 = vadd.f32 %v1662, %v1776
        %v1891 = vadd.f32 %v1663, %v1779
        %v1892 = vadd.f32 %v1664, %v1784
        %v1893 = vadd.f32 %v1665, %v1787
        %v1894 = vadd.f32 %v1666, %v1792
        %v1895 = vadd.f32 %v1667, %v1795
        %v1896 = vadd.f32 %v1668, %v1800
        %v1897 = vadd.f32 %v1669, %v1803
        %v1898 = vadd.f32 %v1670, %v1808
        %v1899 = vadd.f32 %v1671, %v1811
        %v1900 = vadd.f32 %v1672, %v1816
        %v1901 = vadd.f32 %v1673, %v1819
        %v1902 = vadd.f32 %v1674, %v1824
        %v1903 = vadd.f32 %v1675, %v1827
        %v1904 = vadd.f32 %v1676, %v1832
        %v1905 = vadd.f32 %v1677, %v1835
        %v1906 = vadd.f32 %v1678, %v1840
        %v1907 = vadd.f32 %v1679, %v1843
        %v1908 = vadd.f32 %v1680, %v1848
        %v1909 = vadd.f32 %v1681, %v1851
        %v1910 = vadd.f32 %v1682, %v1856
        %v1911 = vadd.f32 %v1683, %v1859
        %v1912 = vadd.f32 %v1684, %v1864
        %v1913 = vadd.f32 %v1685, %v1867
        %v1914 = vadd.f32 %v1686, %v1872
        %v1915 = vadd.f32 %v1687, %v1875
        %v1916 = vadd.f32 %v1688, %v1880
        %v1917 = vadd.f32 %v1689, %v1883
        %v1919 = vshrl.u32 %v331, 16
        %v1921 = vrot.slane %v1919, 4
        %v1922 = vshll.u32 %v331, 16
        %v1924 = vrot.slane %v1922, 5
        %v1925 = vor.u32 %v1921, %v1924
        %v1926 = vrot.slane %v1925, 4
        %v1928 = vshll.u32 %v332, 16
        %v1930 = vrot.slane %v1928, 5
        %v1931 = vsel %vm1011, %v1926, %v1930
        %v1932 = vshrl.u32 %v332, 16
        %v1934 = vrot.slane %v1932, 4
        %v1935 = vor.u32 %v1934, %v1930
        %v1936 = vrot.slane %v1935, 4
        %v1938 = vshll.u32 %v333, 16
        %v1940 = vrot.slane %v1938, 5
        %v1941 = vsel %vm1011, %v1936, %v1940
        %s1942 = scalar_lea.vmem %s271, 14
        %v1943 = vld [vmem:[%s1942] sm:$0x3]
        %v1944 = vunpack.c.l.b16 %v1931
        %v1945 = vunpack.c.l.b16 %v1941
        %v1946 = vpack.c.b16 %v1945, %v1944
        %v1948 = vsel %vm417, %v1946, 0
        %v1951 = vsel %vm466, %v1943, 0
        %1953 = vmatprep.subr.bf16.mxu0 0
        %1954 = vmatpush1.bf16.msra.mxu0 %v1951
        %1955 = vmatprep.subr.bf16.mxu0 0
        %1956 = vmatpush1.bf16.msra.mxu0 0
        %1957 = vmatprep.subr.bf16.mxu0 0
        %1958 = vmatpush1.bf16.msra.mxu0 0
        %1959 = vmatprep.subr.bf16.mxu0 0
        %1960 = vmatpush1.bf16.msra.mxu0 0
        %1961 = vmatprep.subr.bf16.mxu0 0
        %1962 = vmatpush1.bf16.msra.mxu0 0
        %1963 = vmatprep.subr.bf16.mxu0 0
        %1964 = vmatpush1.bf16.msra.mxu0 0
        %1965 = vmatprep.subr.bf16.mxu0 0
        %1966 = vmatpush1.bf16.msra.mxu0 0
        %1967 = vmatprep.subr.bf16.mxu0 0
        %1968 = vmatpush1.bf16.msra.mxu0 0
        %1969 = vmatprep.subr.bf16.mxu0 0
        %1970 = vmatpush1.bf16.msra.mxu0 0
        %1971 = vmatprep.subr.bf16.mxu0 0
        %1972 = vmatpush1.bf16.msra.mxu0 0
        %1973 = vmatprep.subr.bf16.mxu0 0
        %1974 = vmatpush1.bf16.msra.mxu0 0
        %1975 = vmatprep.subr.bf16.mxu0 0
        %1976 = vmatpush1.bf16.msra.mxu0 0
        %1977 = vmatprep.subr.bf16.mxu0 0
        %1978 = vmatpush1.bf16.msra.mxu0 0
        %1979 = vmatprep.subr.bf16.mxu0 0
        %1980 = vmatpush1.bf16.msra.mxu0 0
        %1981 = vmatprep.subr.bf16.mxu0 0
        %1982 = vmatpush1.bf16.msra.mxu0 0
        %1983 = vmatprep.subr.bf16.mxu0 0
        %1984 = vmatpush1.bf16.msra.mxu0 0
        %1985 = vmatprep.mubr.bf16.mxu0 0
        %1986 = vmatmul.mubr.bf16.gmra.mrb[0].mxu0 %v1453
        %v1987 = vpop.f32.mrb[0].mxu0
        %v1988 = vadd.f32 0.0, %v1987
        %v1989 = vpop.f32.mrb[0].mxu0
        %v1990 = vpop.f32.mrb[0].mxu0
        %v1991 = vadd.f32 0.0, %v1990
        %v1992 = vpop.f32.mrb[0].mxu0
        %1993 = vmatprep.mubr.bf16.mxu0 0
        %1994 = vmatmul.mubr.bf16.gmra.mrb[0].mxu0 %v1456
        %v1995 = vpop.f32.mrb[0].mxu0
        %v1996 = vadd.f32 0.0, %v1995
        %v1997 = vpop.f32.mrb[0].mxu0
        %v1998 = vpop.f32.mrb[0].mxu0
        %v1999 = vadd.f32 0.0, %v1998
        %v2000 = vpop.f32.mrb[0].mxu0
        %2001 = vmatprep.mubr.bf16.mxu0 0
        %2002 = vmatmul.mubr.bf16.gmra.mrb[0].mxu0 %v1459
        %v2003 = vpop.f32.mrb[0].mxu0
        %v2004 = vadd.f32 0.0, %v2003
        %v2005 = vpop.f32.mrb[0].mxu0
        %v2006 = vpop.f32.mrb[0].mxu0
        %v2007 = vadd.f32 0.0, %v2006
        %v2008 = vpop.f32.mrb[0].mxu0
        %2009 = vmatprep.mubr.bf16.mxu0 0
        %2010 = vmatmul.mubr.bf16.gmra.mrb[0].mxu0 %v1462
        %v2011 = vpop.f32.mrb[0].mxu0
        %v2012 = vadd.f32 0.0, %v2011
        %v2013 = vpop.f32.mrb[0].mxu0
        %v2014 = vpop.f32.mrb[0].mxu0
        %v2015 = vadd.f32 0.0, %v2014
        %v2016 = vpop.f32.mrb[0].mxu0
        %2017 = vmatprep.mubr.bf16.mxu0 0
        %2018 = vmatmul.mubr.bf16.gmra.mrb[0].mxu0 %v1465
        %v2019 = vpop.f32.mrb[0].mxu0
        %v2020 = vadd.f32 0.0, %v2019
        %v2021 = vpop.f32.mrb[0].mxu0
        %v2022 = vpop.f32.mrb[0].mxu0
        %v2023 = vadd.f32 0.0, %v2022
        %v2024 = vpop.f32.mrb[0].mxu0
        %2025 = vmatprep.mubr.bf16.mxu0 0
        %2026 = vmatmul.mubr.bf16.gmra.mrb[0].mxu0 %v1468
        %v2027 = vpop.f32.mrb[0].mxu0
        %v2028 = vadd.f32 0.0, %v2027
        %v2029 = vpop.f32.mrb[0].mxu0
        %v2030 = vpop.f32.mrb[0].mxu0
        %v2031 = vadd.f32 0.0, %v2030
        %v2032 = vpop.f32.mrb[0].mxu0
        %2033 = vmatprep.mubr.bf16.mxu0 0
        %2034 = vmatmul.mubr.bf16.gmra.mrb[0].mxu0 %v1471
        %v2035 = vpop.f32.mrb[0].mxu0
        %v2036 = vadd.f32 0.0, %v2035
        %v2037 = vpop.f32.mrb[0].mxu0
        %v2038 = vpop.f32.mrb[0].mxu0
        %v2039 = vadd.f32 0.0, %v2038
        %v2040 = vpop.f32.mrb[0].mxu0
        %2041 = vmatprep.mubr.bf16.mxu0 0
        %2042 = vmatmul.mubr.bf16.gmra.mrb[0].mxu0 %v1474
        %v2043 = vpop.f32.mrb[0].mxu0
        %v2044 = vadd.f32 0.0, %v2043
        %v2045 = vpop.f32.mrb[0].mxu0
        %v2046 = vpop.f32.mrb[0].mxu0
        %v2047 = vadd.f32 0.0, %v2046
        %v2048 = vpop.f32.mrb[0].mxu0
        %2049 = vmatprep.mubr.bf16.mxu0 0
        %2050 = vmatmul.mubr.bf16.gmra.mrb[0].mxu0 %v1477
        %v2051 = vpop.f32.mrb[0].mxu0
        %v2052 = vadd.f32 0.0, %v2051
        %v2053 = vpop.f32.mrb[0].mxu0
        %v2054 = vpop.f32.mrb[0].mxu0
        %v2055 = vadd.f32 0.0, %v2054
        %v2056 = vpop.f32.mrb[0].mxu0
        %2057 = vmatprep.mubr.bf16.mxu0 0
        %2058 = vmatmul.mubr.bf16.gmra.mrb[0].mxu0 %v1480
        %v2059 = vpop.f32.mrb[0].mxu0
        %v2060 = vadd.f32 0.0, %v2059
        %v2061 = vpop.f32.mrb[0].mxu0
        %v2062 = vpop.f32.mrb[0].mxu0
        %v2063 = vadd.f32 0.0, %v2062
        %v2064 = vpop.f32.mrb[0].mxu0
        %2065 = vmatprep.mubr.bf16.mxu0 0
        %2066 = vmatmul.mubr.bf16.gmra.mrb[0].mxu0 %v1483
        %v2067 = vpop.f32.mrb[0].mxu0
        %v2068 = vadd.f32 0.0, %v2067
        %v2069 = vpop.f32.mrb[0].mxu0
        %v2070 = vpop.f32.mrb[0].mxu0
        %v2071 = vadd.f32 0.0, %v2070
        %v2072 = vpop.f32.mrb[0].mxu0
        %2073 = vmatprep.mubr.bf16.mxu0 0
        %2074 = vmatmul.mubr.bf16.gmra.mrb[0].mxu0 %v1486
        %v2075 = vpop.f32.mrb[0].mxu0
        %v2076 = vadd.f32 0.0, %v2075
        %v2077 = vpop.f32.mrb[0].mxu0
        %v2078 = vpop.f32.mrb[0].mxu0
        %v2079 = vadd.f32 0.0, %v2078
        %v2080 = vpop.f32.mrb[0].mxu0
        %2081 = vmatprep.mubr.bf16.mxu0 0
        %2082 = vmatmul.mubr.bf16.gmra.mrb[0].mxu0 %v1489
        %v2083 = vpop.f32.mrb[0].mxu0
        %v2084 = vadd.f32 0.0, %v2083
        %v2085 = vpop.f32.mrb[0].mxu0
        %v2086 = vpop.f32.mrb[0].mxu0
        %v2087 = vadd.f32 0.0, %v2086
        %v2088 = vpop.f32.mrb[0].mxu0
        %2089 = vmatprep.mubr.bf16.mxu0 0
        %2090 = vmatmul.mubr.bf16.gmra.mrb[0].mxu0 %v1492
        %v2091 = vpop.f32.mrb[0].mxu0
        %v2092 = vadd.f32 0.0, %v2091
        %v2093 = vpop.f32.mrb[0].mxu0
        %v2094 = vpop.f32.mrb[0].mxu0
        %v2095 = vadd.f32 0.0, %v2094
        %v2096 = vpop.f32.mrb[0].mxu0
        %2097 = vmatprep.mubr.bf16.mxu0 0
        %2098 = vmatmul.mubr.bf16.gmra.mrb[0].mxu0 %v1720
        %v2099 = vpop.f32.mrb[0].mxu0
        %v2100 = vadd.f32 0.0, %v2099
        %v2101 = vpop.f32.mrb[0].mxu0
        %v2102 = vpop.f32.mrb[0].mxu0
        %v2103 = vadd.f32 0.0, %v2102
        %v2104 = vpop.f32.mrb[0].mxu0
        %2105 = vmatprep.mubr.bf16.mxu0 0
        %2106 = vmatmul.mubr.bf16.gmra.mrb[0].mxu0 %v1948
        %v2107 = vpop.f32.mrb[0].mxu0
        %v2108 = vadd.f32 0.0, %v2107
        %v2109 = vpop.f32.mrb[0].mxu0
        %v2110 = vpop.f32.mrb[0].mxu0
        %v2111 = vadd.f32 0.0, %v2110
        %v2112 = vpop.f32.mrb[0].mxu0
        %2113 = vdwg.mxu0
        %v2114 = vadd.f32 %v1886, %v1988
        %v2115 = vadd.f32 %v1887, %v1991
        %v2116 = vadd.f32 %v1888, %v1996
        %v2117 = vadd.f32 %v1889, %v1999
        %v2118 = vadd.f32 %v1890, %v2004
        %v2119 = vadd.f32 %v1891, %v2007
        %v2120 = vadd.f32 %v1892, %v2012
        %v2121 = vadd.f32 %v1893, %v2015
        %v2122 = vadd.f32 %v1894, %v2020
        %v2123 = vadd.f32 %v1895, %v2023
        %v2124 = vadd.f32 %v1896, %v2028
        %v2125 = vadd.f32 %v1897, %v2031
        %v2126 = vadd.f32 %v1898, %v2036
        %v2127 = vadd.f32 %v1899, %v2039
        %v2128 = vadd.f32 %v1900, %v2044
        %v2129 = vadd.f32 %v1901, %v2047
        %v2130 = vadd.f32 %v1902, %v2052
        %v2131 = vadd.f32 %v1903, %v2055
        %v2132 = vadd.f32 %v1904, %v2060
        %v2133 = vadd.f32 %v1905, %v2063
        %v2134 = vadd.f32 %v1906, %v2068
        %v2135 = vadd.f32 %v1907, %v2071
        %v2136 = vadd.f32 %v1908, %v2076
        %v2137 = vadd.f32 %v1909, %v2079
        %v2138 = vadd.f32 %v1910, %v2084
        %v2139 = vadd.f32 %v1911, %v2087
        %v2140 = vadd.f32 %v1912, %v2092
        %v2141 = vadd.f32 %v1913, %v2095
        %v2142 = vadd.f32 %v1914, %v2100
        %v2143 = vadd.f32 %v1915, %v2103
        %v2144 = vadd.f32 %v1916, %v2108
        %v2145 = vadd.f32 %v1917, %v2111
        %vm2162 = vcmask 1042432
        %vm2163 = vcmask 1046532
        %vm2164 = vmor %vm2162, %vm2163
        %v2165 = vrot.slane %v280, 5
        %v2166 = vrot.slane %v2165, 4
        %v2167 = vrot.slane %v281, 5
        %v2168 = vsel %vm2164, %v2166, %v2167
        %v2169 = vrot.slane %v2167, 4
        %v2170 = vrot.slane %v282, 5
        %v2171 = vsel %vm2164, %v2169, %v2170
        %v2172 = vrot.slane %v283, 5
        %v2173 = vrot.slane %v2172, 4
        %v2174 = vrot.slane %v284, 5
        %v2175 = vsel %vm2164, %v2173, %v2174
        %v2176 = vrot.slane %v2174, 4
        %v2177 = vrot.slane %v285, 5
        %v2178 = vsel %vm2164, %v2176, %v2177
        %v2179 = vrot.slane %v286, 5
        %v2180 = vrot.slane %v2179, 4
        %v2181 = vrot.slane %v287, 5
        %v2182 = vsel %vm2164, %v2180, %v2181
        %v2183 = vrot.slane %v2181, 4
        %v2184 = vrot.slane %v288, 5
        %v2185 = vsel %vm2164, %v2183, %v2184
        %v2186 = vrot.slane %v289, 5
        %v2187 = vrot.slane %v2186, 4
        %v2188 = vrot.slane %v290, 5
        %v2189 = vsel %vm2164, %v2187, %v2188
        %v2190 = vrot.slane %v2188, 4
        %v2191 = vrot.slane %v291, 5
        %v2192 = vsel %vm2164, %v2190, %v2191
        %v2193 = vrot.slane %v292, 5
        %v2194 = vrot.slane %v2193, 4
        %v2195 = vrot.slane %v293, 5
        %v2196 = vsel %vm2164, %v2194, %v2195
        %v2197 = vrot.slane %v2195, 4
        %v2198 = vrot.slane %v294, 5
        %v2199 = vsel %vm2164, %v2197, %v2198
        %v2200 = vrot.slane %v295, 5
        %v2201 = vrot.slane %v2200, 4
        %v2202 = vrot.slane %v296, 5
        %v2203 = vsel %vm2164, %v2201, %v2202
        %v2204 = vrot.slane %v2202, 4
        %v2205 = vrot.slane %v297, 5
        %v2206 = vsel %vm2164, %v2204, %v2205
        %v2207 = vrot.slane %v298, 5
        %v2208 = vrot.slane %v2207, 4
        %v2209 = vrot.slane %v299, 5
        %v2210 = vsel %vm2164, %v2208, %v2209
        %v2211 = vrot.slane %v2209, 4
        %v2212 = vrot.slane %v300, 5
        %v2213 = vsel %vm2164, %v2211, %v2212
        %v2214 = vrot.slane %v301, 5
        %v2215 = vrot.slane %v2214, 4
        %v2216 = vrot.slane %v302, 5
        %v2217 = vsel %vm2164, %v2215, %v2216
        %v2218 = vrot.slane %v2216, 4
        %v2219 = vrot.slane %v303, 5
        %v2220 = vsel %vm2164, %v2218, %v2219
        %v2221 = vrot.slane %v304, 5
        %v2222 = vrot.slane %v2221, 4
        %v2223 = vrot.slane %v305, 5
        %v2224 = vsel %vm2164, %v2222, %v2223
        %v2225 = vrot.slane %v2223, 4
        %v2226 = vrot.slane %v306, 5
        %v2227 = vsel %vm2164, %v2225, %v2226
        %v2228 = vrot.slane %v307, 5
        %v2229 = vrot.slane %v2228, 4
        %v2230 = vrot.slane %v308, 5
        %v2231 = vsel %vm2164, %v2229, %v2230
        %v2232 = vrot.slane %v2230, 4
        %v2233 = vrot.slane %v309, 5
        %v2234 = vsel %vm2164, %v2232, %v2233
        %v2235 = vrot.slane %v310, 5
        %v2236 = vrot.slane %v2235, 4
        %v2237 = vrot.slane %v311, 5
        %v2238 = vsel %vm2164, %v2236, %v2237
        %v2239 = vrot.slane %v2237, 4
        %v2240 = vrot.slane %v312, 5
        %v2241 = vsel %vm2164, %v2239, %v2240
        %v2242 = vrot.slane %v313, 5
        %v2243 = vrot.slane %v2242, 4
        %v2244 = vrot.slane %v314, 5
        %v2245 = vsel %vm2164, %v2243, %v2244
        %v2246 = vrot.slane %v2244, 4
        %v2247 = vrot.slane %v315, 5
        %v2248 = vsel %vm2164, %v2246, %v2247
        %v2249 = vrot.slane %v316, 5
        %v2250 = vrot.slane %v2249, 4
        %v2251 = vrot.slane %v317, 5
        %v2252 = vsel %vm2164, %v2250, %v2251
        %v2253 = vrot.slane %v2251, 4
        %v2254 = vrot.slane %v318, 5
        %v2255 = vsel %vm2164, %v2253, %v2254
        %v2256 = vrot.slane %v319, 5
        %v2257 = vrot.slane %v2256, 4
        %v2258 = vrot.slane %v320, 5
        %v2259 = vsel %vm2164, %v2257, %v2258
        %v2260 = vrot.slane %v2258, 4
        %v2261 = vrot.slane %v321, 5
        %v2262 = vsel %vm2164, %v2260, %v2261
        %v2263 = vrot.slane %v322, 5
        %v2264 = vrot.slane %v2263, 4
        %v2265 = vrot.slane %v323, 5
        %v2266 = vsel %vm2164, %v2264, %v2265
        %v2267 = vrot.slane %v2265, 4
        %v2268 = vrot.slane %v324, 5
        %v2269 = vsel %vm2164, %v2267, %v2268
        %v2270 = vrot.slane %v325, 5
        %v2271 = vrot.slane %v2270, 4
        %v2272 = vrot.slane %v326, 5
        %v2273 = vsel %vm2164, %v2271, %v2272
        %v2274 = vrot.slane %v2272, 4
        %v2275 = vrot.slane %v327, 5
        %v2276 = vsel %vm2164, %v2274, %v2275
        %s2277 = scalar_lea.vmem %s271, 4
        %v2278 = vld [vmem:[%s2277] sm:$0x3]
        %v2279 = vunpack.c.l.b16 %v2168
        %v2280 = vunpack.c.l.b16 %v2171
        %v2281 = vunpack.c.l.b16 %v2175
        %v2282 = vunpack.c.l.b16 %v2178
        %v2283 = vunpack.c.l.b16 %v2182
        %v2284 = vunpack.c.l.b16 %v2185
        %v2285 = vunpack.c.l.b16 %v2189
        %v2286 = vunpack.c.l.b16 %v2192
        %v2287 = vunpack.c.l.b16 %v2196
        %v2288 = vunpack.c.l.b16 %v2199
        %v2289 = vunpack.c.l.b16 %v2203
        %v2290 = vunpack.c.l.b16 %v2206
        %v2291 = vunpack.c.l.b16 %v2210
        %v2292 = vunpack.c.l.b16 %v2213
        %v2293 = vunpack.c.l.b16 %v2217
        %v2294 = vunpack.c.l.b16 %v2220
        %v2295 = vunpack.c.l.b16 %v2224
        %v2296 = vunpack.c.l.b16 %v2227
        %v2297 = vunpack.c.l.b16 %v2231
        %v2298 = vunpack.c.l.b16 %v2234
        %v2299 = vunpack.c.l.b16 %v2238
        %v2300 = vunpack.c.l.b16 %v2241
        %v2301 = vunpack.c.l.b16 %v2245
        %v2302 = vunpack.c.l.b16 %v2248
        %v2303 = vunpack.c.l.b16 %v2252
        %v2304 = vunpack.c.l.b16 %v2255
        %v2305 = vunpack.c.l.b16 %v2259
        %v2306 = vunpack.c.l.b16 %v2262
        %v2307 = vunpack.c.l.b16 %v2266
        %v2308 = vunpack.c.l.b16 %v2269
        %v2309 = vunpack.c.l.b16 %v2273
        %v2310 = vunpack.c.l.b16 %v2276
        %v2311 = vpack.c.b16 %v2280, %v2279
        %v2312 = vpack.c.b16 %v2282, %v2281
        %v2313 = vpack.c.b16 %v2284, %v2283
        %v2314 = vpack.c.b16 %v2286, %v2285
        %v2315 = vpack.c.b16 %v2288, %v2287
        %v2316 = vpack.c.b16 %v2290, %v2289
        %v2317 = vpack.c.b16 %v2292, %v2291
        %v2318 = vpack.c.b16 %v2294, %v2293
        %v2319 = vpack.c.b16 %v2296, %v2295
        %v2320 = vpack.c.b16 %v2298, %v2297
        %v2321 = vpack.c.b16 %v2300, %v2299
        %v2322 = vpack.c.b16 %v2302, %v2301
        %v2323 = vpack.c.b16 %v2304, %v2303
        %v2324 = vpack.c.b16 %v2306, %v2305
        %v2325 = vpack.c.b16 %v2308, %v2307
        %v2326 = vpack.c.b16 %v2310, %v2309
        %v2328 = vsel %vm417, %v2311, 0
        %v2331 = vsel %vm417, %v2312, 0
        %v2334 = vsel %vm417, %v2313, 0
        %v2337 = vsel %vm417, %v2314, 0
        %v2340 = vsel %vm417, %v2315, 0
        %v2343 = vsel %vm417, %v2316, 0
        %v2346 = vsel %vm417, %v2317, 0
        %v2349 = vsel %vm417, %v2318, 0
        %v2352 = vsel %vm417, %v2319, 0
        %v2355 = vsel %vm417, %v2320, 0
        %v2358 = vsel %vm417, %v2321, 0
        %v2361 = vsel %vm417, %v2322, 0
        %v2364 = vsel %vm417, %v2323, 0
        %v2367 = vsel %vm417, %v2324, 0
        %v2370 = vsel %vm417, %v2325, 0
        %v2373 = vsel %vm417, %v2326, 0
        %v2376 = vsel %vm466, %v2278, 0
        %2378 = vmatprep.subr.bf16.mxu0 0
        %2379 = vmatpush1.bf16.msra.mxu0 %v2376
        %2380 = vmatprep.subr.bf16.mxu0 0
        %2381 = vmatpush1.bf16.msra.mxu0 0
        %2382 = vmatprep.subr.bf16.mxu0 0
        %2383 = vmatpush1.bf16.msra.mxu0 0
        %2384 = vmatprep.subr.bf16.mxu0 0
        %2385 = vmatpush1.bf16.msra.mxu0 0
        %2386 = vmatprep.subr.bf16.mxu0 0
        %2387 = vmatpush1.bf16.msra.mxu0 0
        %2388 = vmatprep.subr.bf16.mxu0 0
        %2389 = vmatpush1.bf16.msra.mxu0 0
        %2390 = vmatprep.subr.bf16.mxu0 0
        %2391 = vmatpush1.bf16.msra.mxu0 0
        %2392 = vmatprep.subr.bf16.mxu0 0
        %2393 = vmatpush1.bf16.msra.mxu0 0
        %2394 = vmatprep.subr.bf16.mxu0 0
        %2395 = vmatpush1.bf16.msra.mxu0 0
        %2396 = vmatprep.subr.bf16.mxu0 0
        %2397 = vmatpush1.bf16.msra.mxu0 0
        %2398 = vmatprep.subr.bf16.mxu0 0
        %2399 = vmatpush1.bf16.msra.mxu0 0
        %2400 = vmatprep.subr.bf16.mxu0 0
        %2401 = vmatpush1.bf16.msra.mxu0 0
        %2402 = vmatprep.subr.bf16.mxu0 0
        %2403 = vmatpush1.bf16.msra.mxu0 0
        %2404 = vmatprep.subr.bf16.mxu0 0
        %2405 = vmatpush1.bf16.msra.mxu0 0
        %2406 = vmatprep.subr.bf16.mxu0 0
        %2407 = vmatpush1.bf16.msra.mxu0 0
        %2408 = vmatprep.subr.bf16.mxu0 0
        %2409 = vmatpush1.bf16.msra.mxu0 0
        %2410 = vmatprep.mubr.bf16.mxu0 0
        %2411 = vmatmul.mubr.bf16.gmra.mrb[0].mxu0 %v2328
        %v2412 = vpop.f32.mrb[0].mxu0
        %v2413 = vadd.f32 0.0, %v2412
        %v2414 = vpop.f32.mrb[0].mxu0
        %v2415 = vpop.f32.mrb[0].mxu0
        %v2416 = vadd.f32 0.0, %v2415
        %v2417 = vpop.f32.mrb[0].mxu0
        %2418 = vmatprep.mubr.bf16.mxu0 0
        %2419 = vmatmul.mubr.bf16.gmra.mrb[0].mxu0 %v2331
        %v2420 = vpop.f32.mrb[0].mxu0
        %v2421 = vadd.f32 0.0, %v2420
        %v2422 = vpop.f32.mrb[0].mxu0
        %v2423 = vpop.f32.mrb[0].mxu0
        %v2424 = vadd.f32 0.0, %v2423
        %v2425 = vpop.f32.mrb[0].mxu0
        %2426 = vmatprep.mubr.bf16.mxu0 0
        %2427 = vmatmul.mubr.bf16.gmra.mrb[0].mxu0 %v2334
        %v2428 = vpop.f32.mrb[0].mxu0
        %v2429 = vadd.f32 0.0, %v2428
        %v2430 = vpop.f32.mrb[0].mxu0
        %v2431 = vpop.f32.mrb[0].mxu0
        %v2432 = vadd.f32 0.0, %v2431
        %v2433 = vpop.f32.mrb[0].mxu0
        %2434 = vmatprep.mubr.bf16.mxu0 0
        %2435 = vmatmul.mubr.bf16.gmra.mrb[0].mxu0 %v2337
        %v2436 = vpop.f32.mrb[0].mxu0
        %v2437 = vadd.f32 0.0, %v2436
        %v2438 = vpop.f32.mrb[0].mxu0
        %v2439 = vpop.f32.mrb[0].mxu0
        %v2440 = vadd.f32 0.0, %v2439
        %v2441 = vpop.f32.mrb[0].mxu0
        %2442 = vmatprep.mubr.bf16.mxu0 0
        %2443 = vmatmul.mubr.bf16.gmra.mrb[0].mxu0 %v2340
        %v2444 = vpop.f32.mrb[0].mxu0
        %v2445 = vadd.f32 0.0, %v2444
        %v2446 = vpop.f32.mrb[0].mxu0
        %v2447 = vpop.f32.mrb[0].mxu0
        %v2448 = vadd.f32 0.0, %v2447
        %v2449 = vpop.f32.mrb[0].mxu0
        %2450 = vmatprep.mubr.bf16.mxu0 0
        %2451 = vmatmul.mubr.bf16.gmra.mrb[0].mxu0 %v2343
        %v2452 = vpop.f32.mrb[0].mxu0
        %v2453 = vadd.f32 0.0, %v2452
        %v2454 = vpop.f32.mrb[0].mxu0
        %v2455 = vpop.f32.mrb[0].mxu0
        %v2456 = vadd.f32 0.0, %v2455
        %v2457 = vpop.f32.mrb[0].mxu0
        %2458 = vmatprep.mubr.bf16.mxu0 0
        %2459 = vmatmul.mubr.bf16.gmra.mrb[0].mxu0 %v2346
        %v2460 = vpop.f32.mrb[0].mxu0
        %v2461 = vadd.f32 0.0, %v2460
        %v2462 = vpop.f32.mrb[0].mxu0
        %v2463 = vpop.f32.mrb[0].mxu0
        %v2464 = vadd.f32 0.0, %v2463
        %v2465 = vpop.f32.mrb[0].mxu0
        %2466 = vmatprep.mubr.bf16.mxu0 0
        %2467 = vmatmul.mubr.bf16.gmra.mrb[0].mxu0 %v2349
        %v2468 = vpop.f32.mrb[0].mxu0
        %v2469 = vadd.f32 0.0, %v2468
        %v2470 = vpop.f32.mrb[0].mxu0
        %v2471 = vpop.f32.mrb[0].mxu0
        %v2472 = vadd.f32 0.0, %v2471
        %v2473 = vpop.f32.mrb[0].mxu0
        %2474 = vmatprep.mubr.bf16.mxu0 0
        %2475 = vmatmul.mubr.bf16.gmra.mrb[0].mxu0 %v2352
        %v2476 = vpop.f32.mrb[0].mxu0
        %v2477 = vadd.f32 0.0, %v2476
        %v2478 = vpop.f32.mrb[0].mxu0
        %v2479 = vpop.f32.mrb[0].mxu0
        %v2480 = vadd.f32 0.0, %v2479
        %v2481 = vpop.f32.mrb[0].mxu0
        %2482 = vmatprep.mubr.bf16.mxu0 0
        %2483 = vmatmul.mubr.bf16.gmra.mrb[0].mxu0 %v2355
        %v2484 = vpop.f32.mrb[0].mxu0
        %v2485 = vadd.f32 0.0, %v2484
        %v2486 = vpop.f32.mrb[0].mxu0
        %v2487 = vpop.f32.mrb[0].mxu0
        %v2488 = vadd.f32 0.0, %v2487
        %v2489 = vpop.f32.mrb[0].mxu0
        %2490 = vmatprep.mubr.bf16.mxu0 0
        %2491 = vmatmul.mubr.bf16.gmra.mrb[0].mxu0 %v2358
        %v2492 = vpop.f32.mrb[0].mxu0
        %v2493 = vadd.f32 0.0, %v2492
        %v2494 = vpop.f32.mrb[0].mxu0
        %v2495 = vpop.f32.mrb[0].mxu0
        %v2496 = vadd.f32 0.0, %v2495
        %v2497 = vpop.f32.mrb[0].mxu0
        %2498 = vmatprep.mubr.bf16.mxu0 0
        %2499 = vmatmul.mubr.bf16.gmra.mrb[0].mxu0 %v2361
        %v2500 = vpop.f32.mrb[0].mxu0
        %v2501 = vadd.f32 0.0, %v2500
        %v2502 = vpop.f32.mrb[0].mxu0
        %v2503 = vpop.f32.mrb[0].mxu0
        %v2504 = vadd.f32 0.0, %v2503
        %v2505 = vpop.f32.mrb[0].mxu0
        %2506 = vmatprep.mubr.bf16.mxu0 0
        %2507 = vmatmul.mubr.bf16.gmra.mrb[0].mxu0 %v2364
        %v2508 = vpop.f32.mrb[0].mxu0
        %v2509 = vadd.f32 0.0, %v2508
        %v2510 = vpop.f32.mrb[0].mxu0
        %v2511 = vpop.f32.mrb[0].mxu0
        %v2512 = vadd.f32 0.0, %v2511
        %v2513 = vpop.f32.mrb[0].mxu0
        %2514 = vmatprep.mubr.bf16.mxu0 0
        %2515 = vmatmul.mubr.bf16.gmra.mrb[0].mxu0 %v2367
        %v2516 = vpop.f32.mrb[0].mxu0
        %v2517 = vadd.f32 0.0, %v2516
        %v2518 = vpop.f32.mrb[0].mxu0
        %v2519 = vpop.f32.mrb[0].mxu0
        %v2520 = vadd.f32 0.0, %v2519
        %v2521 = vpop.f32.mrb[0].mxu0
        %2522 = vmatprep.mubr.bf16.mxu0 0
        %2523 = vmatmul.mubr.bf16.gmra.mrb[0].mxu0 %v2370
        %v2524 = vpop.f32.mrb[0].mxu0
        %v2525 = vadd.f32 0.0, %v2524
        %v2526 = vpop.f32.mrb[0].mxu0
        %v2527 = vpop.f32.mrb[0].mxu0
        %v2528 = vadd.f32 0.0, %v2527
        %v2529 = vpop.f32.mrb[0].mxu0
        %2530 = vmatprep.mubr.bf16.mxu0 0
        %2531 = vmatmul.mubr.bf16.gmra.mrb[0].mxu0 %v2373
        %v2532 = vpop.f32.mrb[0].mxu0
        %v2533 = vadd.f32 0.0, %v2532
        %v2534 = vpop.f32.mrb[0].mxu0
        %v2535 = vpop.f32.mrb[0].mxu0
        %v2536 = vadd.f32 0.0, %v2535
        %v2537 = vpop.f32.mrb[0].mxu0
        %2538 = vdwg.mxu0
        %v2539 = vadd.f32 %v2114, %v2413
        %v2540 = vadd.f32 %v2115, %v2416
        %v2541 = vadd.f32 %v2116, %v2421
        %v2542 = vadd.f32 %v2117, %v2424
        %v2543 = vadd.f32 %v2118, %v2429
        %v2544 = vadd.f32 %v2119, %v2432
        %v2545 = vadd.f32 %v2120, %v2437
        %v2546 = vadd.f32 %v2121, %v2440
        %v2547 = vadd.f32 %v2122, %v2445
        %v2548 = vadd.f32 %v2123, %v2448
        %v2549 = vadd.f32 %v2124, %v2453
        %v2550 = vadd.f32 %v2125, %v2456
        %v2551 = vadd.f32 %v2126, %v2461
        %v2552 = vadd.f32 %v2127, %v2464
        %v2553 = vadd.f32 %v2128, %v2469
        %v2554 = vadd.f32 %v2129, %v2472
        %v2555 = vadd.f32 %v2130, %v2477
        %v2556 = vadd.f32 %v2131, %v2480
        %v2557 = vadd.f32 %v2132, %v2485
        %v2558 = vadd.f32 %v2133, %v2488
        %v2559 = vadd.f32 %v2134, %v2493
        %v2560 = vadd.f32 %v2135, %v2496
        %v2561 = vadd.f32 %v2136, %v2501
        %v2562 = vadd.f32 %v2137, %v2504
        %v2563 = vadd.f32 %v2138, %v2509
        %v2564 = vadd.f32 %v2139, %v2512
        %v2565 = vadd.f32 %v2140, %v2517
        %v2566 = vadd.f32 %v2141, %v2520
        %v2567 = vadd.f32 %v2142, %v2525
        %v2568 = vadd.f32 %v2143, %v2528
        %v2569 = vadd.f32 %v2144, %v2533
        %v2570 = vadd.f32 %v2145, %v2536
        %v2572 = vrot.slane %v328, 5
        %v2573 = vrot.slane %v2572, 4
        %v2574 = vrot.slane %v329, 5
        %v2575 = vsel %vm2164, %v2573, %v2574
        %v2576 = vrot.slane %v2574, 4
        %v2577 = vrot.slane %v330, 5
        %v2578 = vsel %vm2164, %v2576, %v2577
        %s2579 = scalar_lea.vmem %s271, 10
        %v2580 = vld [vmem:[%s2579] sm:$0x3]
        %v2581 = vunpack.c.l.b16 %v2575
        %v2582 = vunpack.c.l.b16 %v2578
        %v2583 = vpack.c.b16 %v2582, %v2581
        %v2585 = vsel %vm417, %v2583, 0
        %v2588 = vsel %vm466, %v2580, 0
        %2590 = vmatprep.subr.bf16.mxu0 0
        %2591 = vmatpush1.bf16.msra.mxu0 %v2588
        %2592 = vmatprep.subr.bf16.mxu0 0
        %2593 = vmatpush1.bf16.msra.mxu0 0
        %2594 = vmatprep.subr.bf16.mxu0 0
        %2595 = vmatpush1.bf16.msra.mxu0 0
        %2596 = vmatprep.subr.bf16.mxu0 0
        %2597 = vmatpush1.bf16.msra.mxu0 0
        %2598 = vmatprep.subr.bf16.mxu0 0
        %2599 = vmatpush1.bf16.msra.mxu0 0
        %2600 = vmatprep.subr.bf16.mxu0 0
        %2601 = vmatpush1.bf16.msra.mxu0 0
        %2602 = vmatprep.subr.bf16.mxu0 0
        %2603 = vmatpush1.bf16.msra.mxu0 0
        %2604 = vmatprep.subr.bf16.mxu0 0
        %2605 = vmatpush1.bf16.msra.mxu0 0
        %2606 = vmatprep.subr.bf16.mxu0 0
        %2607 = vmatpush1.bf16.msra.mxu0 0
        %2608 = vmatprep.subr.bf16.mxu0 0
        %2609 = vmatpush1.bf16.msra.mxu0 0
        %2610 = vmatprep.subr.bf16.mxu0 0
        %2611 = vmatpush1.bf16.msra.mxu0 0
        %2612 = vmatprep.subr.bf16.mxu0 0
        %2613 = vmatpush1.bf16.msra.mxu0 0
        %2614 = vmatprep.subr.bf16.mxu0 0
        %2615 = vmatpush1.bf16.msra.mxu0 0
        %2616 = vmatprep.subr.bf16.mxu0 0
        %2617 = vmatpush1.bf16.msra.mxu0 0
        %2618 = vmatprep.subr.bf16.mxu0 0
        %2619 = vmatpush1.bf16.msra.mxu0 0
        %2620 = vmatprep.subr.bf16.mxu0 0
        %2621 = vmatpush1.bf16.msra.mxu0 0
        %2622 = vmatprep.mubr.bf16.mxu0 0
        %2623 = vmatmul.mubr.bf16.gmra.mrb[0].mxu0 %v2331
        %v2624 = vpop.f32.mrb[0].mxu0
        %v2625 = vadd.f32 0.0, %v2624
        %v2626 = vpop.f32.mrb[0].mxu0
        %v2627 = vpop.f32.mrb[0].mxu0
        %v2628 = vadd.f32 0.0, %v2627
        %v2629 = vpop.f32.mrb[0].mxu0
        %2630 = vmatprep.mubr.bf16.mxu0 0
        %2631 = vmatmul.mubr.bf16.gmra.mrb[0].mxu0 %v2334
        %v2632 = vpop.f32.mrb[0].mxu0
        %v2633 = vadd.f32 0.0, %v2632
        %v2634 = vpop.f32.mrb[0].mxu0
        %v2635 = vpop.f32.mrb[0].mxu0
        %v2636 = vadd.f32 0.0, %v2635
        %v2637 = vpop.f32.mrb[0].mxu0
        %2638 = vmatprep.mubr.bf16.mxu0 0
        %2639 = vmatmul.mubr.bf16.gmra.mrb[0].mxu0 %v2337
        %v2640 = vpop.f32.mrb[0].mxu0
        %v2641 = vadd.f32 0.0, %v2640
        %v2642 = vpop.f32.mrb[0].mxu0
        %v2643 = vpop.f32.mrb[0].mxu0
        %v2644 = vadd.f32 0.0, %v2643
        %v2645 = vpop.f32.mrb[0].mxu0
        %2646 = vmatprep.mubr.bf16.mxu0 0
        %2647 = vmatmul.mubr.bf16.gmra.mrb[0].mxu0 %v2340
        %v2648 = vpop.f32.mrb[0].mxu0
        %v2649 = vadd.f32 0.0, %v2648
        %v2650 = vpop.f32.mrb[0].mxu0
        %v2651 = vpop.f32.mrb[0].mxu0
        %v2652 = vadd.f32 0.0, %v2651
        %v2653 = vpop.f32.mrb[0].mxu0
        %2654 = vmatprep.mubr.bf16.mxu0 0
        %2655 = vmatmul.mubr.bf16.gmra.mrb[0].mxu0 %v2343
        %v2656 = vpop.f32.mrb[0].mxu0
        %v2657 = vadd.f32 0.0, %v2656
        %v2658 = vpop.f32.mrb[0].mxu0
        %v2659 = vpop.f32.mrb[0].mxu0
        %v2660 = vadd.f32 0.0, %v2659
        %v2661 = vpop.f32.mrb[0].mxu0
        %2662 = vmatprep.mubr.bf16.mxu0 0
        %2663 = vmatmul.mubr.bf16.gmra.mrb[0].mxu0 %v2346
        %v2664 = vpop.f32.mrb[0].mxu0
        %v2665 = vadd.f32 0.0, %v2664
        %v2666 = vpop.f32.mrb[0].mxu0
        %v2667 = vpop.f32.mrb[0].mxu0
        %v2668 = vadd.f32 0.0, %v2667
        %v2669 = vpop.f32.mrb[0].mxu0
        %2670 = vmatprep.mubr.bf16.mxu0 0
        %2671 = vmatmul.mubr.bf16.gmra.mrb[0].mxu0 %v2349
        %v2672 = vpop.f32.mrb[0].mxu0
        %v2673 = vadd.f32 0.0, %v2672
        %v2674 = vpop.f32.mrb[0].mxu0
        %v2675 = vpop.f32.mrb[0].mxu0
        %v2676 = vadd.f32 0.0, %v2675
        %v2677 = vpop.f32.mrb[0].mxu0
        %2678 = vmatprep.mubr.bf16.mxu0 0
        %2679 = vmatmul.mubr.bf16.gmra.mrb[0].mxu0 %v2352
        %v2680 = vpop.f32.mrb[0].mxu0
        %v2681 = vadd.f32 0.0, %v2680
        %v2682 = vpop.f32.mrb[0].mxu0
        %v2683 = vpop.f32.mrb[0].mxu0
        %v2684 = vadd.f32 0.0, %v2683
        %v2685 = vpop.f32.mrb[0].mxu0
        %2686 = vmatprep.mubr.bf16.mxu0 0
        %2687 = vmatmul.mubr.bf16.gmra.mrb[0].mxu0 %v2355
        %v2688 = vpop.f32.mrb[0].mxu0
        %v2689 = vadd.f32 0.0, %v2688
        %v2690 = vpop.f32.mrb[0].mxu0
        %v2691 = vpop.f32.mrb[0].mxu0
        %v2692 = vadd.f32 0.0, %v2691
        %v2693 = vpop.f32.mrb[0].mxu0
        %2694 = vmatprep.mubr.bf16.mxu0 0
        %2695 = vmatmul.mubr.bf16.gmra.mrb[0].mxu0 %v2358
        %v2696 = vpop.f32.mrb[0].mxu0
        %v2697 = vadd.f32 0.0, %v2696
        %v2698 = vpop.f32.mrb[0].mxu0
        %v2699 = vpop.f32.mrb[0].mxu0
        %v2700 = vadd.f32 0.0, %v2699
        %v2701 = vpop.f32.mrb[0].mxu0
        %2702 = vmatprep.mubr.bf16.mxu0 0
        %2703 = vmatmul.mubr.bf16.gmra.mrb[0].mxu0 %v2361
        %v2704 = vpop.f32.mrb[0].mxu0
        %v2705 = vadd.f32 0.0, %v2704
        %v2706 = vpop.f32.mrb[0].mxu0
        %v2707 = vpop.f32.mrb[0].mxu0
        %v2708 = vadd.f32 0.0, %v2707
        %v2709 = vpop.f32.mrb[0].mxu0
        %2710 = vmatprep.mubr.bf16.mxu0 0
        %2711 = vmatmul.mubr.bf16.gmra.mrb[0].mxu0 %v2364
        %v2712 = vpop.f32.mrb[0].mxu0
        %v2713 = vadd.f32 0.0, %v2712
        %v2714 = vpop.f32.mrb[0].mxu0
        %v2715 = vpop.f32.mrb[0].mxu0
        %v2716 = vadd.f32 0.0, %v2715
        %v2717 = vpop.f32.mrb[0].mxu0
        %2718 = vmatprep.mubr.bf16.mxu0 0
        %2719 = vmatmul.mubr.bf16.gmra.mrb[0].mxu0 %v2367
        %v2720 = vpop.f32.mrb[0].mxu0
        %v2721 = vadd.f32 0.0, %v2720
        %v2722 = vpop.f32.mrb[0].mxu0
        %v2723 = vpop.f32.mrb[0].mxu0
        %v2724 = vadd.f32 0.0, %v2723
        %v2725 = vpop.f32.mrb[0].mxu0
        %2726 = vmatprep.mubr.bf16.mxu0 0
        %2727 = vmatmul.mubr.bf16.gmra.mrb[0].mxu0 %v2370
        %v2728 = vpop.f32.mrb[0].mxu0
        %v2729 = vadd.f32 0.0, %v2728
        %v2730 = vpop.f32.mrb[0].mxu0
        %v2731 = vpop.f32.mrb[0].mxu0
        %v2732 = vadd.f32 0.0, %v2731
        %v2733 = vpop.f32.mrb[0].mxu0
        %2734 = vmatprep.mubr.bf16.mxu0 0
        %2735 = vmatmul.mubr.bf16.gmra.mrb[0].mxu0 %v2373
        %v2736 = vpop.f32.mrb[0].mxu0
        %v2737 = vadd.f32 0.0, %v2736
        %v2738 = vpop.f32.mrb[0].mxu0
        %v2739 = vpop.f32.mrb[0].mxu0
        %v2740 = vadd.f32 0.0, %v2739
        %v2741 = vpop.f32.mrb[0].mxu0
        %2742 = vmatprep.mubr.bf16.mxu0 0
        %2743 = vmatmul.mubr.bf16.gmra.mrb[0].mxu0 %v2585
        %v2744 = vpop.f32.mrb[0].mxu0
        %v2745 = vadd.f32 0.0, %v2744
        %v2746 = vpop.f32.mrb[0].mxu0
        %v2747 = vpop.f32.mrb[0].mxu0
        %v2748 = vadd.f32 0.0, %v2747
        %v2749 = vpop.f32.mrb[0].mxu0
        %2750 = vdwg.mxu0
        %v2751 = vadd.f32 %v2539, %v2625
        %v2752 = vadd.f32 %v2540, %v2628
        %v2753 = vadd.f32 %v2541, %v2633
        %v2754 = vadd.f32 %v2542, %v2636
        %v2755 = vadd.f32 %v2543, %v2641
        %v2756 = vadd.f32 %v2544, %v2644
        %v2757 = vadd.f32 %v2545, %v2649
        %v2758 = vadd.f32 %v2546, %v2652
        %v2759 = vadd.f32 %v2547, %v2657
        %v2760 = vadd.f32 %v2548, %v2660
        %v2761 = vadd.f32 %v2549, %v2665
        %v2762 = vadd.f32 %v2550, %v2668
        %v2763 = vadd.f32 %v2551, %v2673
        %v2764 = vadd.f32 %v2552, %v2676
        %v2765 = vadd.f32 %v2553, %v2681
        %v2766 = vadd.f32 %v2554, %v2684
        %v2767 = vadd.f32 %v2555, %v2689
        %v2768 = vadd.f32 %v2556, %v2692
        %v2769 = vadd.f32 %v2557, %v2697
        %v2770 = vadd.f32 %v2558, %v2700
        %v2771 = vadd.f32 %v2559, %v2705
        %v2772 = vadd.f32 %v2560, %v2708
        %v2773 = vadd.f32 %v2561, %v2713
        %v2774 = vadd.f32 %v2562, %v2716
        %v2775 = vadd.f32 %v2563, %v2721
        %v2776 = vadd.f32 %v2564, %v2724
        %v2777 = vadd.f32 %v2565, %v2729
        %v2778 = vadd.f32 %v2566, %v2732
        %v2779 = vadd.f32 %v2567, %v2737
        %v2780 = vadd.f32 %v2568, %v2740
        %v2781 = vadd.f32 %v2569, %v2745
        %v2782 = vadd.f32 %v2570, %v2748
        %v2784 = vrot.slane %v331, 5
        %v2785 = vrot.slane %v2784, 4
        %v2786 = vrot.slane %v332, 5
        %v2787 = vsel %vm2164, %v2785, %v2786
        %v2788 = vrot.slane %v2786, 4
        %v2789 = vrot.slane %v333, 5
        %v2790 = vsel %vm2164, %v2788, %v2789
        %s2791 = scalar_lea.vmem %s271, 16
        %v2792 = vld [vmem:[%s2791] sm:$0x3]
        %v2793 = vunpack.c.l.b16 %v2787
        %v2794 = vunpack.c.l.b16 %v2790
        %v2795 = vpack.c.b16 %v2794, %v2793
        %v2797 = vsel %vm417, %v2795, 0
        %v2800 = vsel %vm466, %v2792, 0
        %2802 = vmatprep.subr.bf16.mxu0 0
        %2803 = vmatpush1.bf16.msra.mxu0 %v2800
        %2804 = vmatprep.subr.bf16.mxu0 0
        %2805 = vmatpush1.bf16.msra.mxu0 0
        %2806 = vmatprep.subr.bf16.mxu0 0
        %2807 = vmatpush1.bf16.msra.mxu0 0
        %2808 = vmatprep.subr.bf16.mxu0 0
        %2809 = vmatpush1.bf16.msra.mxu0 0
        %2810 = vmatprep.subr.bf16.mxu0 0
        %2811 = vmatpush1.bf16.msra.mxu0 0
        %2812 = vmatprep.subr.bf16.mxu0 0
        %2813 = vmatpush1.bf16.msra.mxu0 0
        %2814 = vmatprep.subr.bf16.mxu0 0
        %2815 = vmatpush1.bf16.msra.mxu0 0
        %2816 = vmatprep.subr.bf16.mxu0 0
        %2817 = vmatpush1.bf16.msra.mxu0 0
        %2818 = vmatprep.subr.bf16.mxu0 0
        %2819 = vmatpush1.bf16.msra.mxu0 0
        %2820 = vmatprep.subr.bf16.mxu0 0
        %2821 = vmatpush1.bf16.msra.mxu0 0
        %2822 = vmatprep.subr.bf16.mxu0 0
        %2823 = vmatpush1.bf16.msra.mxu0 0
        %2824 = vmatprep.subr.bf16.mxu0 0
        %2825 = vmatpush1.bf16.msra.mxu0 0
        %2826 = vmatprep.subr.bf16.mxu0 0
        %2827 = vmatpush1.bf16.msra.mxu0 0
        %2828 = vmatprep.subr.bf16.mxu0 0
        %2829 = vmatpush1.bf16.msra.mxu0 0
        %2830 = vmatprep.subr.bf16.mxu0 0
        %2831 = vmatpush1.bf16.msra.mxu0 0
        %2832 = vmatprep.subr.bf16.mxu0 0
        %2833 = vmatpush1.bf16.msra.mxu0 0
        %2834 = vmatprep.mubr.bf16.mxu0 0
        %2835 = vmatmul.mubr.bf16.gmra.mrb[0].mxu0 %v2334
        %v2836 = vpop.f32.mrb[0].mxu0
        %v2837 = vadd.f32 0.0, %v2836
        %v2838 = vpop.f32.mrb[0].mxu0
        %v2839 = vpop.f32.mrb[0].mxu0
        %v2840 = vadd.f32 0.0, %v2839
        %v2841 = vpop.f32.mrb[0].mxu0
        %2842 = vmatprep.mubr.bf16.mxu0 0
        %2843 = vmatmul.mubr.bf16.gmra.mrb[0].mxu0 %v2337
        %v2844 = vpop.f32.mrb[0].mxu0
        %v2845 = vadd.f32 0.0, %v2844
        %v2846 = vpop.f32.mrb[0].mxu0
        %v2847 = vpop.f32.mrb[0].mxu0
        %v2848 = vadd.f32 0.0, %v2847
        %v2849 = vpop.f32.mrb[0].mxu0
        %2850 = vmatprep.mubr.bf16.mxu0 0
        %2851 = vmatmul.mubr.bf16.gmra.mrb[0].mxu0 %v2340
        %v2852 = vpop.f32.mrb[0].mxu0
        %v2853 = vadd.f32 0.0, %v2852
        %v2854 = vpop.f32.mrb[0].mxu0
        %v2855 = vpop.f32.mrb[0].mxu0
        %v2856 = vadd.f32 0.0, %v2855
        %v2857 = vpop.f32.mrb[0].mxu0
        %2858 = vmatprep.mubr.bf16.mxu0 0
        %2859 = vmatmul.mubr.bf16.gmra.mrb[0].mxu0 %v2343
        %v2860 = vpop.f32.mrb[0].mxu0
        %v2861 = vadd.f32 0.0, %v2860
        %v2862 = vpop.f32.mrb[0].mxu0
        %v2863 = vpop.f32.mrb[0].mxu0
        %v2864 = vadd.f32 0.0, %v2863
        %v2865 = vpop.f32.mrb[0].mxu0
        %2866 = vmatprep.mubr.bf16.mxu0 0
        %2867 = vmatmul.mubr.bf16.gmra.mrb[0].mxu0 %v2346
        %v2868 = vpop.f32.mrb[0].mxu0
        %v2869 = vadd.f32 0.0, %v2868
        %v2870 = vpop.f32.mrb[0].mxu0
        %v2871 = vpop.f32.mrb[0].mxu0
        %v2872 = vadd.f32 0.0, %v2871
        %v2873 = vpop.f32.mrb[0].mxu0
        %2874 = vmatprep.mubr.bf16.mxu0 0
        %2875 = vmatmul.mubr.bf16.gmra.mrb[0].mxu0 %v2349
        %v2876 = vpop.f32.mrb[0].mxu0
        %v2877 = vadd.f32 0.0, %v2876
        %v2878 = vpop.f32.mrb[0].mxu0
        %v2879 = vpop.f32.mrb[0].mxu0
        %v2880 = vadd.f32 0.0, %v2879
        %v2881 = vpop.f32.mrb[0].mxu0
        %2882 = vmatprep.mubr.bf16.mxu0 0
        %2883 = vmatmul.mubr.bf16.gmra.mrb[0].mxu0 %v2352
        %v2884 = vpop.f32.mrb[0].mxu0
        %v2885 = vadd.f32 0.0, %v2884
        %v2886 = vpop.f32.mrb[0].mxu0
        %v2887 = vpop.f32.mrb[0].mxu0
        %v2888 = vadd.f32 0.0, %v2887
        %v2889 = vpop.f32.mrb[0].mxu0
        %2890 = vmatprep.mubr.bf16.mxu0 0
        %2891 = vmatmul.mubr.bf16.gmra.mrb[0].mxu0 %v2355
        %v2892 = vpop.f32.mrb[0].mxu0
        %v2893 = vadd.f32 0.0, %v2892
        %v2894 = vpop.f32.mrb[0].mxu0
        %v2895 = vpop.f32.mrb[0].mxu0
        %v2896 = vadd.f32 0.0, %v2895
        %v2897 = vpop.f32.mrb[0].mxu0
        %2898 = vmatprep.mubr.bf16.mxu0 0
        %2899 = vmatmul.mubr.bf16.gmra.mrb[0].mxu0 %v2358
        %v2900 = vpop.f32.mrb[0].mxu0
        %v2901 = vadd.f32 0.0, %v2900
        %v2902 = vpop.f32.mrb[0].mxu0
        %v2903 = vpop.f32.mrb[0].mxu0
        %v2904 = vadd.f32 0.0, %v2903
        %v2905 = vpop.f32.mrb[0].mxu0
        %2906 = vmatprep.mubr.bf16.mxu0 0
        %2907 = vmatmul.mubr.bf16.gmra.mrb[0].mxu0 %v2361
        %v2908 = vpop.f32.mrb[0].mxu0
        %v2909 = vadd.f32 0.0, %v2908
        %v2910 = vpop.f32.mrb[0].mxu0
        %v2911 = vpop.f32.mrb[0].mxu0
        %v2912 = vadd.f32 0.0, %v2911
        %v2913 = vpop.f32.mrb[0].mxu0
        %2914 = vmatprep.mubr.bf16.mxu0 0
        %2915 = vmatmul.mubr.bf16.gmra.mrb[0].mxu0 %v2364
        %v2916 = vpop.f32.mrb[0].mxu0
        %v2917 = vadd.f32 0.0, %v2916
        %v2918 = vpop.f32.mrb[0].mxu0
        %v2919 = vpop.f32.mrb[0].mxu0
        %v2920 = vadd.f32 0.0, %v2919
        %v2921 = vpop.f32.mrb[0].mxu0
        %2922 = vmatprep.mubr.bf16.mxu0 0
        %2923 = vmatmul.mubr.bf16.gmra.mrb[0].mxu0 %v2367
        %v2924 = vpop.f32.mrb[0].mxu0
        %v2925 = vadd.f32 0.0, %v2924
        %v2926 = vpop.f32.mrb[0].mxu0
        %v2927 = vpop.f32.mrb[0].mxu0
        %v2928 = vadd.f32 0.0, %v2927
        %v2929 = vpop.f32.mrb[0].mxu0
        %2930 = vmatprep.mubr.bf16.mxu0 0
        %2931 = vmatmul.mubr.bf16.gmra.mrb[0].mxu0 %v2370
        %v2932 = vpop.f32.mrb[0].mxu0
        %v2933 = vadd.f32 0.0, %v2932
        %v2934 = vpop.f32.mrb[0].mxu0
        %v2935 = vpop.f32.mrb[0].mxu0
        %v2936 = vadd.f32 0.0, %v2935
        %v2937 = vpop.f32.mrb[0].mxu0
        %2938 = vmatprep.mubr.bf16.mxu0 0
        %2939 = vmatmul.mubr.bf16.gmra.mrb[0].mxu0 %v2373
        %v2940 = vpop.f32.mrb[0].mxu0
        %v2941 = vadd.f32 0.0, %v2940
        %v2942 = vpop.f32.mrb[0].mxu0
        %v2943 = vpop.f32.mrb[0].mxu0
        %v2944 = vadd.f32 0.0, %v2943
        %v2945 = vpop.f32.mrb[0].mxu0
        %2946 = vmatprep.mubr.bf16.mxu0 0
        %2947 = vmatmul.mubr.bf16.gmra.mrb[0].mxu0 %v2585
        %v2948 = vpop.f32.mrb[0].mxu0
        %v2949 = vadd.f32 0.0, %v2948
        %v2950 = vpop.f32.mrb[0].mxu0
        %v2951 = vpop.f32.mrb[0].mxu0
        %v2952 = vadd.f32 0.0, %v2951
        %v2953 = vpop.f32.mrb[0].mxu0
        %2954 = vmatprep.mubr.bf16.mxu0 0
        %2955 = vmatmul.mubr.bf16.gmra.mrb[0].mxu0 %v2797
        %v2956 = vpop.f32.mrb[0].mxu0
        %v2957 = vadd.f32 0.0, %v2956
        %v2958 = vpop.f32.mrb[0].mxu0
        %v2959 = vpop.f32.mrb[0].mxu0
        %v2960 = vadd.f32 0.0, %v2959
        %v2961 = vpop.f32.mrb[0].mxu0
        %2962 = vdwg.mxu0
        %v2963 = vadd.f32 %v2751, %v2837
        %v2964 = vadd.f32 %v2752, %v2840
        %v2965 = vadd.f32 %v2753, %v2845
        %v2966 = vadd.f32 %v2754, %v2848
        %v2967 = vadd.f32 %v2755, %v2853
        %v2968 = vadd.f32 %v2756, %v2856
        %v2969 = vadd.f32 %v2757, %v2861
        %v2970 = vadd.f32 %v2758, %v2864
        %v2971 = vadd.f32 %v2759, %v2869
        %v2972 = vadd.f32 %v2760, %v2872
        %v2973 = vadd.f32 %v2761, %v2877
        %v2974 = vadd.f32 %v2762, %v2880
        %v2975 = vadd.f32 %v2763, %v2885
        %v2976 = vadd.f32 %v2764, %v2888
        %v2977 = vadd.f32 %v2765, %v2893
        %v2978 = vadd.f32 %v2766, %v2896
        %v2979 = vadd.f32 %v2767, %v2901
        %v2980 = vadd.f32 %v2768, %v2904
        %v2981 = vadd.f32 %v2769, %v2909
        %v2982 = vadd.f32 %v2770, %v2912
        %v2983 = vadd.f32 %v2771, %v2917
        %v2984 = vadd.f32 %v2772, %v2920
        %v2985 = vadd.f32 %v2773, %v2925
        %v2986 = vadd.f32 %v2774, %v2928
        %v2987 = vadd.f32 %v2775, %v2933
        %v2988 = vadd.f32 %v2776, %v2936
        %v2989 = vadd.f32 %v2777, %v2941
        %v2990 = vadd.f32 %v2778, %v2944
        %v2991 = vadd.f32 %v2779, %v2949
        %v2992 = vadd.f32 %v2780, %v2952
        %v2993 = vadd.f32 %v2781, %v2957
        %v2994 = vadd.f32 %v2782, %v2960
        %v2995 = vld [vmem:[%s274] sm:$0x1]
        %v2997 = vlaneseq
        %v2998 = vshrl.u32 %v2997, 7
        %v2999 = vsub.s32 0, %v2998
        %v3000 = vrot.slane %v2995, %v2999
        %v3002 = vmul.f32 %v2963, %v3000
        %v3003 = vmul.f32 %v2964, %v3000
        %v3004 = vmul.f32 %v2965, %v3000
        %v3005 = vmul.f32 %v2966, %v3000
        %v3006 = vmul.f32 %v2967, %v3000
        %v3007 = vmul.f32 %v2968, %v3000
        %v3008 = vmul.f32 %v2969, %v3000
        %v3009 = vmul.f32 %v2970, %v3000
        %v3010 = vmul.f32 %v2971, %v3000
        %v3011 = vmul.f32 %v2972, %v3000
        %v3012 = vmul.f32 %v2973, %v3000
        %v3013 = vmul.f32 %v2974, %v3000
        %v3014 = vmul.f32 %v2975, %v3000
        %v3015 = vmul.f32 %v2976, %v3000
        %v3016 = vmul.f32 %v2977, %v3000
        %v3017 = vmul.f32 %v2978, %v3000
        %v3018 = vmul.f32 %v2979, %v3000
        %v3019 = vmul.f32 %v2980, %v3000
        %v3020 = vmul.f32 %v2981, %v3000
        %v3021 = vmul.f32 %v2982, %v3000
        %v3022 = vmul.f32 %v2983, %v3000
        %v3023 = vmul.f32 %v2984, %v3000
        %v3024 = vmul.f32 %v2985, %v3000
        %v3025 = vmul.f32 %v2986, %v3000
        %v3026 = vmul.f32 %v2987, %v3000
        %v3027 = vmul.f32 %v2988, %v3000
        %v3028 = vmul.f32 %v2989, %v3000
        %v3029 = vmul.f32 %v2990, %v3000
        %v3030 = vmul.f32 %v2991, %v3000
        %v3031 = vmul.f32 %v2992, %v3000
        %v3032 = vmul.f32 %v2993, %v3000
        %v3033 = vmul.f32 %v2994, %v3000
        %v3034 = vld [vmem:[%s277] sm:$0x1]
        %v3036 = vlaneseq
        %v3037 = vshrl.u32 %v3036, 7
        %v3038 = vsub.s32 0, %v3037
        %v3039 = vrot.slane %v3034, %v3038
        %v3041 = vadd.f32 %v3002, %v3039
        %v3042 = vadd.f32 %v3003, %v3039
        %v3043 = vadd.f32 %v3004, %v3039
        %v3044 = vadd.f32 %v3005, %v3039
        %v3045 = vadd.f32 %v3006, %v3039
        %v3046 = vadd.f32 %v3007, %v3039
        %v3047 = vadd.f32 %v3008, %v3039
        %v3048 = vadd.f32 %v3009, %v3039
        %v3049 = vadd.f32 %v3010, %v3039
        %v3050 = vadd.f32 %v3011, %v3039
        %v3051 = vadd.f32 %v3012, %v3039
        %v3052 = vadd.f32 %v3013, %v3039
        %v3053 = vadd.f32 %v3014, %v3039
        %v3054 = vadd.f32 %v3015, %v3039
        %v3055 = vadd.f32 %v3016, %v3039
        %v3056 = vadd.f32 %v3017, %v3039
        %v3057 = vadd.f32 %v3018, %v3039
        %v3058 = vadd.f32 %v3019, %v3039
        %v3059 = vadd.f32 %v3020, %v3039
        %v3060 = vadd.f32 %v3021, %v3039
        %v3061 = vadd.f32 %v3022, %v3039
        %v3062 = vadd.f32 %v3023, %v3039
        %v3063 = vadd.f32 %v3024, %v3039
        %v3064 = vadd.f32 %v3025, %v3039
        %v3065 = vadd.f32 %v3026, %v3039
        %v3066 = vadd.f32 %v3027, %v3039
        %v3067 = vadd.f32 %v3028, %v3039
        %v3068 = vadd.f32 %v3029, %v3039
        %v3069 = vadd.f32 %v3030, %v3039
        %v3070 = vadd.f32 %v3031, %v3039
        %v3071 = vadd.f32 %v3032, %v3039
        %v3072 = vadd.f32 %v3033, %v3039
        %v3073 = vsub.f32 0.0, %v3041
        %v3074 = vsub.f32 0.0, %v3042
        %v3075 = vsub.f32 0.0, %v3043
        %v3076 = vsub.f32 0.0, %v3044
        %v3077 = vsub.f32 0.0, %v3045
        %v3078 = vsub.f32 0.0, %v3046
        %v3079 = vsub.f32 0.0, %v3047
        %v3080 = vsub.f32 0.0, %v3048
        %v3081 = vsub.f32 0.0, %v3049
        %v3082 = vsub.f32 0.0, %v3050
        %v3083 = vsub.f32 0.0, %v3051
        %v3084 = vsub.f32 0.0, %v3052
        %v3085 = vsub.f32 0.0, %v3053
        %v3086 = vsub.f32 0.0, %v3054
        %v3087 = vsub.f32 0.0, %v3055
        %v3088 = vsub.f32 0.0, %v3056
        %v3089 = vsub.f32 0.0, %v3057
        %v3090 = vsub.f32 0.0, %v3058
        %v3091 = vsub.f32 0.0, %v3059
        %v3092 = vsub.f32 0.0, %v3060
        %v3093 = vsub.f32 0.0, %v3061
        %v3094 = vsub.f32 0.0, %v3062
        %v3095 = vsub.f32 0.0, %v3063
        %v3096 = vsub.f32 0.0, %v3064
        %v3097 = vsub.f32 0.0, %v3065
        %v3098 = vsub.f32 0.0, %v3066
        %v3099 = vsub.f32 0.0, %v3067
        %v3100 = vsub.f32 0.0, %v3068
        %v3101 = vsub.f32 0.0, %v3069
        %v3102 = vsub.f32 0.0, %v3070
        %v3103 = vsub.f32 0.0, %v3071
        %v3104 = vsub.f32 0.0, %v3072
        %v3105 = vmul.f32 %v3073, 1.442695
        %v3106 = vpow.pop %v3105
        %v3107 = vmul.f32 %v3074, 1.442695
        %v3108 = vpow.pop %v3107
        %v3109 = vmul.f32 %v3075, 1.442695
        %v3110 = vpow.pop %v3109
        %v3111 = vmul.f32 %v3076, 1.442695
        %v3112 = vpow.pop %v3111
        %v3113 = vmul.f32 %v3077, 1.442695
        %v3114 = vpow.pop %v3113
        %v3115 = vmul.f32 %v3078, 1.442695
        %v3116 = vpow.pop %v3115
        %v3117 = vmul.f32 %v3079, 1.442695
        %v3118 = vpow.pop %v3117
        %v3119 = vmul.f32 %v3080, 1.442695
        %v3120 = vpow.pop %v3119
        %v3121 = vmul.f32 %v3081, 1.442695
        %v3122 = vpow.pop %v3121
        %v3123 = vmul.f32 %v3082, 1.442695
        %v3124 = vpow.pop %v3123
        %v3125 = vmul.f32 %v3083, 1.442695
        %v3126 = vpow.pop %v3125
        %v3127 = vmul.f32 %v3084, 1.442695
        %v3128 = vpow.pop %v3127
        %v3129 = vmul.f32 %v3085, 1.442695
        %v3130 = vpow.pop %v3129
        %v3131 = vmul.f32 %v3086, 1.442695
        %v3132 = vpow.pop %v3131
        %v3133 = vmul.f32 %v3087, 1.442695
        %v3134 = vpow.pop %v3133
        %v3135 = vmul.f32 %v3088, 1.442695
        %v3136 = vpow.pop %v3135
        %v3137 = vmul.f32 %v3089, 1.442695
        %v3138 = vpow.pop %v3137
        %v3139 = vmul.f32 %v3090, 1.442695
        %v3140 = vpow.pop %v3139
        %v3141 = vmul.f32 %v3091, 1.442695
        %v3142 = vpow.pop %v3141
        %v3143 = vmul.f32 %v3092, 1.442695
        %v3144 = vpow.pop %v3143
        %v3145 = vmul.f32 %v3093, 1.442695
        %v3146 = vpow.pop %v3145
        %v3147 = vmul.f32 %v3094, 1.442695
        %v3148 = vpow.pop %v3147
        %v3149 = vmul.f32 %v3095, 1.442695
        %v3150 = vpow.pop %v3149
        %v3151 = vmul.f32 %v3096, 1.442695
        %v3152 = vpow.pop %v3151
        %v3153 = vmul.f32 %v3097, 1.442695
        %v3154 = vpow.pop %v3153
        %v3155 = vmul.f32 %v3098, 1.442695
        %v3156 = vpow.pop %v3155
        %v3157 = vmul.f32 %v3099, 1.442695
        %v3158 = vpow.pop %v3157
        %v3159 = vmul.f32 %v3100, 1.442695
        %v3160 = vpow.pop %v3159
        %v3161 = vmul.f32 %v3101, 1.442695
        %v3162 = vpow.pop %v3161
        %v3163 = vmul.f32 %v3102, 1.442695
        %v3164 = vpow.pop %v3163
        %v3165 = vmul.f32 %v3103, 1.442695
        %v3166 = vpow.pop %v3165
        %v3167 = vmul.f32 %v3104, 1.442695
        %v3168 = vpow.pop %v3167
        %v3169 = vadd.f32 %v3106, 1.0
        %v3170 = vadd.f32 %v3108, 1.0
        %v3171 = vadd.f32 %v3110, 1.0
        %v3172 = vadd.f32 %v3112, 1.0
        %v3173 = vadd.f32 %v3114, 1.0
        %v3174 = vadd.f32 %v3116, 1.0
        %v3175 = vadd.f32 %v3118, 1.0
        %v3176 = vadd.f32 %v3120, 1.0
        %v3177 = vadd.f32 %v3122, 1.0
        %v3178 = vadd.f32 %v3124, 1.0
        %v3179 = vadd.f32 %v3126, 1.0
        %v3180 = vadd.f32 %v3128, 1.0
        %v3181 = vadd.f32 %v3130, 1.0
        %v3182 = vadd.f32 %v3132, 1.0
        %v3183 = vadd.f32 %v3134, 1.0
        %v3184 = vadd.f32 %v3136, 1.0
        %v3185 = vadd.f32 %v3138, 1.0
        %v3186 = vadd.f32 %v3140, 1.0
        %v3187 = vadd.f32 %v3142, 1.0
        %v3188 = vadd.f32 %v3144, 1.0
        %v3189 = vadd.f32 %v3146, 1.0
        %v3190 = vadd.f32 %v3148, 1.0
        %v3191 = vadd.f32 %v3150, 1.0
        %v3192 = vadd.f32 %v3152, 1.0
        %v3193 = vadd.f32 %v3154, 1.0
        %v3194 = vadd.f32 %v3156, 1.0
        %v3195 = vadd.f32 %v3158, 1.0
        %v3196 = vadd.f32 %v3160, 1.0
        %v3197 = vadd.f32 %v3162, 1.0
        %v3198 = vadd.f32 %v3164, 1.0
        %v3199 = vadd.f32 %v3166, 1.0
        %v3200 = vadd.f32 %v3168, 1.0
        %v3201 = vrcp.pop %v3169
        %v3202 = vrcp.pop %v3170
        %v3203 = vrcp.pop %v3171
        %v3204 = vrcp.pop %v3172
        %v3205 = vrcp.pop %v3173
        %v3206 = vrcp.pop %v3174
        %v3207 = vrcp.pop %v3175
        %v3208 = vrcp.pop %v3176
        %v3209 = vrcp.pop %v3177
        %v3210 = vrcp.pop %v3178
        %v3211 = vrcp.pop %v3179
        %v3212 = vrcp.pop %v3180
        %v3213 = vrcp.pop %v3181
        %v3214 = vrcp.pop %v3182
        %v3215 = vrcp.pop %v3183
        %v3216 = vrcp.pop %v3184
        %v3217 = vrcp.pop %v3185
        %v3218 = vrcp.pop %v3186
        %v3219 = vrcp.pop %v3187
        %v3220 = vrcp.pop %v3188
        %v3221 = vrcp.pop %v3189
        %v3222 = vrcp.pop %v3190
        %v3223 = vrcp.pop %v3191
        %v3224 = vrcp.pop %v3192
        %v3225 = vrcp.pop %v3193
        %v3226 = vrcp.pop %v3194
        %v3227 = vrcp.pop %v3195
        %v3228 = vrcp.pop %v3196
        %v3229 = vrcp.pop %v3197
        %v3230 = vrcp.pop %v3198
        %v3231 = vrcp.pop %v3199
        %v3232 = vrcp.pop %v3200
        %v3233 = vmul.f32 %v3041, %v3201
        %v3234 = vmul.f32 %v3042, %v3202
        %v3235 = vmul.f32 %v3043, %v3203
        %v3236 = vmul.f32 %v3044, %v3204
        %v3237 = vmul.f32 %v3045, %v3205
        %v3238 = vmul.f32 %v3046, %v3206
        %v3239 = vmul.f32 %v3047, %v3207
        %v3240 = vmul.f32 %v3048, %v3208
        %v3241 = vmul.f32 %v3049, %v3209
        %v3242 = vmul.f32 %v3050, %v3210
        %v3243 = vmul.f32 %v3051, %v3211
        %v3244 = vmul.f32 %v3052, %v3212
        %v3245 = vmul.f32 %v3053, %v3213
        %v3246 = vmul.f32 %v3054, %v3214
        %v3247 = vmul.f32 %v3055, %v3215
        %v3248 = vmul.f32 %v3056, %v3216
        %v3249 = vmul.f32 %v3057, %v3217
        %v3250 = vmul.f32 %v3058, %v3218
        %v3251 = vmul.f32 %v3059, %v3219
        %v3252 = vmul.f32 %v3060, %v3220
        %v3253 = vmul.f32 %v3061, %v3221
        %v3254 = vmul.f32 %v3062, %v3222
        %v3255 = vmul.f32 %v3063, %v3223
        %v3256 = vmul.f32 %v3064, %v3224
        %v3257 = vmul.f32 %v3065, %v3225
        %v3258 = vmul.f32 %v3066, %v3226
        %v3259 = vmul.f32 %v3067, %v3227
        %v3260 = vmul.f32 %v3068, %v3228
        %v3261 = vmul.f32 %v3069, %v3229
        %v3262 = vmul.f32 %v3070, %v3230
        %v3263 = vmul.f32 %v3071, %v3231
        %v3264 = vmul.f32 %v3072, %v3232
        %3265 = vst [vmem:[%s258] sm:$0xff] %v3233
        %3266 = vst [vmem:[%s258 + $0x8] sm:$0xff] %v3234
        %3267 = vst [vmem:[%s258 + $0x10] sm:$0xff] %v3235
        %3268 = vst [vmem:[%s258 + $0x18] sm:$0xff] %v3236
        %3269 = vst [vmem:[%s258 + $0x20] sm:$0xff] %v3237
        %3270 = vst [vmem:[%s258 + $0x28] sm:$0xff] %v3238
        %3271 = vst [vmem:[%s258 + $0x30] sm:$0xff] %v3239
        %3272 = vst [vmem:[%s258 + $0x38] sm:$0xff] %v3240
        %3273 = vst [vmem:[%s258 + $0x40] sm:$0xff] %v3241
        %3274 = vst [vmem:[%s258 + $0x48] sm:$0xff] %v3242
        %3275 = vst [vmem:[%s258 + $0x50] sm:$0xff] %v3243
        %3276 = vst [vmem:[%s258 + $0x58] sm:$0xff] %v3244
        %3277 = vst [vmem:[%s258 + $0x60] sm:$0xff] %v3245
        %3278 = vst [vmem:[%s258 + $0x68] sm:$0xff] %v3246
        %3279 = vst [vmem:[%s258 + $0x70] sm:$0xff] %v3247
        %3280 = vst [vmem:[%s258 + $0x78] sm:$0xff] %v3248
        %3281 = vst [vmem:[%s258 + $0x80] sm:$0xff] %v3249
        %3282 = vst [vmem:[%s258 + $0x88] sm:$0xff] %v3250
        %3283 = vst [vmem:[%s258 + $0x90] sm:$0xff] %v3251
        %3284 = vst [vmem:[%s258 + $0x98] sm:$0xff] %v3252
        %3285 = vst [vmem:[%s258 + $0xa0] sm:$0xff] %v3253
        %3286 = vst [vmem:[%s258 + $0xa8] sm:$0xff] %v3254
        %3287 = vst [vmem:[%s258 + $0xb0] sm:$0xff] %v3255
        %3288 = vst [vmem:[%s258 + $0xb8] sm:$0xff] %v3256
        %3289 = vst [vmem:[%s258 + $0xc0] sm:$0xff] %v3257
        %3290 = vst [vmem:[%s258 + $0xc8] sm:$0xff] %v3258
        %3291 = vst [vmem:[%s258 + $0xd0] sm:$0xff] %v3259
        %3292 = vst [vmem:[%s258 + $0xd8] sm:$0xff] %v3260
        %3293 = vst [vmem:[%s258 + $0xe0] sm:$0xff] %v3261
        %3294 = vst [vmem:[%s258 + $0xe8] sm:$0xff] %v3262
        %3295 = vst [vmem:[%s258 + $0xf0] sm:$0xff] %v3263
        %3296 = vst [vmem:[%s258 + $0xf8] sm:$0xff] %v3264
        %s3297 = sand.u32 %s155, 1
        %s3298 = scalar_lea.sflag [#allocation3], %s3297
        %s3299 = sand.u32 %s155, 1
        %s3300 = smul.addr %s3299, 256
        %s3301 = scalar_lea.vmem [#allocation2], %s3300
        // Predicated region
        $region37: #{tpu_custom_call.1} parent=35 // pred_check
          %p3302 = pneg %p165
        $region38: #{tpu_custom_call.1} parent=35 // pred_check_branch
          %3304 = sbr.rel (%p3302) target = $region40
        $region39: #{tpu_custom_call.1} parent=35 // pred_region
          %s3305 = smul.u32 16, %s24
          %s3307 = ssub.s32 4096, 4096
          %3308 = vsyncadd %s3298, %s3307
          %s3309 = smul.addr %s3305, 2
          %s3310 = sadd.s32 %s25, %s3309
          %s3311 = smul.addr %s23, 32
          %s3312 = sadd.s32 %s3310, %s3311
          %s3313 = smul.addr %s3312, 128
          %s3314 = scalar_lea.hbm %s4, %s3313
          %s3315 = sshll.u32 %s3301, 4
          %s3316 = int_to_ptr.vmem [resolvable:$true] %s3315
          %3321 = dma.vmem_to_hbm [thread:$0]  %s3316, 4096, %s3314, %s3298, 128, 128, 8
        $region40: #{tpu_custom_call.1} parent=35 // pred_fallthru
          _
      $region36: #{tpu_custom_call.1} parent=5 // pred_fallthru
        _
      %p3322 = scmp.le.s32.totalorder 2, %s13
      // Predicated region
      $region41: #{tpu_custom_call.1} parent=5 // pred_check
        %p3323 = pneg %p3322
      $region42: #{tpu_custom_call.1} parent=5 // pred_check_branch
        %3325 = sbr.rel (%p3323) target = $region44
      $region43: #{tpu_custom_call.1} parent=5 // pred_region
        %s3326 = ssub.s32 %s13, 2
        // Predicated region
        $region45: #{tpu_custom_call.1} parent=43 // pred_check
          %p3327 = pneg %p171
        $region46: #{tpu_custom_call.1} parent=43 // pred_check_branch
          %3329 = sbr.rel (%p3327) target = $region48
        $region47: #{tpu_custom_call.1} parent=43 // pred_region
          %s3330 = sand.u32 %s156, 1
          %s3331 = scalar_lea.sflag [#allocation3], %s3330
          %s3332 = sand.u32 %s156, 1
          %s3333 = smul.addr %s3332, 256
          %s3334 = scalar_lea.vmem [#allocation2], %s3333
          %3335 = dma.done %s3331, 4096
        $region48: #{tpu_custom_call.1} parent=43 // pred_fallthru
          _
      $region44: #{tpu_custom_call.1} parent=5 // pred_fallthru
        _
    $region6: #{tpu_custom_call.1} parent=1 // loop_footer
      %s17 = sadd.s32 1, %s13
    $region7: #{tpu_custom_call.1} parent=1 // loop_footer_branch
      %12 = sbr.rel target = $region3
    $region8: #{tpu_custom_call.1} parent=1 // loop_exit
      _
    %3336 = vsyncpa [#allocation3], 1
    %s3337 = scalar_lea.sflag [#allocation3], 1
    %3338 = vsyncpa %s3337, 1

</llo_original>
